<compile_context>
chip_gen: v7x
topology: tpu7x:2x2x1
jax: 0.10.0
libtpu: 0.0.40
codegen_flags: <defaults>
</compile_context>

<pallas_src>
import jax
import jax.numpy as jnp
from jax.experimental import pallas as pl
from jax.experimental.pallas import tpu as pltpu

EPS = 1e-5


# ----------------------------- Pallas kernel ------------------------------- #

def _make_dense_layer_kernel(n_chunks, H, W, B, G):
    """Build the fused DenseLayer kernel for `n_chunks` previous-feature refs."""

    def kernel(*refs):
        x_refs = refs[0:n_chunks]                   # (1,H,W,c_j)  bf16 features
        s_refs = refs[n_chunks:2 * n_chunks]        # (1,c_j)      f32 bn1 scale
        b_refs = refs[2 * n_chunks:3 * n_chunks]    # (1,c_j)      f32 bn1 bias
        w1_refs = refs[3 * n_chunks:4 * n_chunks]   # (c_j,B)      bf16 1x1 (+bn2)
        cb1_ref, w3_ref, b3_ref, o_ref, zp_ref = refs[4 * n_chunks:]
        # cb1_ref: (1,B) f32   w3_ref: (9,B,G) bf16   b3_ref: (1,G) f32
        # o_ref  : (1,H,W,G) bf16 output (only the new channels)
        # zp_ref : VMEM (H+2,W+2,B) bf16 padded bottleneck activation

        # bn1 -> relu1 -> conv1x1 (+bn2 folded) : K-split over the virtual
        # torch.cat, accumulating each chunk's contribution (no concat copy).
        z = None
        for j in range(n_chunks):
            xj = x_refs[j][0].astype(jnp.float32).reshape(H * W, -1)
            yj = jnp.maximum(xj * s_refs[j][...] + b_refs[j][...], 0.0)
            pj = jnp.dot(yj.astype(jnp.bfloat16), w1_refs[j][...],
                         preferred_element_type=jnp.float32)
            z = pj if z is None else z + pj
        z = jnp.maximum(z + cb1_ref[...], 0.0)      # relu2, (H*W, B) f32

        # Padded bottleneck activation kept entirely in VMEM (padding=1).
        # Zero only the 1-px border; the interior is overwritten right after.
        zrow = jnp.zeros((1, W + 2, B), jnp.bfloat16)
        zcol = jnp.zeros((H + 2, 1, B), jnp.bfloat16)
        zp_ref[0:1, :, :] = zrow
        zp_ref[H + 1:H + 2, :, :] = zrow
        zp_ref[:, 0:1, :] = zcol
        zp_ref[:, W + 1:W + 2, :] = zcol
        zp_ref[1:H + 1, 1:W + 1, :] = z.astype(jnp.bfloat16).reshape(H, W, B)

        # conv3x3 as 9 shifted (H*W,B)x(B,G) matmuls accumulated in f32
        # (no materialized im2col patch matrix).
        acc = None
        for dy in range(3):
            for dx in range(3):
                tap = dy * 3 + dx
                patch = zp_ref[dy:dy + H, dx:dx + W, :].reshape(H * W, B)
                p = jnp.dot(patch, w3_ref[tap],
                            preferred_element_type=jnp.float32)
                acc = p if acc is None else acc + p
        out = acc + b3_ref[...]                      # (H*W, G) f32

        # Write ONLY the new growth_rate channels (full-width store for this
        # output array; no slab passthrough).
        o_ref[...] = out.reshape(1, H, W, G).astype(o_ref.dtype)

    return kernel


# ------------------------------ Kernel wrapper ------------------------------ #

def dense_layer_call(feats, s1s, b1s, w1s, cb1, w3, b3):
    """One fused DenseLayer: feats = list of previous feature tensors (NHWC bf16)."""
    n_chunks = len(feats)
    N, H, W, _ = feats[0].shape
    B = cb1.shape[1]
    G = w3.shape[2]

    kernel = _make_dense_layer_kernel(n_chunks, H, W, B, G)

    def param_spec(a):
        return pl.BlockSpec(a.shape, lambda n: (0,) * a.ndim)

    feat_specs = [pl.BlockSpec((1, H, W, f.shape[-1]), lambda n: (n, 0, 0, 0))
                  for f in feats]
    in_specs = (feat_specs
                + [param_spec(s) for s in s1s]
                + [param_spec(b) for b in b1s]
                + [param_spec(w) for w in w1s]
                + [param_spec(cb1), param_spec(w3), param_spec(b3)])

    return pl.pallas_call(
        kernel,
        out_shape=jax.ShapeDtypeStruct((N, H, W, G), jnp.bfloat16),
        grid=(N,),
        in_specs=in_specs,
        out_specs=pl.BlockSpec((1, H, W, G), lambda n: (n, 0, 0, 0)),
        scratch_shapes=[pltpu.VMEM((H + 2, W + 2, B), jnp.bfloat16)],
        compiler_params=pltpu.CompilerParams(
            dimension_semantics=("parallel",),
            vmem_limit_bytes=48 * 1024 * 1024),
    )(*feats, *s1s, *b1s, *w1s, cb1, w3, b3)


# ------------------------------ DenseBlock glue ----------------------------- #

def _fold_bn(gamma, beta, mean, var):
    scale = gamma / jnp.sqrt(var + EPS)
    bias = beta - mean * scale
    return scale, bias


def make_dense_block_params(key, in_channels, layer_counts, growth_rate):
    params = []
    for i in range(layer_counts):
        cin = in_channels + i * growth_rate
        bneck = 4 * growth_rate
        g = growth_rate
        keys = jax.random.split(jax.random.fold_in(key, i), 12)

        # BN1 (over cin channels)
        g1 = 1.0 + 0.1 * jax.random.normal(keys[0], (cin,), jnp.float32)
        be1 = 0.1 * jax.random.normal(keys[1], (cin,), jnp.float32)
        m1 = 0.1 * jax.random.normal(keys[2], (cin,), jnp.float32)
        v1 = jnp.abs(jax.random.normal(keys[3], (cin,), jnp.float32)) + 0.5
        # conv1x1: PyTorch weight (bneck, cin, 1, 1) -> (cin, bneck)
        w1 = 0.2 * jax.random.normal(keys[4], (cin, bneck), jnp.float32)
        cb1 = 0.1 * jax.random.normal(keys[5], (bneck,), jnp.float32)
        # BN2 (over bneck channels)
        g2 = 1.0 + 0.1 * jax.random.normal(keys[6], (bneck,), jnp.float32)
        be2 = 0.1 * jax.random.normal(keys[7], (bneck,), jnp.float32)
        m2 = 0.1 * jax.random.normal(keys[8], (bneck,), jnp.float32)
        v2 = jnp.abs(jax.random.normal(keys[9], (bneck,), jnp.float32)) + 0.5
        # conv3x3: PyTorch weight (g, bneck, 3, 3) -> HWIO (3, 3, bneck, g)
        w3 = 0.1 * jax.random.normal(keys[10], (3, 3, bneck, g), jnp.float32)
        cb3 = 0.1 * jax.random.normal(keys[11], (g,), jnp.float32)

        s1, b1 = _fold_bn(g1, be1, m1, v1)
        s2, b2 = _fold_bn(g2, be2, m2, v2)

        # Exact fold of bn2 into the 1x1 conv (relu2 follows bn2):
        #   bn2(y @ w1 + cb1) = y @ (w1 * s2) + (cb1 * s2 + b2)
        w1f = (w1 * s2[None, :]).astype(jnp.bfloat16)
        cb1f = (cb1 * s2 + b2)[None, :]

        # Chunk bn1/conv1x1 params per previous-feature tensor
        # ([init (Cin0) | out0 (G) | out1 (G) | ...]) -- same order as torch.cat.
        sizes = [in_channels] + [growth_rate] * i
        offs = [0]
        for sz in sizes:
            offs.append(offs[-1] + sz)
        s1_chunks = [s1[None, offs[j]:offs[j + 1]] for j in range(len(sizes))]
        b1_chunks = [b1[None, offs[j]:offs[j + 1]] for j in range(len(sizes))]
        w1_chunks = [w1f[offs[j]:offs[j + 1], :] for j in range(len(sizes))]

        w3_hwio = w3.astype(jnp.bfloat16)
        w3k = w3_hwio.reshape(9, bneck, g)       # tap-major layout for the kernel

        params.append(dict(
            s1=s1[None, :], b1=b1[None, :], w1=w1f,
            s1_chunks=s1_chunks, b1_chunks=b1_chunks, w1_chunks=w1_chunks,
            cb1=cb1f, w3k=w3k, w3_hwio=w3_hwio, b3=cb3[None, :],
        ))
    return params


def dense_block_forward(x_nchw, params):
    """DenseBlock.forward: each layer emits only its new channels; one final concat."""
    init = jnp.transpose(x_nchw, (0, 2, 3, 1)).astype(jnp.bfloat16)   # -> NHWC bf16
    feats = [init]
    for p in params:
        new = dense_layer_call(feats, p["s1_chunks"], p["b1_chunks"],
                               p["w1_chunks"], p["cb1"], p["w3k"], p["b3"])
        feats.append(new)
    slab = jnp.concatenate(feats, axis=-1)            # single linear-pass concat
    return jnp.transpose(slab, (0, 3, 1, 2)).astype(jnp.float32)      # -> NCHW f32


# ---------------------------- pure-JAX reference ---------------------------- #

def dense_block_reference(x_nchw, params):
    """Reference with the same folded-BN math, bf16 inter-layer activations and
    bf16 MXU operands (f32 accumulation / elementwise) as the kernel path."""
    feat = jnp.transpose(x_nchw, (0, 2, 3, 1)).astype(jnp.bfloat16)
    for p in params:
        xf = feat.astype(jnp.float32)
        y = jnp.maximum(xf * p["s1"] + p["b1"], 0.0)
        z = jnp.einsum("nhwc,cb->nhwb", y.astype(jnp.bfloat16), p["w1"],
                       preferred_element_type=jnp.float32)
        z = jnp.maximum(z + p["cb1"], 0.0)
        out = jax.lax.conv_general_dilated(
            z.astype(jnp.bfloat16), p["w3_hwio"],
            window_strides=(1, 1), padding="SAME",
            dimension_numbers=("NHWC", "HWIO", "NHWC"),
            preferred_element_type=jnp.float32) + p["b3"]
        feat = jnp.concatenate([feat, out.astype(jnp.bfloat16)], axis=-1)
    return jnp.transpose(feat, (0, 3, 1, 2)).astype(jnp.float32)


# ---------------------------------- main ------------------------------------ #

if __name__ == "__main__":
    key = jax.random.PRNGKey(0)
    k_x, k_p = jax.random.split(key)

    N, C, H, W = 2, 4, 16, 16          # small NCHW input
    layer_counts, growth_rate = 3, 4   # DenseBlock(in_channels=4, layer_counts=3, growth_rate=4)

    x = jax.random.normal(k_x, (N, C, H, W), jnp.float32)
    params = make_dense_block_params(k_p, C, layer_counts, growth_rate)

    out = jax.block_until_ready(dense_block_forward(x, params))
    ref = jax.block_until_ready(dense_block_reference(x, params))

    assert out.shape == (N, C + layer_counts * growth_rate, H, W), out.shape
    max_err = float(jnp.max(jnp.abs(out - ref)))
    assert max_err < 3e-2, f"max_err={max_err}"

    print("KERNEL_OK")
</pallas_src>

<mosaic_0001>
module attributes {stable_mosaic.version = 11 : i64} {
  func.func @kernel(%arg0: i32, %arg1: memref<1x16x16x4xbf16, #tpu.memory_space<vmem>>, %arg2: memref<1x4xf32, #tpu.memory_space<vmem>>, %arg3: memref<1x4xf32, #tpu.memory_space<vmem>>, %arg4: memref<4x16xbf16, #tpu.memory_space<vmem>>, %arg5: memref<1x16xf32, #tpu.memory_space<vmem>>, %arg6: memref<9x16x4xbf16, #tpu.memory_space<vmem>>, %arg7: memref<1x4xf32, #tpu.memory_space<vmem>>, %arg8: memref<1x16x16x4xbf16, #tpu.memory_space<vmem>>, %arg9: memref<18x18x16xbf16, #tpu.memory_space<vmem>>) attributes {dimension_semantics = [#tpu.dimension_semantics<parallel>], iteration_bounds = array<i64: 2>, scalar_prefetch = 0 : i64, scratch_operands = 1 : i64, tpu.core_type = #tpu.core_type<tc>, window_params = [{transform_indices = @transform_0, window_bounds = array<i64: 1, 16, 16, 4>}, {pipeline_mode = #tpu.pipeline_mode<synchronous>, transform_indices = @transform_1, window_bounds = array<i64: 1, 4>}, {pipeline_mode = #tpu.pipeline_mode<synchronous>, transform_indices = @transform_2, window_bounds = array<i64: 1, 4>}, {pipeline_mode = #tpu.pipeline_mode<synchronous>, transform_indices = @transform_3, window_bounds = array<i64: 4, 16>}, {pipeline_mode = #tpu.pipeline_mode<synchronous>, transform_indices = @transform_4, window_bounds = array<i64: 1, 16>}, {pipeline_mode = #tpu.pipeline_mode<synchronous>, transform_indices = @transform_5, window_bounds = array<i64: 9, 16, 4>}, {pipeline_mode = #tpu.pipeline_mode<synchronous>, transform_indices = @transform_6, window_bounds = array<i64: 1, 4>}, {transform_indices = @transform_7, window_bounds = array<i64: 1, 16, 16, 4>}]} {
    %c0 = arith.constant 0 : index
    %c0_0 = arith.constant 0 : index
    %c0_1 = arith.constant 0 : index
    %c0_2 = arith.constant 0 : index
    %0 = vector.load %arg1[%c0, %c0_0, %c0_1, %c0_2] : memref<1x16x16x4xbf16, #tpu.memory_space<vmem>>, vector<1x16x16x4xbf16>
    %1 = vector.shape_cast %0 : vector<1x16x16x4xbf16> to vector<16x16x4xbf16>
    %2 = arith.extf %1 : vector<16x16x4xbf16> to vector<16x16x4xf32>
    %3 = vector.shape_cast %2 : vector<16x16x4xf32> to vector<256x4xf32>
    %c0_3 = arith.constant 0 : index
    %c0_4 = arith.constant 0 : index
    %4 = vector.load %arg2[%c0_3, %c0_4] : memref<1x4xf32, #tpu.memory_space<vmem>>, vector<1x4xf32>
    %5 = vector.broadcast %4 : vector<1x4xf32> to vector<256x4xf32>
    %6 = arith.mulf %3, %5 : vector<256x4xf32>
    %c0_5 = arith.constant 0 : index
    %c0_6 = arith.constant 0 : index
    %7 = vector.load %arg3[%c0_5, %c0_6] : memref<1x4xf32, #tpu.memory_space<vmem>>, vector<1x4xf32>
    %8 = vector.broadcast %7 : vector<1x4xf32> to vector<256x4xf32>
    %9 = arith.addf %6, %8 : vector<256x4xf32>
    %cst = arith.constant 0.000000e+00 : f32
    %10 = vector.broadcast %cst : f32 to vector<256x4xf32>
    %11 = arith.maximumf %9, %10 : vector<256x4xf32>
    %12 = arith.truncf %11 : vector<256x4xf32> to vector<256x4xbf16>
    %c0_7 = arith.constant 0 : index
    %c0_8 = arith.constant 0 : index
    %13 = vector.load %arg4[%c0_7, %c0_8] : memref<4x16xbf16, #tpu.memory_space<vmem>>, vector<4x16xbf16>
    %cst_9 = arith.constant dense<0.000000e+00> : vector<256x16xf32>
    %14 = tpu.matmul %12, %13, %cst_9 {dimension_numbers = #tpu.dot_dimension_numbers<[1], [0], [0], [1], [0, 0, 1, 1], [], []>} : vector<256x4xbf16>, vector<4x16xbf16>, vector<256x16xf32> -> vector<256x16xf32>
    %c0_10 = arith.constant 0 : index
    %c0_11 = arith.constant 0 : index
    %15 = vector.load %arg5[%c0_10, %c0_11] : memref<1x16xf32, #tpu.memory_space<vmem>>, vector<1x16xf32>
    %16 = vector.broadcast %15 : vector<1x16xf32> to vector<256x16xf32>
    %17 = arith.addf %14, %16 : vector<256x16xf32>
    %cst_12 = arith.constant 0.000000e+00 : f32
    %18 = vector.broadcast %cst_12 : f32 to vector<256x16xf32>
    %19 = arith.maximumf %17, %18 : vector<256x16xf32>
    %cst_13 = arith.constant 0.000000e+00 : bf16
    %20 = vector.broadcast %cst_13 : bf16 to vector<1x18x16xbf16>
    %cst_14 = arith.constant 0.000000e+00 : bf16
    %21 = vector.broadcast %cst_14 : bf16 to vector<18x1x16xbf16>
    %c0_15 = arith.constant 0 : index
    %c0_16 = arith.constant 0 : index
    %c0_17 = arith.constant 0 : index
    %22 = vector.load %arg9[%c0_15, %c0_16, %c0_17] : memref<18x18x16xbf16, #tpu.memory_space<vmem>>, vector<1x18x16xbf16>
    tpu.vector_store %arg9[%c0_15, %c0_16, %c0_17], %20 {strides = array<i32>} : memref<18x18x16xbf16, #tpu.memory_space<vmem>>, vector<1x18x16xbf16>,
    %c17 = arith.constant 17 : index
    %c0_18 = arith.constant 0 : index
    %c0_19 = arith.constant 0 : index
    %23 = vector.load %arg9[%c17, %c0_18, %c0_19] : memref<18x18x16xbf16, #tpu.memory_space<vmem>>, vector<1x18x16xbf16>
    tpu.vector_store %arg9[%c17, %c0_18, %c0_19], %20 {strides = array<i32>} : memref<18x18x16xbf16, #tpu.memory_space<vmem>>, vector<1x18x16xbf16>,
    %c0_20 = arith.constant 0 : index
    %c0_21 = arith.constant 0 : index
    %c0_22 = arith.constant 0 : index
    %24 = vector.load %arg9[%c0_20, %c0_21, %c0_22] : memref<18x18x16xbf16, #tpu.memory_space<vmem>>, vector<18x1x16xbf16>
    tpu.vector_store %arg9[%c0_20, %c0_21, %c0_22], %21 {strides = array<i32>} : memref<18x18x16xbf16, #tpu.memory_space<vmem>>, vector<18x1x16xbf16>,
    %c0_23 = arith.constant 0 : index
    %c17_24 = arith.constant 17 : index
    %c0_25 = arith.constant 0 : index
    %25 = vector.load %arg9[%c0_23, %c17_24, %c0_25] : memref<18x18x16xbf16, #tpu.memory_space<vmem>>, vector<18x1x16xbf16>
    tpu.vector_store %arg9[%c0_23, %c17_24, %c0_25], %21 {strides = array<i32>} : memref<18x18x16xbf16, #tpu.memory_space<vmem>>, vector<18x1x16xbf16>,
    %26 = arith.truncf %19 : vector<256x16xf32> to vector<256x16xbf16>
    %27 = vector.shape_cast %26 : vector<256x16xbf16> to vector<16x16x16xbf16>
    %c1 = arith.constant 1 : index
    %c1_26 = arith.constant 1 : index
    %c0_27 = arith.constant 0 : index
    %28 = vector.load %arg9[%c1, %c1_26, %c0_27] : memref<18x18x16xbf16, #tpu.memory_space<vmem>>, vector<16x16x16xbf16>
    tpu.vector_store %arg9[%c1, %c1_26, %c0_27], %27 {strides = array<i32>} : memref<18x18x16xbf16, #tpu.memory_space<vmem>>, vector<16x16x16xbf16>,
    %c0_28 = arith.constant 0 : index
    %c0_29 = arith.constant 0 : index
    %c0_30 = arith.constant 0 : index
    %29 = vector.load %arg9[%c0_28, %c0_29, %c0_30] : memref<18x18x16xbf16, #tpu.memory_space<vmem>>, vector<16x16x16xbf16>
    %30 = vector.shape_cast %29 : vector<16x16x16xbf16> to vector<256x16xbf16>
    %c0_31 = arith.constant 0 : index
    %c0_32 = arith.constant 0 : index
    %c0_33 = arith.constant 0 : index
    %31 = vector.load %arg6[%c0_31, %c0_32, %c0_33] : memref<9x16x4xbf16, #tpu.memory_space<vmem>>, vector<1x16x4xbf16>
    %32 = vector.shape_cast %31 : vector<1x16x4xbf16> to vector<16x4xbf16>
    %cst_34 = arith.constant dense<0.000000e+00> : vector<256x4xf32>
    %33 = tpu.matmul %30, %32, %cst_34 {dimension_numbers = #tpu.dot_dimension_numbers<[1], [0], [0], [1], [0, 0, 1, 1], [], []>} : vector<256x16xbf16>, vector<16x4xbf16>, vector<256x4xf32> -> vector<256x4xf32>
    %c0_35 = arith.constant 0 : index
    %c1_36 = arith.constant 1 : index
    %c0_37 = arith.constant 0 : index
    %34 = vector.load %arg9[%c0_35, %c1_36, %c0_37] : memref<18x18x16xbf16, #tpu.memory_space<vmem>>, vector<16x16x16xbf16>
    %35 = vector.shape_cast %34 : vector<16x16x16xbf16> to vector<256x16xbf16>
    %c1_38 = arith.constant 1 : index
    %c0_39 = arith.constant 0 : index
    %c0_40 = arith.constant 0 : index
    %36 = vector.load %arg6[%c1_38, %c0_39, %c0_40] : memref<9x16x4xbf16, #tpu.memory_space<vmem>>, vector<1x16x4xbf16>
    %37 = vector.shape_cast %36 : vector<1x16x4xbf16> to vector<16x4xbf16>
    %cst_41 = arith.constant dense<0.000000e+00> : vector<256x4xf32>
    %38 = tpu.matmul %35, %37, %cst_41 {dimension_numbers = #tpu.dot_dimension_numbers<[1], [0], [0], [1], [0, 0, 1, 1], [], []>} : vector<256x16xbf16>, vector<16x4xbf16>, vector<256x4xf32> -> vector<256x4xf32>
    %39 = arith.addf %33, %38 : vector<256x4xf32>
    %c0_42 = arith.constant 0 : index
    %c2 = arith.constant 2 : index
    %c0_43 = arith.constant 0 : index
    %40 = vector.load %arg9[%c0_42, %c2, %c0_43] : memref<18x18x16xbf16, #tpu.memory_space<vmem>>, vector<16x16x16xbf16>
    %41 = vector.shape_cast %40 : vector<16x16x16xbf16> to vector<256x16xbf16>
    %c2_44 = arith.constant 2 : index
    %c0_45 = arith.constant 0 : index
    %c0_46 = arith.constant 0 : index
    %42 = vector.load %arg6[%c2_44, %c0_45, %c0_46] : memref<9x16x4xbf16, #tpu.memory_space<vmem>>, vector<1x16x4xbf16>
    %43 = vector.shape_cast %42 : vector<1x16x4xbf16> to vector<16x4xbf16>
    %cst_47 = arith.constant dense<0.000000e+00> : vector<256x4xf32>
    %44 = tpu.matmul %41, %43, %cst_47 {dimension_numbers = #tpu.dot_dimension_numbers<[1], [0], [0], [1], [0, 0, 1, 1], [], []>} : vector<256x16xbf16>, vector<16x4xbf16>, vector<256x4xf32> -> vector<256x4xf32>
    %45 = arith.addf %39, %44 : vector<256x4xf32>
    %c1_48 = arith.constant 1 : index
    %c0_49 = arith.constant 0 : index
    %c0_50 = arith.constant 0 : index
    %46 = vector.load %arg9[%c1_48, %c0_49, %c0_50] : memref<18x18x16xbf16, #tpu.memory_space<vmem>>, vector<16x16x16xbf16>
    %47 = vector.shape_cast %46 : vector<16x16x16xbf16> to vector<256x16xbf16>
    %c3 = arith.constant 3 : index
    %c0_51 = arith.constant 0 : index
    %c0_52 = arith.constant 0 : index
    %48 = vector.load %arg6[%c3, %c0_51, %c0_52] : memref<9x16x4xbf16, #tpu.memory_space<vmem>>, vector<1x16x4xbf16>
    %49 = vector.shape_cast %48 : vector<1x16x4xbf16> to vector<16x4xbf16>
    %cst_53 = arith.constant dense<0.000000e+00> : vector<256x4xf32>
    %50 = tpu.matmul %47, %49, %cst_53 {dimension_numbers = #tpu.dot_dimension_numbers<[1], [0], [0], [1], [0, 0, 1, 1], [], []>} : vector<256x16xbf16>, vector<16x4xbf16>, vector<256x4xf32> -> vector<256x4xf32>
    %51 = arith.addf %45, %50 : vector<256x4xf32>
    %c1_54 = arith.constant 1 : index
    %c1_55 = arith.constant 1 : index
    %c0_56 = arith.constant 0 : index
    %52 = vector.load %arg9[%c1_54, %c1_55, %c0_56] : memref<18x18x16xbf16, #tpu.memory_space<vmem>>, vector<16x16x16xbf16>
    %53 = vector.shape_cast %52 : vector<16x16x16xbf16> to vector<256x16xbf16>
    %c4 = arith.constant 4 : index
    %c0_57 = arith.constant 0 : index
    %c0_58 = arith.constant 0 : index
    %54 = vector.load %arg6[%c4, %c0_57, %c0_58] : memref<9x16x4xbf16, #tpu.memory_space<vmem>>, vector<1x16x4xbf16>
    %55 = vector.shape_cast %54 : vector<1x16x4xbf16> to vector<16x4xbf16>
    %cst_59 = arith.constant dense<0.000000e+00> : vector<256x4xf32>
    %56 = tpu.matmul %53, %55, %cst_59 {dimension_numbers = #tpu.dot_dimension_numbers<[1], [0], [0], [1], [0, 0, 1, 1], [], []>} : vector<256x16xbf16>, vector<16x4xbf16>, vector<256x4xf32> -> vector<256x4xf32>
    %57 = arith.addf %51, %56 : vector<256x4xf32>
    %c1_60 = arith.constant 1 : index
    %c2_61 = arith.constant 2 : index
    %c0_62 = arith.constant 0 : index
    %58 = vector.load %arg9[%c1_60, %c2_61, %c0_62] : memref<18x18x16xbf16, #tpu.memory_space<vmem>>, vector<16x16x16xbf16>
    %59 = vector.shape_cast %58 : vector<16x16x16xbf16> to vector<256x16xbf16>
    %c5 = arith.constant 5 : index
    %c0_63 = arith.constant 0 : index
    %c0_64 = arith.constant 0 : index
    %60 = vector.load %arg6[%c5, %c0_63, %c0_64] : memref<9x16x4xbf16, #tpu.memory_space<vmem>>, vector<1x16x4xbf16>
    %61 = vector.shape_cast %60 : vector<1x16x4xbf16> to vector<16x4xbf16>
    %cst_65 = arith.constant dense<0.000000e+00> : vector<256x4xf32>
    %62 = tpu.matmul %59, %61, %cst_65 {dimension_numbers = #tpu.dot_dimension_numbers<[1], [0], [0], [1], [0, 0, 1, 1], [], []>} : vector<256x16xbf16>, vector<16x4xbf16>, vector<256x4xf32> -> vector<256x4xf32>
    %63 = arith.addf %57, %62 : vector<256x4xf32>
    %c2_66 = arith.constant 2 : index
    %c0_67 = arith.constant 0 : index
    %c0_68 = arith.constant 0 : index
    %64 = vector.load %arg9[%c2_66, %c0_67, %c0_68] : memref<18x18x16xbf16, #tpu.memory_space<vmem>>, vector<16x16x16xbf16>
    %65 = vector.shape_cast %64 : vector<16x16x16xbf16> to vector<256x16xbf16>
    %c6 = arith.constant 6 : index
    %c0_69 = arith.constant 0 : index
    %c0_70 = arith.constant 0 : index
    %66 = vector.load %arg6[%c6, %c0_69, %c0_70] : memref<9x16x4xbf16, #tpu.memory_space<vmem>>, vector<1x16x4xbf16>
    %67 = vector.shape_cast %66 : vector<1x16x4xbf16> to vector<16x4xbf16>
    %cst_71 = arith.constant dense<0.000000e+00> : vector<256x4xf32>
    %68 = tpu.matmul %65, %67, %cst_71 {dimension_numbers = #tpu.dot_dimension_numbers<[1], [0], [0], [1], [0, 0, 1, 1], [], []>} : vector<256x16xbf16>, vector<16x4xbf16>, vector<256x4xf32> -> vector<256x4xf32>
    %69 = arith.addf %63, %68 : vector<256x4xf32>
    %c2_72 = arith.constant 2 : index
    %c1_73 = arith.constant 1 : index
    %c0_74 = arith.constant 0 : index
    %70 = vector.load %arg9[%c2_72, %c1_73, %c0_74] : memref<18x18x16xbf16, #tpu.memory_space<vmem>>, vector<16x16x16xbf16>
    %71 = vector.shape_cast %70 : vector<16x16x16xbf16> to vector<256x16xbf16>
    %c7 = arith.constant 7 : index
    %c0_75 = arith.constant 0 : index
    %c0_76 = arith.constant 0 : index
    %72 = vector.load %arg6[%c7, %c0_75, %c0_76] : memref<9x16x4xbf16, #tpu.memory_space<vmem>>, vector<1x16x4xbf16>
    %73 = vector.shape_cast %72 : vector<1x16x4xbf16> to vector<16x4xbf16>
    %cst_77 = arith.constant dense<0.000000e+00> : vector<256x4xf32>
    %74 = tpu.matmul %71, %73, %cst_77 {dimension_numbers = #tpu.dot_dimension_numbers<[1], [0], [0], [1], [0, 0, 1, 1], [], []>} : vector<256x16xbf16>, vector<16x4xbf16>, vector<256x4xf32> -> vector<256x4xf32>
    %75 = arith.addf %69, %74 : vector<256x4xf32>
    %c2_78 = arith.constant 2 : index
    %c2_79 = arith.constant 2 : index
    %c0_80 = arith.constant 0 : index
    %76 = vector.load %arg9[%c2_78, %c2_79, %c0_80] : memref<18x18x16xbf16, #tpu.memory_space<vmem>>, vector<16x16x16xbf16>
    %77 = vector.shape_cast %76 : vector<16x16x16xbf16> to vector<256x16xbf16>
    %c8 = arith.constant 8 : index
    %c0_81 = arith.constant 0 : index
    %c0_82 = arith.constant 0 : index
    %78 = vector.load %arg6[%c8, %c0_81, %c0_82] : memref<9x16x4xbf16, #tpu.memory_space<vmem>>, vector<1x16x4xbf16>
    %79 = vector.shape_cast %78 : vector<1x16x4xbf16> to vector<16x4xbf16>
    %cst_83 = arith.constant dense<0.000000e+00> : vector<256x4xf32>
    %80 = tpu.matmul %77, %79, %cst_83 {dimension_numbers = #tpu.dot_dimension_numbers<[1], [0], [0], [1], [0, 0, 1, 1], [], []>} : vector<256x16xbf16>, vector<16x4xbf16>, vector<256x4xf32> -> vector<256x4xf32>
    %81 = arith.addf %75, %80 : vector<256x4xf32>
    %c0_84 = arith.constant 0 : index
    %c0_85 = arith.constant 0 : index
    %82 = vector.load %arg7[%c0_84, %c0_85] : memref<1x4xf32, #tpu.memory_space<vmem>>, vector<1x4xf32>
    %83 = vector.broadcast %82 : vector<1x4xf32> to vector<256x4xf32>
    %84 = arith.addf %81, %83 : vector<256x4xf32>
    %85 = vector.shape_cast %84 : vector<256x4xf32> to vector<1x16x16x4xf32>
    %86 = arith.truncf %85 : vector<1x16x16x4xf32> to vector<1x16x16x4xbf16>
    %c0_86 = arith.constant 0 : index
    %c0_87 = arith.constant 0 : index
    %c0_88 = arith.constant 0 : index
    %c0_89 = arith.constant 0 : index
    %87 = vector.load %arg8[%c0_86, %c0_87, %c0_88, %c0_89] : memref<1x16x16x4xbf16, #tpu.memory_space<vmem>>, vector<1x16x16x4xbf16>
    tpu.vector_store %arg8[%c0_86, %c0_87, %c0_88, %c0_89], %86 {strides = array<i32>} : memref<1x16x16x4xbf16, #tpu.memory_space<vmem>>, vector<1x16x16x4xbf16>,
    return
  }
  func.func @transform_0(%arg0: i32) -> (i32, i32, i32, i32) {
    %c0_i32 = arith.constant 0 : i32
    %c0_i32_0 = arith.constant 0 : i32
    %c0_i32_1 = arith.constant 0 : i32
    %c0_i32_2 = arith.constant 0 : i32
    return %arg0, %c0_i32, %c0_i32_0, %c0_i32_1 : i32, i32, i32, i32
  }
  func.func @transform_1(%arg0: i32) -> (i32, i32) {
    %c0_i32 = arith.constant 0 : i32
    %c0_i32_0 = arith.constant 0 : i32
    %c0_i32_1 = arith.constant 0 : i32
    return %c0_i32, %c0_i32_0 : i32, i32
  }
  func.func @transform_2(%arg0: i32) -> (i32, i32) {
    %c0_i32 = arith.constant 0 : i32
    %c0_i32_0 = arith.constant 0 : i32
    %c0_i32_1 = arith.constant 0 : i32
    return %c0_i32, %c0_i32_0 : i32, i32
  }
  func.func @transform_3(%arg0: i32) -> (i32, i32) {
    %c0_i32 = arith.constant 0 : i32
    %c0_i32_0 = arith.constant 0 : i32
    %c0_i32_1 = arith.constant 0 : i32
    return %c0_i32, %c0_i32_0 : i32, i32
  }
  func.func @transform_4(%arg0: i32) -> (i32, i32) {
    %c0_i32 = arith.constant 0 : i32
    %c0_i32_0 = arith.constant 0 : i32
    %c0_i32_1 = arith.constant 0 : i32
    return %c0_i32, %c0_i32_0 : i32, i32
  }
  func.func @transform_5(%arg0: i32) -> (i32, i32, i32) {
    %c0_i32 = arith.constant 0 : i32
    %c0_i32_0 = arith.constant 0 : i32
    %c0_i32_1 = arith.constant 0 : i32
    %c0_i32_2 = arith.constant 0 : i32
    return %c0_i32, %c0_i32_0, %c0_i32_1 : i32, i32, i32
  }
  func.func @transform_6(%arg0: i32) -> (i32, i32) {
    %c0_i32 = arith.constant 0 : i32
    %c0_i32_0 = arith.constant 0 : i32
    %c0_i32_1 = arith.constant 0 : i32
    return %c0_i32, %c0_i32_0 : i32, i32
  }
  func.func @transform_7(%arg0: i32) -> (i32, i32, i32, i32) {
    %c0_i32 = arith.constant 0 : i32
    %c0_i32_0 = arith.constant 0 : i32
    %c0_i32_1 = arith.constant 0 : i32
    %c0_i32_2 = arith.constant 0 : i32
    return %arg0, %c0_i32, %c0_i32_0, %c0_i32_1 : i32, i32, i32, i32
  }
}

</mosaic_0001>

<llo_original>
// kernel: tpu_custom_call.1
$region0: #{tpu_custom_call.1}
  #allocation0 [shape = 'u32[]', space=smem, size = 0x4, offset = 0x4, fixed_abs, tag = 'smem constant byte address 0x4 - core index']
  #allocation1 [shape = 'u32[144,128]{1,0:T(1,128)}', space=vmem, size = 0x12000, scoped, tag = 'internal scratch']
  #allocation2 [shape = 'bf16[18,18,16]{2,1,0:T(8,128)(2,1)}', space=vmem, size = 0x1b000, scoped, tag = 'scratch operand']
  %s0 = inlined_call_operand.vmem [shape: bf16[2,16,16,4], index: 0, kind: input, shape index: {}]
  %s1 = inlined_call_operand.vmem [shape: f32[1,4], index: 1, kind: input, shape index: {}]
  %s2 = inlined_call_operand.vmem [shape: f32[1,4], index: 2, kind: input, shape index: {}]
  %s3 = inlined_call_operand.vmem [shape: bf16[4,16], index: 3, kind: input, shape index: {}]
  %s4 = inlined_call_operand.vmem [shape: f32[1,16], index: 4, kind: input, shape index: {}]
  %s5 = inlined_call_operand.vmem [shape: bf16[9,16,4], index: 5, kind: input, shape index: {}]
  %s6 = inlined_call_operand.vmem [shape: f32[1,4], index: 6, kind: input, shape index: {}]
  %s7 = inlined_call_operand.vmem [shape: bf16[2,16,16,4], index: 7, kind: output, shape index: {}]
  %s8 = sld [smem:[#allocation0]]
  $region61: #{tpu_custom_call.1} parent=0
    _
  %s10 = ssub.s32 1, %s8
  %s11 = scalar_select 0, %s10, %s8
  loop: start=0, step=1, limit=4
  $region2: #{tpu_custom_call.1} parent=0 // loop_pre_header
    _
  $region3: #{tpu_custom_call.1} parent=0 // loop_header
    %s13 = sphi 0, %s17
    %p14 = scmp.ge.s32.totalorder %s13, 4
    %s23 = sphi 0, %s25
    %s26 = sphi 0, %s23
    %s27 = sphi 0, %s26
    %s43 = sphi 0, %s27
    %s47 = sphi 0, %s47
    %s49 = sphi 0, %s47
    %s50 = sphi 0, %s49
    %s64 = sphi 0, %s50
    %s68 = sphi 0, %s68
    %s70 = sphi 0, %s68
    %s71 = sphi 0, %s70
    %s85 = sphi 0, %s71
    %s89 = sphi 0, %s89
    %s91 = sphi 0, %s89
    %s92 = sphi 0, %s91
    %s106 = sphi 0, %s92
    %s110 = sphi 0, %s110
    %s112 = sphi 0, %s110
    %s113 = sphi 0, %s112
    %s127 = sphi 0, %s113
    %s131 = sphi 0, %s131
    %s133 = sphi 0, %s131
    %s134 = sphi 0, %s133
    %s148 = sphi 0, %s134
    %s152 = sphi 0, %s152
    %s154 = sphi 0, %s152
    %s155 = sphi 0, %s154
    %s169 = sphi 0, %s155
    %s175 = sphi 0, %s177
    %s178 = sphi 0, %s175
    %s179 = sphi 0, %s178
    %s195 = sphi 0, %s179
  $region4: #{tpu_custom_call.1} parent=0 // loop_header_branch
    %16 = sbr.rel (%p14) target = $region8
  $region5: #{tpu_custom_call.1} parent=0 // loop_body
    %s18 = ssub.s32 %s13, 1
    %s19 = ssub.s32 %s13, 2
    %s20 = sadd.s32 %s13, 1
    %s21 = ssub.s32 %s13, %s20
    %p22 = scmp.eq.s32.totalorder %s21, 0
    %s24 = sadd.s32 %s23, 1
    %s25 = scalar_select %p22, %s23, %s24
    %p28 = pneg %p22
    %p29 = scmp.eq.s32.totalorder %s13, 1
    %p30 = por %p28, %p29
    %p31 = scmp.ne.s32.totalorder %s23, %s26
    %p32 = scmp.eq.s32.totalorder %s13, 0
    %p33 = por %p31, %p32
    %p34 = scmp.ne.s32.totalorder %s23, %s26
    %p35 = scmp.eq.s32.totalorder %s18, 1
    %p36 = por %p34, %p35
    %p37 = scmp.ne.s32.totalorder %s26, %s27
    %p38 = scmp.eq.s32.totalorder %s18, 0
    %p39 = por %p37, %p38
    %p40 = scmp.ne.s32.totalorder %s26, %s27
    %p41 = scmp.eq.s32.totalorder %s19, 1
    %p42 = por %p40, %p41
    %p44 = scmp.ne.s32.totalorder %s27, %s43
    %p45 = scmp.eq.s32.totalorder %s19, 0
    %p46 = por %p44, %p45
    %s48 = sadd.s32 %s47, 1
    %p51 = scmp.eq.s32.totalorder %s13, 1
    %p52 = scmp.ne.s32.totalorder %s47, %s49
    %p53 = scmp.eq.s32.totalorder %s13, 0
    %p54 = por %p52, %p53
    %p55 = scmp.ne.s32.totalorder %s47, %s49
    %p56 = scmp.eq.s32.totalorder %s18, 1
    %p57 = por %p55, %p56
    %p58 = scmp.ne.s32.totalorder %s49, %s50
    %p59 = scmp.eq.s32.totalorder %s18, 0
    %p60 = por %p58, %p59
    %p61 = scmp.ne.s32.totalorder %s49, %s50
    %p62 = scmp.eq.s32.totalorder %s19, 1
    %p63 = por %p61, %p62
    %p65 = scmp.ne.s32.totalorder %s50, %s64
    %p66 = scmp.eq.s32.totalorder %s19, 0
    %p67 = por %p65, %p66
    %s69 = sadd.s32 %s68, 1
    %p72 = scmp.eq.s32.totalorder %s13, 1
    %p73 = scmp.ne.s32.totalorder %s68, %s70
    %p74 = scmp.eq.s32.totalorder %s13, 0
    %p75 = por %p73, %p74
    %p76 = scmp.ne.s32.totalorder %s68, %s70
    %p77 = scmp.eq.s32.totalorder %s18, 1
    %p78 = por %p76, %p77
    %p79 = scmp.ne.s32.totalorder %s70, %s71
    %p80 = scmp.eq.s32.totalorder %s18, 0
    %p81 = por %p79, %p80
    %p82 = scmp.ne.s32.totalorder %s70, %s71
    %p83 = scmp.eq.s32.totalorder %s19, 1
    %p84 = por %p82, %p83
    %p86 = scmp.ne.s32.totalorder %s71, %s85
    %p87 = scmp.eq.s32.totalorder %s19, 0
    %p88 = por %p86, %p87
    %s90 = sadd.s32 %s89, 1
    %p93 = scmp.eq.s32.totalorder %s13, 1
    %p94 = scmp.ne.s32.totalorder %s89, %s91
    %p95 = scmp.eq.s32.totalorder %s13, 0
    %p96 = por %p94, %p95
    %p97 = scmp.ne.s32.totalorder %s89, %s91
    %p98 = scmp.eq.s32.totalorder %s18, 1
    %p99 = por %p97, %p98
    %p100 = scmp.ne.s32.totalorder %s91, %s92
    %p101 = scmp.eq.s32.totalorder %s18, 0
    %p102 = por %p100, %p101
    %p103 = scmp.ne.s32.totalorder %s91, %s92
    %p104 = scmp.eq.s32.totalorder %s19, 1
    %p105 = por %p103, %p104
    %p107 = scmp.ne.s32.totalorder %s92, %s106
    %p108 = scmp.eq.s32.totalorder %s19, 0
    %p109 = por %p107, %p108
    %s111 = sadd.s32 %s110, 1
    %p114 = scmp.eq.s32.totalorder %s13, 1
    %p115 = scmp.ne.s32.totalorder %s110, %s112
    %p116 = scmp.eq.s32.totalorder %s13, 0
    %p117 = por %p115, %p116
    %p118 = scmp.ne.s32.totalorder %s110, %s112
    %p119 = scmp.eq.s32.totalorder %s18, 1
    %p120 = por %p118, %p119
    %p121 = scmp.ne.s32.totalorder %s112, %s113
    %p122 = scmp.eq.s32.totalorder %s18, 0
    %p123 = por %p121, %p122
    %p124 = scmp.ne.s32.totalorder %s112, %s113
    %p125 = scmp.eq.s32.totalorder %s19, 1
    %p126 = por %p124, %p125
    %p128 = scmp.ne.s32.totalorder %s113, %s127
    %p129 = scmp.eq.s32.totalorder %s19, 0
    %p130 = por %p128, %p129
    %s132 = sadd.s32 %s131, 1
    %p135 = scmp.eq.s32.totalorder %s13, 1
    %p136 = scmp.ne.s32.totalorder %s131, %s133
    %p137 = scmp.eq.s32.totalorder %s13, 0
    %p138 = por %p136, %p137
    %p139 = scmp.ne.s32.totalorder %s131, %s133
    %p140 = scmp.eq.s32.totalorder %s18, 1
    %p141 = por %p139, %p140
    %p142 = scmp.ne.s32.totalorder %s133, %s134
    %p143 = scmp.eq.s32.totalorder %s18, 0
    %p144 = por %p142, %p143
    %p145 = scmp.ne.s32.totalorder %s133, %s134
    %p146 = scmp.eq.s32.totalorder %s19, 1
    %p147 = por %p145, %p146
    %p149 = scmp.ne.s32.totalorder %s134, %s148
    %p150 = scmp.eq.s32.totalorder %s19, 0
    %p151 = por %p149, %p150
    %s153 = sadd.s32 %s152, 1
    %p156 = scmp.eq.s32.totalorder %s13, 1
    %p157 = scmp.ne.s32.totalorder %s152, %s154
    %p158 = scmp.eq.s32.totalorder %s13, 0
    %p159 = por %p157, %p158
    %p160 = scmp.ne.s32.totalorder %s152, %s154
    %p161 = scmp.eq.s32.totalorder %s18, 1
    %p162 = por %p160, %p161
    %p163 = scmp.ne.s32.totalorder %s154, %s155
    %p164 = scmp.eq.s32.totalorder %s18, 0
    %p165 = por %p163, %p164
    %p166 = scmp.ne.s32.totalorder %s154, %s155
    %p167 = scmp.eq.s32.totalorder %s19, 1
    %p168 = por %p166, %p167
    %p170 = scmp.ne.s32.totalorder %s155, %s169
    %p171 = scmp.eq.s32.totalorder %s19, 0
    %p172 = por %p170, %p171
    %s173 = ssub.s32 %s13, %s20
    %p174 = scmp.eq.s32.totalorder %s173, 0
    %s176 = sadd.s32 %s175, 1
    %s177 = scalar_select %p174, %s175, %s176
    %p180 = pneg %p174
    %p181 = scmp.eq.s32.totalorder %s13, 1
    %p182 = por %p180, %p181
    %p183 = scmp.ne.s32.totalorder %s175, %s178
    %p184 = scmp.eq.s32.totalorder %s13, 0
    %p185 = por %p183, %p184
    %p186 = scmp.ne.s32.totalorder %s175, %s178
    %p187 = scmp.eq.s32.totalorder %s18, 1
    %p188 = por %p186, %p187
    %p189 = scmp.ne.s32.totalorder %s178, %s179
    %p190 = scmp.eq.s32.totalorder %s18, 0
    %p191 = por %p189, %p190
    %p192 = scmp.ne.s32.totalorder %s178, %s179
    %p193 = scmp.eq.s32.totalorder %s19, 1
    %p194 = por %p192, %p193
    %p196 = scmp.ne.s32.totalorder %s179, %s195
    %p197 = scmp.eq.s32.totalorder %s19, 0
    %p198 = por %p196, %p197
    %p199 = scmp.le.s32.totalorder 1, %s13
    %p200 = scmp.lt.s32.totalorder %s13, 3
    %p201 = pnand %p199, %p200
    %p202 = pneg %p201
    // Predicated region
    $region9: #{tpu_custom_call.1} parent=5 // pred_check
      _
    $region10: #{tpu_custom_call.1} parent=5 // pred_check_branch
      %204 = sbr.rel (%p201) target = $region12
    $region11: #{tpu_custom_call.1} parent=5 // pred_region
      %s205 = ssub.s32 %s13, 1
      // Predicated region
      $region13: #{tpu_custom_call.1} parent=11 // pred_check
        %p206 = pneg %p60
      $region14: #{tpu_custom_call.1} parent=11 // pred_check_branch
        %208 = sbr.rel (%p206) target = $region16
      $region15: #{tpu_custom_call.1} parent=11 // pred_region
        _
      $region16: #{tpu_custom_call.1} parent=11 // pred_fallthru
        _
      // Predicated region
      $region17: #{tpu_custom_call.1} parent=11 // pred_check
        %p209 = pneg %p81
      $region18: #{tpu_custom_call.1} parent=11 // pred_check_branch
        %211 = sbr.rel (%p209) target = $region20
      $region19: #{tpu_custom_call.1} parent=11 // pred_region
        _
      $region20: #{tpu_custom_call.1} parent=11 // pred_fallthru
        _
      // Predicated region
      $region21: #{tpu_custom_call.1} parent=11 // pred_check
        %p212 = pneg %p102
      $region22: #{tpu_custom_call.1} parent=11 // pred_check_branch
        %214 = sbr.rel (%p212) target = $region24
      $region23: #{tpu_custom_call.1} parent=11 // pred_region
        _
      $region24: #{tpu_custom_call.1} parent=11 // pred_fallthru
        _
      // Predicated region
      $region25: #{tpu_custom_call.1} parent=11 // pred_check
        %p215 = pneg %p123
      $region26: #{tpu_custom_call.1} parent=11 // pred_check_branch
        %217 = sbr.rel (%p215) target = $region28
      $region27: #{tpu_custom_call.1} parent=11 // pred_region
        _
      $region28: #{tpu_custom_call.1} parent=11 // pred_fallthru
        _
      // Predicated region
      $region29: #{tpu_custom_call.1} parent=11 // pred_check
        %p218 = pneg %p144
      $region30: #{tpu_custom_call.1} parent=11 // pred_check_branch
        %220 = sbr.rel (%p218) target = $region32
      $region31: #{tpu_custom_call.1} parent=11 // pred_region
        _
      $region32: #{tpu_custom_call.1} parent=11 // pred_fallthru
        _
      // Predicated region
      $region33: #{tpu_custom_call.1} parent=11 // pred_check
        %p221 = pneg %p165
      $region34: #{tpu_custom_call.1} parent=11 // pred_check_branch
        %223 = sbr.rel (%p221) target = $region36
      $region35: #{tpu_custom_call.1} parent=11 // pred_region
        _
      $region36: #{tpu_custom_call.1} parent=11 // pred_fallthru
        _
    $region12: #{tpu_custom_call.1} parent=5 // pred_fallthru
      _
    %p224 = scmp.lt.s32.totalorder %s13, 2
    // Predicated region
    $region37: #{tpu_custom_call.1} parent=5 // pred_check
      %p225 = pneg %p224
    $region38: #{tpu_custom_call.1} parent=5 // pred_check_branch
      %227 = sbr.rel (%p225) target = $region40
    $region39: #{tpu_custom_call.1} parent=5 // pred_region
      // Predicated region
      $region41: #{tpu_custom_call.1} parent=39 // pred_check
        %p228 = pneg %p33
      $region42: #{tpu_custom_call.1} parent=39 // pred_check_branch
        %230 = sbr.rel (%p228) target = $region44
      $region43: #{tpu_custom_call.1} parent=39 // pred_region
        %p231 = scmp.lt.s32.totalorder %s13, 1
        %s232 = scalar_select %p231, %s13, 1
        %s233 = smul.addr %s232, 32
        %s234 = smul.addr %s233, 4
        %s235 = scalar_lea.vmem %s0, %s234
      $region44: #{tpu_custom_call.1} parent=39 // pred_fallthru
        _
    $region40: #{tpu_custom_call.1} parent=5 // pred_fallthru
      _
    %p236 = scmp.le.s32.totalorder 1, %s13
    %p237 = scmp.lt.s32.totalorder %s13, 3
    %p238 = pnand %p236, %p237
    %p239 = pneg %p238
    // Predicated region
    $region45: #{tpu_custom_call.1} parent=5 // pred_check
      _
    $region46: #{tpu_custom_call.1} parent=5 // pred_check_branch
      %241 = sbr.rel (%p238) target = $region48
    $region47: #{tpu_custom_call.1} parent=5 // pred_region
      %s242 = ssub.s32 %s13, 1
      %p243 = scmp.lt.s32.totalorder %s18, 1
      %s244 = scalar_select %p243, %s18, 1
      %s245 = smul.addr %s244, 32
      %s246 = smul.addr %s245, 4
      %s247 = scalar_lea.vmem %s0, %s246
      %p248 = pneg %p39
      %p249 = pneg %p36
      %p250 = pneg %p60
      %p251 = pneg %p57
      %p252 = pneg %p81
      %p253 = pneg %p78
      %p254 = pneg %p102
      %p255 = pneg %p99
      %p256 = pneg %p123
      %p257 = pneg %p120
      %p258 = pneg %p144
      %p259 = pneg %p141
      %p260 = pneg %p165
      %p261 = pneg %p162
      %p262 = pneg %p191
      %p263 = pneg %p188
      %p264 = scmp.lt.s32.totalorder %s18, 1
      %s265 = scalar_select %p264, %s18, 1
      %s266 = smul.addr %s265, 32
      %s267 = smul.addr %s266, 4
      %s268 = scalar_lea.vmem %s7, %s267
      %p269 = scmp.lt.s32.totalorder %s18, 1
      %s270 = scalar_select %p269, %s18, 1
      %s271 = smul.addr %s270, 32
      %s272 = smul.addr %s271, 4
      %s273 = scalar_lea.vmem %s0, %s272
      %p274 = scmp.lt.s32.totalorder %s18, 1
      %s275 = scalar_select %p274, %s18, 1
      %s276 = smul.addr %s275, 32
      %s277 = smul.addr %s276, 4
      %s278 = scalar_lea.vmem %s7, %s277
      %v280 = vld [vmem:[%s273] sm:$0xf]
      %v281 = vld [vmem:[%s273 + $0x4] sm:$0xf]
      %v282 = vld [vmem:[%s273 + $0x8] sm:$0xf]
      %v283 = vld [vmem:[%s273 + $0xc] sm:$0xf]
      %v284 = vld [vmem:[%s273 + $0x10] sm:$0xf]
      %v285 = vld [vmem:[%s273 + $0x14] sm:$0xf]
      %v286 = vld [vmem:[%s273 + $0x18] sm:$0xf]
      %v287 = vld [vmem:[%s273 + $0x1c] sm:$0xf]
      %v288 = vld [vmem:[%s273 + $0x20] sm:$0xf]
      %v289 = vld [vmem:[%s273 + $0x24] sm:$0xf]
      %v290 = vld [vmem:[%s273 + $0x28] sm:$0xf]
      %v291 = vld [vmem:[%s273 + $0x2c] sm:$0xf]
      %v292 = vld [vmem:[%s273 + $0x30] sm:$0xf]
      %v293 = vld [vmem:[%s273 + $0x34] sm:$0xf]
      %v294 = vld [vmem:[%s273 + $0x38] sm:$0xf]
      %v295 = vld [vmem:[%s273 + $0x3c] sm:$0xf]
      %v296 = vld [vmem:[%s273 + $0x40] sm:$0xf]
      %v297 = vld [vmem:[%s273 + $0x44] sm:$0xf]
      %v298 = vld [vmem:[%s273 + $0x48] sm:$0xf]
      %v299 = vld [vmem:[%s273 + $0x4c] sm:$0xf]
      %v300 = vld [vmem:[%s273 + $0x50] sm:$0xf]
      %v301 = vld [vmem:[%s273 + $0x54] sm:$0xf]
      %v302 = vld [vmem:[%s273 + $0x58] sm:$0xf]
      %v303 = vld [vmem:[%s273 + $0x5c] sm:$0xf]
      %v304 = vld [vmem:[%s273 + $0x60] sm:$0xf]
      %v305 = vld [vmem:[%s273 + $0x64] sm:$0xf]
      %v306 = vld [vmem:[%s273 + $0x68] sm:$0xf]
      %v307 = vld [vmem:[%s273 + $0x6c] sm:$0xf]
      %v308 = vld [vmem:[%s273 + $0x70] sm:$0xf]
      %v309 = vld [vmem:[%s273 + $0x74] sm:$0xf]
      %v310 = vld [vmem:[%s273 + $0x78] sm:$0xf]
      %v311 = vld [vmem:[%s273 + $0x7c] sm:$0xf]
      %v312 = vunpack.c.l.bf16 %v280
      %v313 = vunpack.c.l.bf16 %v281
      %v314 = vunpack.c.l.bf16 %v282
      %v315 = vunpack.c.l.bf16 %v283
      %v316 = vunpack.c.l.bf16 %v284
      %v317 = vunpack.c.l.bf16 %v285
      %v318 = vunpack.c.l.bf16 %v286
      %v319 = vunpack.c.l.bf16 %v287
      %v320 = vunpack.c.l.bf16 %v288
      %v321 = vunpack.c.l.bf16 %v289
      %v322 = vunpack.c.l.bf16 %v290
      %v323 = vunpack.c.l.bf16 %v291
      %v324 = vunpack.c.l.bf16 %v292
      %v325 = vunpack.c.l.bf16 %v293
      %v326 = vunpack.c.l.bf16 %v294
      %v327 = vunpack.c.l.bf16 %v295
      %v328 = vunpack.c.l.bf16 %v296
      %v329 = vunpack.c.l.bf16 %v297
      %v330 = vunpack.c.l.bf16 %v298
      %v331 = vunpack.c.l.bf16 %v299
      %v332 = vunpack.c.l.bf16 %v300
      %v333 = vunpack.c.l.bf16 %v301
      %v334 = vunpack.c.l.bf16 %v302
      %v335 = vunpack.c.l.bf16 %v303
      %v336 = vunpack.c.l.bf16 %v304
      %v337 = vunpack.c.l.bf16 %v305
      %v338 = vunpack.c.l.bf16 %v306
      %v339 = vunpack.c.l.bf16 %v307
      %v340 = vunpack.c.l.bf16 %v308
      %v341 = vunpack.c.l.bf16 %v309
      %v342 = vunpack.c.l.bf16 %v310
      %v343 = vunpack.c.l.bf16 %v311
      %v344 = vld [vmem:[%s1] sm:$0x1]
      %v346 = vlaneseq
      %v347 = vshrl.u32 %v346, 7
      %v348 = vsub.s32 0, %v347
      %v349 = vrot.slane %v344, %v348
      %v351 = vmul.f32 %v312, %v349
      %v352 = vmul.f32 %v313, %v349
      %v353 = vmul.f32 %v314, %v349
      %v354 = vmul.f32 %v315, %v349
      %v355 = vmul.f32 %v316, %v349
      %v356 = vmul.f32 %v317, %v349
      %v357 = vmul.f32 %v318, %v349
      %v358 = vmul.f32 %v319, %v349
      %v359 = vmul.f32 %v320, %v349
      %v360 = vmul.f32 %v321, %v349
      %v361 = vmul.f32 %v322, %v349
      %v362 = vmul.f32 %v323, %v349
      %v363 = vmul.f32 %v324, %v349
      %v364 = vmul.f32 %v325, %v349
      %v365 = vmul.f32 %v326, %v349
      %v366 = vmul.f32 %v327, %v349
      %v367 = vmul.f32 %v328, %v349
      %v368 = vmul.f32 %v329, %v349
      %v369 = vmul.f32 %v330, %v349
      %v370 = vmul.f32 %v331, %v349
      %v371 = vmul.f32 %v332, %v349
      %v372 = vmul.f32 %v333, %v349
      %v373 = vmul.f32 %v334, %v349
      %v374 = vmul.f32 %v335, %v349
      %v375 = vmul.f32 %v336, %v349
      %v376 = vmul.f32 %v337, %v349
      %v377 = vmul.f32 %v338, %v349
      %v378 = vmul.f32 %v339, %v349
      %v379 = vmul.f32 %v340, %v349
      %v380 = vmul.f32 %v341, %v349
      %v381 = vmul.f32 %v342, %v349
      %v382 = vmul.f32 %v343, %v349
      %v383 = vld [vmem:[%s2] sm:$0x1]
      %v385 = vlaneseq
      %v386 = vshrl.u32 %v385, 7
      %v387 = vsub.s32 0, %v386
      %v388 = vrot.slane %v383, %v387
      %v390 = vadd.f32 %v351, %v388
      %v391 = vadd.f32 %v352, %v388
      %v392 = vadd.f32 %v353, %v388
      %v393 = vadd.f32 %v354, %v388
      %v394 = vadd.f32 %v355, %v388
      %v395 = vadd.f32 %v356, %v388
      %v396 = vadd.f32 %v357, %v388
      %v397 = vadd.f32 %v358, %v388
      %v398 = vadd.f32 %v359, %v388
      %v399 = vadd.f32 %v360, %v388
      %v400 = vadd.f32 %v361, %v388
      %v401 = vadd.f32 %v362, %v388
      %v402 = vadd.f32 %v363, %v388
      %v403 = vadd.f32 %v364, %v388
      %v404 = vadd.f32 %v365, %v388
      %v405 = vadd.f32 %v366, %v388
      %v406 = vadd.f32 %v367, %v388
      %v407 = vadd.f32 %v368, %v388
      %v408 = vadd.f32 %v369, %v388
      %v409 = vadd.f32 %v370, %v388
      %v410 = vadd.f32 %v371, %v388
      %v411 = vadd.f32 %v372, %v388
      %v412 = vadd.f32 %v373, %v388
      %v413 = vadd.f32 %v374, %v388
      %v414 = vadd.f32 %v375, %v388
      %v415 = vadd.f32 %v376, %v388
      %v416 = vadd.f32 %v377, %v388
      %v417 = vadd.f32 %v378, %v388
      %v418 = vadd.f32 %v379, %v388
      %v419 = vadd.f32 %v380, %v388
      %v420 = vadd.f32 %v381, %v388
      %v421 = vadd.f32 %v382, %v388
      %v422 = vmax.f32 %v390, 0.0
      %v423 = vmax.f32 %v391, 0.0
      %v424 = vmax.f32 %v392, 0.0
      %v425 = vmax.f32 %v393, 0.0
      %v426 = vmax.f32 %v394, 0.0
      %v427 = vmax.f32 %v395, 0.0
      %v428 = vmax.f32 %v396, 0.0
      %v429 = vmax.f32 %v397, 0.0
      %v430 = vmax.f32 %v398, 0.0
      %v431 = vmax.f32 %v399, 0.0
      %v432 = vmax.f32 %v400, 0.0
      %v433 = vmax.f32 %v401, 0.0
      %v434 = vmax.f32 %v402, 0.0
      %v435 = vmax.f32 %v403, 0.0
      %v436 = vmax.f32 %v404, 0.0
      %v437 = vmax.f32 %v405, 0.0
      %v438 = vmax.f32 %v406, 0.0
      %v439 = vmax.f32 %v407, 0.0
      %v440 = vmax.f32 %v408, 0.0
      %v441 = vmax.f32 %v409, 0.0
      %v442 = vmax.f32 %v410, 0.0
      %v443 = vmax.f32 %v411, 0.0
      %v444 = vmax.f32 %v412, 0.0
      %v445 = vmax.f32 %v413, 0.0
      %v446 = vmax.f32 %v414, 0.0
      %v447 = vmax.f32 %v415, 0.0
      %v448 = vmax.f32 %v416, 0.0
      %v449 = vmax.f32 %v417, 0.0
      %v450 = vmax.f32 %v418, 0.0
      %v451 = vmax.f32 %v419, 0.0
      %v452 = vmax.f32 %v420, 0.0
      %v453 = vmax.f32 %v421, 0.0
      %v454 = vpack.c.bf16 %v423, %v422
      %v455 = vpack.c.bf16 %v425, %v424
      %v456 = vpack.c.bf16 %v427, %v426
      %v457 = vpack.c.bf16 %v429, %v428
      %v458 = vpack.c.bf16 %v431, %v430
      %v459 = vpack.c.bf16 %v433, %v432
      %v460 = vpack.c.bf16 %v435, %v434
      %v461 = vpack.c.bf16 %v437, %v436
      %v462 = vpack.c.bf16 %v439, %v438
      %v463 = vpack.c.bf16 %v441, %v440
      %v464 = vpack.c.bf16 %v443, %v442
      %v465 = vpack.c.bf16 %v445, %v444
      %v466 = vpack.c.bf16 %v447, %v446
      %v467 = vpack.c.bf16 %v449, %v448
      %v468 = vpack.c.bf16 %v451, %v450
      %v469 = vpack.c.bf16 %v453, %v452
      %v470 = vld [vmem:[%s3] sm:$0x3]
      %v471 = vld [vmem:[%s4] sm:$0x1]
      %v473 = vlaneseq
      %v474 = vshrl.u32 %v473, 7
      %v475 = vsub.s32 0, %v474
      %v476 = vrot.slane %v471, %v475
      %vm478 = vcmask 31744
      %v480 = vsel %vm478, %v454, 0
      %v483 = vsel %vm478, %v455, 0
      %v486 = vsel %vm478, %v456, 0
      %v489 = vsel %vm478, %v457, 0
      %v492 = vsel %vm478, %v458, 0
      %v495 = vsel %vm478, %v459, 0
      %v498 = vsel %vm478, %v460, 0
      %v501 = vsel %vm478, %v461, 0
      %v504 = vsel %vm478, %v462, 0
      %v507 = vsel %vm478, %v463, 0
      %v510 = vsel %vm478, %v464, 0
      %v513 = vsel %vm478, %v465, 0
      %v516 = vsel %vm478, %v466, 0
      %v519 = vsel %vm478, %v467, 0
      %v522 = vsel %vm478, %v468, 0
      %v525 = vsel %vm478, %v469, 0
      %vm527 = vcmask 1041408
      %v529 = vsel %vm527, %v470, 0
      %531 = vmatprep.subr.bf16.mxu0 0
      %532 = vmatpush1.bf16.msra.mxu0 %v529
      %533 = vmatprep.subr.bf16.mxu0 0
      %534 = vmatpush1.bf16.msra.mxu0 0
      %535 = vmatprep.subr.bf16.mxu0 0
      %536 = vmatpush1.bf16.msra.mxu0 0
      %537 = vmatprep.subr.bf16.mxu0 0
      %538 = vmatpush1.bf16.msra.mxu0 0
      %539 = vmatprep.subr.bf16.mxu0 0
      %540 = vmatpush1.bf16.msra.mxu0 0
      %541 = vmatprep.subr.bf16.mxu0 0
      %542 = vmatpush1.bf16.msra.mxu0 0
      %543 = vmatprep.subr.bf16.mxu0 0
      %544 = vmatpush1.bf16.msra.mxu0 0
      %545 = vmatprep.subr.bf16.mxu0 0
      %546 = vmatpush1.bf16.msra.mxu0 0
      %547 = vmatprep.subr.bf16.mxu0 0
      %548 = vmatpush1.bf16.msra.mxu0 0
      %549 = vmatprep.subr.bf16.mxu0 0
      %550 = vmatpush1.bf16.msra.mxu0 0
      %551 = vmatprep.subr.bf16.mxu0 0
      %552 = vmatpush1.bf16.msra.mxu0 0
      %553 = vmatprep.subr.bf16.mxu0 0
      %554 = vmatpush1.bf16.msra.mxu0 0
      %555 = vmatprep.subr.bf16.mxu0 0
      %556 = vmatpush1.bf16.msra.mxu0 0
      %557 = vmatprep.subr.bf16.mxu0 0
      %558 = vmatpush1.bf16.msra.mxu0 0
      %559 = vmatprep.subr.bf16.mxu0 0
      %560 = vmatpush1.bf16.msra.mxu0 0
      %561 = vmatprep.subr.bf16.mxu0 0
      %562 = vmatpush1.bf16.msra.mxu0 0
      %563 = vmatprep.mubr.bf16.mxu0 0
      %564 = vmatmul.mubr.bf16.gmra.mrb[0].mxu0 %v480
      %v565 = vpop.f32.mrb[0].mxu0
      %v566 = vadd.f32 %v476, %v565
      %v567 = vpop.f32.mrb[0].mxu0
      %v568 = vpop.f32.mrb[0].mxu0
      %v569 = vadd.f32 %v476, %v568
      %v570 = vpop.f32.mrb[0].mxu0
      %571 = vmatprep.mubr.bf16.mxu0 0
      %572 = vmatmul.mubr.bf16.gmra.mrb[0].mxu0 %v483
      %v573 = vpop.f32.mrb[0].mxu0
      %v574 = vadd.f32 %v476, %v573
      %v575 = vpop.f32.mrb[0].mxu0
      %v576 = vpop.f32.mrb[0].mxu0
      %v577 = vadd.f32 %v476, %v576
      %v578 = vpop.f32.mrb[0].mxu0
      %579 = vmatprep.mubr.bf16.mxu0 0
      %580 = vmatmul.mubr.bf16.gmra.mrb[0].mxu0 %v486
      %v581 = vpop.f32.mrb[0].mxu0
      %v582 = vadd.f32 %v476, %v581
      %v583 = vpop.f32.mrb[0].mxu0
      %v584 = vpop.f32.mrb[0].mxu0
      %v585 = vadd.f32 %v476, %v584
      %v586 = vpop.f32.mrb[0].mxu0
      %587 = vmatprep.mubr.bf16.mxu0 0
      %588 = vmatmul.mubr.bf16.gmra.mrb[0].mxu0 %v489
      %v589 = vpop.f32.mrb[0].mxu0
      %v590 = vadd.f32 %v476, %v589
      %v591 = vpop.f32.mrb[0].mxu0
      %v592 = vpop.f32.mrb[0].mxu0
      %v593 = vadd.f32 %v476, %v592
      %v594 = vpop.f32.mrb[0].mxu0
      %595 = vmatprep.mubr.bf16.mxu0 0
      %596 = vmatmul.mubr.bf16.gmra.mrb[0].mxu0 %v492
      %v597 = vpop.f32.mrb[0].mxu0
      %v598 = vadd.f32 %v476, %v597
      %v599 = vpop.f32.mrb[0].mxu0
      %v600 = vpop.f32.mrb[0].mxu0
      %v601 = vadd.f32 %v476, %v600
      %v602 = vpop.f32.mrb[0].mxu0
      %603 = vmatprep.mubr.bf16.mxu0 0
      %604 = vmatmul.mubr.bf16.gmra.mrb[0].mxu0 %v495
      %v605 = vpop.f32.mrb[0].mxu0
      %v606 = vadd.f32 %v476, %v605
      %v607 = vpop.f32.mrb[0].mxu0
      %v608 = vpop.f32.mrb[0].mxu0
      %v609 = vadd.f32 %v476, %v608
      %v610 = vpop.f32.mrb[0].mxu0
      %611 = vmatprep.mubr.bf16.mxu0 0
      %612 = vmatmul.mubr.bf16.gmra.mrb[0].mxu0 %v498
      %v613 = vpop.f32.mrb[0].mxu0
      %v614 = vadd.f32 %v476, %v613
      %v615 = vpop.f32.mrb[0].mxu0
      %v616 = vpop.f32.mrb[0].mxu0
      %v617 = vadd.f32 %v476, %v616
      %v618 = vpop.f32.mrb[0].mxu0
      %619 = vmatprep.mubr.bf16.mxu0 0
      %620 = vmatmul.mubr.bf16.gmra.mrb[0].mxu0 %v501
      %v621 = vpop.f32.mrb[0].mxu0
      %v622 = vadd.f32 %v476, %v621
      %v623 = vpop.f32.mrb[0].mxu0
      %v624 = vpop.f32.mrb[0].mxu0
      %v625 = vadd.f32 %v476, %v624
      %v626 = vpop.f32.mrb[0].mxu0
      %627 = vmatprep.mubr.bf16.mxu0 0
      %628 = vmatmul.mubr.bf16.gmra.mrb[0].mxu0 %v504
      %v629 = vpop.f32.mrb[0].mxu0
      %v630 = vadd.f32 %v476, %v629
      %v631 = vpop.f32.mrb[0].mxu0
      %v632 = vpop.f32.mrb[0].mxu0
      %v633 = vadd.f32 %v476, %v632
      %v634 = vpop.f32.mrb[0].mxu0
      %635 = vmatprep.mubr.bf16.mxu0 0
      %636 = vmatmul.mubr.bf16.gmra.mrb[0].mxu0 %v507
      %v637 = vpop.f32.mrb[0].mxu0
      %v638 = vadd.f32 %v476, %v637
      %v639 = vpop.f32.mrb[0].mxu0
      %v640 = vpop.f32.mrb[0].mxu0
      %v641 = vadd.f32 %v476, %v640
      %v642 = vpop.f32.mrb[0].mxu0
      %643 = vmatprep.mubr.bf16.mxu0 0
      %644 = vmatmul.mubr.bf16.gmra.mrb[0].mxu0 %v510
      %v645 = vpop.f32.mrb[0].mxu0
      %v646 = vadd.f32 %v476, %v645
      %v647 = vpop.f32.mrb[0].mxu0
      %v648 = vpop.f32.mrb[0].mxu0
      %v649 = vadd.f32 %v476, %v648
      %v650 = vpop.f32.mrb[0].mxu0
      %651 = vmatprep.mubr.bf16.mxu0 0
      %652 = vmatmul.mubr.bf16.gmra.mrb[0].mxu0 %v513
      %v653 = vpop.f32.mrb[0].mxu0
      %v654 = vadd.f32 %v476, %v653
      %v655 = vpop.f32.mrb[0].mxu0
      %v656 = vpop.f32.mrb[0].mxu0
      %v657 = vadd.f32 %v476, %v656
      %v658 = vpop.f32.mrb[0].mxu0
      %659 = vmatprep.mubr.bf16.mxu0 0
      %660 = vmatmul.mubr.bf16.gmra.mrb[0].mxu0 %v516
      %v661 = vpop.f32.mrb[0].mxu0
      %v662 = vadd.f32 %v476, %v661
      %v663 = vpop.f32.mrb[0].mxu0
      %v664 = vpop.f32.mrb[0].mxu0
      %v665 = vadd.f32 %v476, %v664
      %v666 = vpop.f32.mrb[0].mxu0
      %667 = vmatprep.mubr.bf16.mxu0 0
      %668 = vmatmul.mubr.bf16.gmra.mrb[0].mxu0 %v519
      %v669 = vpop.f32.mrb[0].mxu0
      %v670 = vadd.f32 %v476, %v669
      %v671 = vpop.f32.mrb[0].mxu0
      %v672 = vpop.f32.mrb[0].mxu0
      %v673 = vadd.f32 %v476, %v672
      %v674 = vpop.f32.mrb[0].mxu0
      %675 = vmatprep.mubr.bf16.mxu0 0
      %676 = vmatmul.mubr.bf16.gmra.mrb[0].mxu0 %v522
      %v677 = vpop.f32.mrb[0].mxu0
      %v678 = vadd.f32 %v476, %v677
      %v679 = vpop.f32.mrb[0].mxu0
      %v680 = vpop.f32.mrb[0].mxu0
      %v681 = vadd.f32 %v476, %v680
      %v682 = vpop.f32.mrb[0].mxu0
      %683 = vmatprep.mubr.bf16.mxu0 0
      %684 = vmatmul.mubr.bf16.gmra.mrb[0].mxu0 %v525
      %v685 = vpop.f32.mrb[0].mxu0
      %v686 = vadd.f32 %v476, %v685
      %v687 = vpop.f32.mrb[0].mxu0
      %v688 = vpop.f32.mrb[0].mxu0
      %v689 = vadd.f32 %v476, %v688
      %v690 = vpop.f32.mrb[0].mxu0
      %691 = vdwg.mxu0
      %v692 = vmax.f32 %v566, 0.0
      %v693 = vmax.f32 %v569, 0.0
      %v694 = vmax.f32 %v574, 0.0
      %v695 = vmax.f32 %v577, 0.0
      %v696 = vmax.f32 %v582, 0.0
      %v697 = vmax.f32 %v585, 0.0
      %v698 = vmax.f32 %v590, 0.0
      %v699 = vmax.f32 %v593, 0.0
      %v700 = vmax.f32 %v598, 0.0
      %v701 = vmax.f32 %v601, 0.0
      %v702 = vmax.f32 %v606, 0.0
      %v703 = vmax.f32 %v609, 0.0
      %v704 = vmax.f32 %v614, 0.0
      %v705 = vmax.f32 %v617, 0.0
      %v706 = vmax.f32 %v622, 0.0
      %v707 = vmax.f32 %v625, 0.0
      %v708 = vmax.f32 %v630, 0.0
      %v709 = vmax.f32 %v633, 0.0
      %v710 = vmax.f32 %v638, 0.0
      %v711 = vmax.f32 %v641, 0.0
      %v712 = vmax.f32 %v646, 0.0
      %v713 = vmax.f32 %v649, 0.0
      %v714 = vmax.f32 %v654, 0.0
      %v715 = vmax.f32 %v657, 0.0
      %v716 = vmax.f32 %v662, 0.0
      %v717 = vmax.f32 %v665, 0.0
      %v718 = vmax.f32 %v670, 0.0
      %v719 = vmax.f32 %v673, 0.0
      %v720 = vmax.f32 %v678, 0.0
      %v721 = vmax.f32 %v681, 0.0
      %v722 = vmax.f32 %v686, 0.0
      %v723 = vmax.f32 %v689, 0.0
      %vm724 = vcmask 125952
      %725 = vst.msk [vmem:[#allocation2] sm:$0xf] %vm724, 0
      %726 = vst.msk [vmem:[#allocation2 + $0x4] sm:$0xf] %vm724, 0
      %vm727 = vcmask 122880
      %728 = vst.msk [vmem:[#allocation2 + $0x8] sm:$0x1] %vm727, 0
      %s729 = scalar_lea.vmem [#allocation2], 204
      %730 = vst.msk [vmem:[%s729] sm:$0xf] %vm724, 0
      %731 = vst.msk [vmem:[%s729 + $0x4] sm:$0xf] %vm724, 0
      %732 = vst.msk [vmem:[%s729 + $0x8] sm:$0x1] %vm727, 0
      %vm733 = vcmask 122880
      %vm734 = vsmask.f32 256
      %vm735 = vmand %vm733, %vm734
      %v736 = vld [vmem:[#allocation2] sm:$0x1]
      %v737 = vsel %vm735, 0, %v736
      %738 = vst [vmem:[#allocation2] sm:$0x1] %v737
      %v739 = vld [vmem:[#allocation2 + $0xc] sm:$0x1]
      %v740 = vsel %vm735, 0, %v739
      %741 = vst [vmem:[#allocation2 + $0xc] sm:$0x1] %v740
      %v742 = vld [vmem:[#allocation2 + $0x18] sm:$0x1]
      %v743 = vsel %vm735, 0, %v742
      %744 = vst [vmem:[#allocation2 + $0x18] sm:$0x1] %v743
      %v745 = vld [vmem:[#allocation2 + $0x24] sm:$0x1]
      %v746 = vsel %vm735, 0, %v745
      %747 = vst [vmem:[#allocation2 + $0x24] sm:$0x1] %v746
      %v748 = vld [vmem:[#allocation2 + $0x30] sm:$0x1]
      %v749 = vsel %vm735, 0, %v748
      %750 = vst [vmem:[#allocation2 + $0x30] sm:$0x1] %v749
      %v751 = vld [vmem:[#allocation2 + $0x3c] sm:$0x1]
      %v752 = vsel %vm735, 0, %v751
      %753 = vst [vmem:[#allocation2 + $0x3c] sm:$0x1] %v752
      %v754 = vld [vmem:[#allocation2 + $0x48] sm:$0x1]
      %v755 = vsel %vm735, 0, %v754
      %756 = vst [vmem:[#allocation2 + $0x48] sm:$0x1] %v755
      %v757 = vld [vmem:[#allocation2 + $0x54] sm:$0x1]
      %v758 = vsel %vm735, 0, %v757
      %759 = vst [vmem:[#allocation2 + $0x54] sm:$0x1] %v758
      %v760 = vld [vmem:[#allocation2 + $0x60] sm:$0x1]
      %v761 = vsel %vm735, 0, %v760
      %762 = vst [vmem:[#allocation2 + $0x60] sm:$0x1] %v761
      %v763 = vld [vmem:[#allocation2 + $0x6c] sm:$0x1]
      %v764 = vsel %vm735, 0, %v763
      %765 = vst [vmem:[#allocation2 + $0x6c] sm:$0x1] %v764
      %v766 = vld [vmem:[#allocation2 + $0x78] sm:$0x1]
      %v767 = vsel %vm735, 0, %v766
      %768 = vst [vmem:[#allocation2 + $0x78] sm:$0x1] %v767
      %v769 = vld [vmem:[#allocation2 + $0x84] sm:$0x1]
      %v770 = vsel %vm735, 0, %v769
      %771 = vst [vmem:[#allocation2 + $0x84] sm:$0x1] %v770
      %v772 = vld [vmem:[#allocation2 + $0x90] sm:$0x1]
      %v773 = vsel %vm735, 0, %v772
      %774 = vst [vmem:[#allocation2 + $0x90] sm:$0x1] %v773
      %v775 = vld [vmem:[#allocation2 + $0x9c] sm:$0x1]
      %v776 = vsel %vm735, 0, %v775
      %777 = vst [vmem:[#allocation2 + $0x9c] sm:$0x1] %v776
      %v778 = vld [vmem:[#allocation2 + $0xa8] sm:$0x1]
      %v779 = vsel %vm735, 0, %v778
      %780 = vst [vmem:[#allocation2 + $0xa8] sm:$0x1] %v779
      %v781 = vld [vmem:[#allocation2 + $0xb4] sm:$0x1]
      %v782 = vsel %vm735, 0, %v781
      %783 = vst [vmem:[#allocation2 + $0xb4] sm:$0x1] %v782
      %v784 = vld [vmem:[#allocation2 + $0xc0] sm:$0x1]
      %v785 = vsel %vm735, 0, %v784
      %786 = vst [vmem:[#allocation2 + $0xc0] sm:$0x1] %v785
      %v787 = vld [vmem:[#allocation2 + $0xcc] sm:$0x1]
      %v788 = vsel %vm735, 0, %v787
      %789 = vst [vmem:[#allocation2 + $0xcc] sm:$0x1] %v788
      %vm790 = vsmask.f32 7938
      %vm791 = vmand %vm733, %vm790
      %v792 = vld [vmem:[#allocation2 + $0x8] sm:$0x1]
      %v793 = vsel %vm791, 0, %v792
      %794 = vst [vmem:[#allocation2 + $0x8] sm:$0x1] %v793
      %v795 = vld [vmem:[#allocation2 + $0x14] sm:$0x1]
      %v796 = vsel %vm791, 0, %v795
      %797 = vst [vmem:[#allocation2 + $0x14] sm:$0x1] %v796
      %v798 = vld [vmem:[#allocation2 + $0x20] sm:$0x1]
      %v799 = vsel %vm791, 0, %v798
      %800 = vst [vmem:[#allocation2 + $0x20] sm:$0x1] %v799
      %v801 = vld [vmem:[#allocation2 + $0x2c] sm:$0x1]
      %v802 = vsel %vm791, 0, %v801
      %803 = vst [vmem:[#allocation2 + $0x2c] sm:$0x1] %v802
      %v804 = vld [vmem:[#allocation2 + $0x38] sm:$0x1]
      %v805 = vsel %vm791, 0, %v804
      %806 = vst [vmem:[#allocation2 + $0x38] sm:$0x1] %v805
      %v807 = vld [vmem:[#allocation2 + $0x44] sm:$0x1]
      %v808 = vsel %vm791, 0, %v807
      %809 = vst [vmem:[#allocation2 + $0x44] sm:$0x1] %v808
      %v810 = vld [vmem:[#allocation2 + $0x50] sm:$0x1]
      %v811 = vsel %vm791, 0, %v810
      %812 = vst [vmem:[#allocation2 + $0x50] sm:$0x1] %v811
      %v813 = vld [vmem:[#allocation2 + $0x5c] sm:$0x1]
      %v814 = vsel %vm791, 0, %v813
      %815 = vst [vmem:[#allocation2 + $0x5c] sm:$0x1] %v814
      %v816 = vld [vmem:[#allocation2 + $0x68] sm:$0x1]
      %v817 = vsel %vm791, 0, %v816
      %818 = vst [vmem:[#allocation2 + $0x68] sm:$0x1] %v817
      %v819 = vld [vmem:[#allocation2 + $0x74] sm:$0x1]
      %v820 = vsel %vm791, 0, %v819
      %821 = vst [vmem:[#allocation2 + $0x74] sm:$0x1] %v820
      %v822 = vld [vmem:[#allocation2 + $0x80] sm:$0x1]
      %v823 = vsel %vm791, 0, %v822
      %824 = vst [vmem:[#allocation2 + $0x80] sm:$0x1] %v823
      %v825 = vld [vmem:[#allocation2 + $0x8c] sm:$0x1]
      %v826 = vsel %vm791, 0, %v825
      %827 = vst [vmem:[#allocation2 + $0x8c] sm:$0x1] %v826
      %v828 = vld [vmem:[#allocation2 + $0x98] sm:$0x1]
      %v829 = vsel %vm791, 0, %v828
      %830 = vst [vmem:[#allocation2 + $0x98] sm:$0x1] %v829
      %v831 = vld [vmem:[#allocation2 + $0xa4] sm:$0x1]
      %v832 = vsel %vm791, 0, %v831
      %833 = vst [vmem:[#allocation2 + $0xa4] sm:$0x1] %v832
      %v834 = vld [vmem:[#allocation2 + $0xb0] sm:$0x1]
      %v835 = vsel %vm791, 0, %v834
      %836 = vst [vmem:[#allocation2 + $0xb0] sm:$0x1] %v835
      %v837 = vld [vmem:[#allocation2 + $0xbc] sm:$0x1]
      %v838 = vsel %vm791, 0, %v837
      %839 = vst [vmem:[#allocation2 + $0xbc] sm:$0x1] %v838
      %v840 = vld [vmem:[#allocation2 + $0xc8] sm:$0x1]
      %v841 = vsel %vm791, 0, %v840
      %842 = vst [vmem:[#allocation2 + $0xc8] sm:$0x1] %v841
      %v843 = vld [vmem:[#allocation2 + $0xd4] sm:$0x1]
      %v844 = vsel %vm791, 0, %v843
      %845 = vst [vmem:[#allocation2 + $0xd4] sm:$0x1] %v844
      %v846 = vpack.c.bf16 %v693, %v692
      %v847 = vpack.c.bf16 %v695, %v694
      %v848 = vpack.c.bf16 %v697, %v696
      %v849 = vpack.c.bf16 %v699, %v698
      %v850 = vpack.c.bf16 %v701, %v700
      %v851 = vpack.c.bf16 %v703, %v702
      %v852 = vpack.c.bf16 %v705, %v704
      %v853 = vpack.c.bf16 %v707, %v706
      %v854 = vpack.c.bf16 %v709, %v708
      %v855 = vpack.c.bf16 %v711, %v710
      %v856 = vpack.c.bf16 %v713, %v712
      %v857 = vpack.c.bf16 %v715, %v714
      %v858 = vpack.c.bf16 %v717, %v716
      %v859 = vpack.c.bf16 %v719, %v718
      %v860 = vpack.c.bf16 %v721, %v720
      %v861 = vpack.c.bf16 %v723, %v722
      %v878 = vunpack.c.l.b16 %v846
      %v879 = vunpack.c.h.b16 %v846
      %v880 = vunpack.c.l.b16 %v847
      %v881 = vunpack.c.h.b16 %v847
      %v882 = vunpack.c.l.b16 %v848
      %v883 = vunpack.c.h.b16 %v848
      %v884 = vunpack.c.l.b16 %v849
      %v885 = vunpack.c.h.b16 %v849
      %v886 = vunpack.c.l.b16 %v850
      %v887 = vunpack.c.h.b16 %v850
      %v888 = vunpack.c.l.b16 %v851
      %v889 = vunpack.c.h.b16 %v851
      %v890 = vunpack.c.l.b16 %v852
      %v891 = vunpack.c.h.b16 %v852
      %v892 = vunpack.c.l.b16 %v853
      %v893 = vunpack.c.h.b16 %v853
      %v894 = vunpack.c.l.b16 %v854
      %v895 = vunpack.c.h.b16 %v854
      %v896 = vunpack.c.l.b16 %v855
      %v897 = vunpack.c.h.b16 %v855
      %v898 = vunpack.c.l.b16 %v856
      %v899 = vunpack.c.h.b16 %v856
      %v900 = vunpack.c.l.b16 %v857
      %v901 = vunpack.c.h.b16 %v857
      %v902 = vunpack.c.l.b16 %v858
      %v903 = vunpack.c.h.b16 %v858
      %v904 = vunpack.c.l.b16 %v859
      %v905 = vunpack.c.h.b16 %v859
      %v906 = vunpack.c.l.b16 %v860
      %v907 = vunpack.c.h.b16 %v860
      %v908 = vunpack.c.l.b16 %v861
      %v909 = vunpack.c.h.b16 %v861
      %v910 = vpack.c.b16 %v878, %v878
      %v911 = vpack.c.b16 %v879, %v879
      %v912 = vpack.c.b16 %v880, %v880
      %v913 = vpack.c.b16 %v881, %v881
      %v914 = vpack.c.b16 %v882, %v882
      %v915 = vpack.c.b16 %v883, %v883
      %v916 = vpack.c.b16 %v884, %v884
      %v917 = vpack.c.b16 %v885, %v885
      %v918 = vpack.c.b16 %v886, %v886
      %v919 = vpack.c.b16 %v887, %v887
      %v920 = vpack.c.b16 %v888, %v888
      %v921 = vpack.c.b16 %v889, %v889
      %v922 = vpack.c.b16 %v890, %v890
      %v923 = vpack.c.b16 %v891, %v891
      %v924 = vpack.c.b16 %v892, %v892
      %v925 = vpack.c.b16 %v893, %v893
      %v926 = vpack.c.b16 %v894, %v894
      %v927 = vpack.c.b16 %v895, %v895
      %v928 = vpack.c.b16 %v896, %v896
      %v929 = vpack.c.b16 %v897, %v897
      %v930 = vpack.c.b16 %v898, %v898
      %v931 = vpack.c.b16 %v899, %v899
      %v932 = vpack.c.b16 %v900, %v900
      %v933 = vpack.c.b16 %v901, %v901
      %v934 = vpack.c.b16 %v902, %v902
      %v935 = vpack.c.b16 %v903, %v903
      %v936 = vpack.c.b16 %v904, %v904
      %v937 = vpack.c.b16 %v905, %v905
      %v938 = vpack.c.b16 %v906, %v906
      %v939 = vpack.c.b16 %v907, %v907
      %v940 = vpack.c.b16 %v908, %v908
      %v941 = vpack.c.b16 %v909, %v909
      %vm942 = vsmask.f32 4368
      %vm943 = vmor %vm734, %vm942
      %v945 = vshrl.u32 %v910, 16
      %v947 = vrot.slane %v945, 7
      %v948 = vshll.u32 %v910, 16
      %v950 = vor.u32 %v947, %v948
      %v951 = vrot.slane %v947, 4
      %v953 = vshrl.u32 %v911, 16
      %v955 = vrot.slane %v953, 7
      %v956 = vshll.u32 %v911, 16
      %v958 = vor.u32 %v955, %v956
      %v959 = vsel %vm943, %v951, %v958
      %v960 = vrot.slane %v955, 4
      %v962 = vshrl.u32 %v912, 16
      %v964 = vrot.slane %v962, 7
      %v965 = vshll.u32 %v912, 16
      %v967 = vor.u32 %v964, %v965
      %v968 = vrot.slane %v964, 4
      %v970 = vshrl.u32 %v913, 16
      %v972 = vrot.slane %v970, 7
      %v973 = vshll.u32 %v913, 16
      %v975 = vor.u32 %v972, %v973
      %v976 = vsel %vm943, %v968, %v975
      %v977 = vrot.slane %v972, 4
      %v979 = vshrl.u32 %v914, 16
      %v981 = vrot.slane %v979, 7
      %v982 = vshll.u32 %v914, 16
      %v984 = vor.u32 %v981, %v982
      %v985 = vrot.slane %v981, 4
      %v987 = vshrl.u32 %v915, 16
      %v989 = vrot.slane %v987, 7
      %v990 = vshll.u32 %v915, 16
      %v992 = vor.u32 %v989, %v990
      %v993 = vsel %vm943, %v985, %v992
      %v994 = vrot.slane %v989, 4
      %v996 = vshrl.u32 %v916, 16
      %v998 = vrot.slane %v996, 7
      %v999 = vshll.u32 %v916, 16
      %v1001 = vor.u32 %v998, %v999
      %v1002 = vrot.slane %v998, 4
      %v1004 = vshrl.u32 %v917, 16
      %v1006 = vrot.slane %v1004, 7
      %v1007 = vshll.u32 %v917, 16
      %v1009 = vor.u32 %v1006, %v1007
      %v1010 = vsel %vm943, %v1002, %v1009
      %v1011 = vrot.slane %v1006, 4
      %v1013 = vshrl.u32 %v918, 16
      %v1015 = vrot.slane %v1013, 7
      %v1016 = vshll.u32 %v918, 16
      %v1018 = vor.u32 %v1015, %v1016
      %v1019 = vrot.slane %v1015, 4
      %v1021 = vshrl.u32 %v919, 16
      %v1023 = vrot.slane %v1021, 7
      %v1024 = vshll.u32 %v919, 16
      %v1026 = vor.u32 %v1023, %v1024
      %v1027 = vsel %vm943, %v1019, %v1026
      %v1028 = vrot.slane %v1023, 4
      %v1030 = vshrl.u32 %v920, 16
      %v1032 = vrot.slane %v1030, 7
      %v1033 = vshll.u32 %v920, 16
      %v1035 = vor.u32 %v1032, %v1033
      %v1036 = vrot.slane %v1032, 4
      %v1038 = vshrl.u32 %v921, 16
      %v1040 = vrot.slane %v1038, 7
      %v1041 = vshll.u32 %v921, 16
      %v1043 = vor.u32 %v1040, %v1041
      %v1044 = vsel %vm943, %v1036, %v1043
      %v1045 = vrot.slane %v1040, 4
      %v1047 = vshrl.u32 %v922, 16
      %v1049 = vrot.slane %v1047, 7
      %v1050 = vshll.u32 %v922, 16
      %v1052 = vor.u32 %v1049, %v1050
      %v1053 = vrot.slane %v1049, 4
      %v1055 = vshrl.u32 %v923, 16
      %v1057 = vrot.slane %v1055, 7
      %v1058 = vshll.u32 %v923, 16
      %v1060 = vor.u32 %v1057, %v1058
      %v1061 = vsel %vm943, %v1053, %v1060
      %v1062 = vrot.slane %v1057, 4
      %v1064 = vshrl.u32 %v924, 16
      %v1066 = vrot.slane %v1064, 7
      %v1067 = vshll.u32 %v924, 16
      %v1069 = vor.u32 %v1066, %v1067
      %v1070 = vrot.slane %v1066, 4
      %v1072 = vshrl.u32 %v925, 16
      %v1074 = vrot.slane %v1072, 7
      %v1075 = vshll.u32 %v925, 16
      %v1077 = vor.u32 %v1074, %v1075
      %v1078 = vsel %vm943, %v1070, %v1077
      %v1079 = vrot.slane %v1074, 4
      %v1081 = vshrl.u32 %v926, 16
      %v1083 = vrot.slane %v1081, 7
      %v1084 = vshll.u32 %v926, 16
      %v1086 = vor.u32 %v1083, %v1084
      %v1087 = vrot.slane %v1083, 4
      %v1089 = vshrl.u32 %v927, 16
      %v1091 = vrot.slane %v1089, 7
      %v1092 = vshll.u32 %v927, 16
      %v1094 = vor.u32 %v1091, %v1092
      %v1095 = vsel %vm943, %v1087, %v1094
      %v1096 = vrot.slane %v1091, 4
      %v1098 = vshrl.u32 %v928, 16
      %v1100 = vrot.slane %v1098, 7
      %v1101 = vshll.u32 %v928, 16
      %v1103 = vor.u32 %v1100, %v1101
      %v1104 = vrot.slane %v1100, 4
      %v1106 = vshrl.u32 %v929, 16
      %v1108 = vrot.slane %v1106, 7
      %v1109 = vshll.u32 %v929, 16
      %v1111 = vor.u32 %v1108, %v1109
      %v1112 = vsel %vm943, %v1104, %v1111
      %v1113 = vrot.slane %v1108, 4
      %v1115 = vshrl.u32 %v930, 16
      %v1117 = vrot.slane %v1115, 7
      %v1118 = vshll.u32 %v930, 16
      %v1120 = vor.u32 %v1117, %v1118
      %v1121 = vrot.slane %v1117, 4
      %v1123 = vshrl.u32 %v931, 16
      %v1125 = vrot.slane %v1123, 7
      %v1126 = vshll.u32 %v931, 16
      %v1128 = vor.u32 %v1125, %v1126
      %v1129 = vsel %vm943, %v1121, %v1128
      %v1130 = vrot.slane %v1125, 4
      %v1132 = vshrl.u32 %v932, 16
      %v1134 = vrot.slane %v1132, 7
      %v1135 = vshll.u32 %v932, 16
      %v1137 = vor.u32 %v1134, %v1135
      %v1138 = vrot.slane %v1134, 4
      %v1140 = vshrl.u32 %v933, 16
      %v1142 = vrot.slane %v1140, 7
      %v1143 = vshll.u32 %v933, 16
      %v1145 = vor.u32 %v1142, %v1143
      %v1146 = vsel %vm943, %v1138, %v1145
      %v1147 = vrot.slane %v1142, 4
      %v1149 = vshrl.u32 %v934, 16
      %v1151 = vrot.slane %v1149, 7
      %v1152 = vshll.u32 %v934, 16
      %v1154 = vor.u32 %v1151, %v1152
      %v1155 = vrot.slane %v1151, 4
      %v1157 = vshrl.u32 %v935, 16
      %v1159 = vrot.slane %v1157, 7
      %v1160 = vshll.u32 %v935, 16
      %v1162 = vor.u32 %v1159, %v1160
      %v1163 = vsel %vm943, %v1155, %v1162
      %v1164 = vrot.slane %v1159, 4
      %v1166 = vshrl.u32 %v936, 16
      %v1168 = vrot.slane %v1166, 7
      %v1169 = vshll.u32 %v936, 16
      %v1171 = vor.u32 %v1168, %v1169
      %v1172 = vrot.slane %v1168, 4
      %v1174 = vshrl.u32 %v937, 16
      %v1176 = vrot.slane %v1174, 7
      %v1177 = vshll.u32 %v937, 16
      %v1179 = vor.u32 %v1176, %v1177
      %v1180 = vsel %vm943, %v1172, %v1179
      %v1181 = vrot.slane %v1176, 4
      %v1183 = vshrl.u32 %v938, 16
      %v1185 = vrot.slane %v1183, 7
      %v1186 = vshll.u32 %v938, 16
      %v1188 = vor.u32 %v1185, %v1186
      %v1189 = vrot.slane %v1185, 4
      %v1191 = vshrl.u32 %v939, 16
      %v1193 = vrot.slane %v1191, 7
      %v1194 = vshll.u32 %v939, 16
      %v1196 = vor.u32 %v1193, %v1194
      %v1197 = vsel %vm943, %v1189, %v1196
      %v1198 = vrot.slane %v1193, 4
      %v1200 = vshrl.u32 %v940, 16
      %v1202 = vrot.slane %v1200, 7
      %v1203 = vshll.u32 %v940, 16
      %v1205 = vor.u32 %v1202, %v1203
      %v1206 = vrot.slane %v1202, 4
      %v1208 = vshrl.u32 %v941, 16
      %v1210 = vrot.slane %v1208, 7
      %v1211 = vshll.u32 %v941, 16
      %v1213 = vor.u32 %v1210, %v1211
      %v1214 = vsel %vm943, %v1206, %v1213
      %v1215 = vrot.slane %v1210, 4
      %s1264 = scalar_lea.vmem [#allocation2], 12
      %vm1265 = vcmask 125952
      %vm1266 = vmand %vm1265, %vm790
      %v1267 = vld [vmem:[%s1264] sm:$0xf]
      %v1268 = vsel %vm1266, %v950, %v1267
      %1269 = vst [vmem:[%s1264] sm:$0xf] %v1268
      %1270 = vst.msk [vmem:[%s1264 + $0x4] sm:$0xf] %vm724, %v959
      %v1271 = vld [vmem:[%s1264 + $0x8] sm:$0x1]
      %v1272 = vsel %vm735, %v960, %v1271
      %1273 = vst [vmem:[%s1264 + $0x8] sm:$0x1] %v1272
      %v1274 = vld [vmem:[%s1264 + $0xc] sm:$0xf]
      %v1275 = vsel %vm1266, %v967, %v1274
      %1276 = vst [vmem:[%s1264 + $0xc] sm:$0xf] %v1275
      %1277 = vst.msk [vmem:[%s1264 + $0x10] sm:$0xf] %vm724, %v976
      %v1278 = vld [vmem:[%s1264 + $0x14] sm:$0x1]
      %v1279 = vsel %vm735, %v977, %v1278
      %1280 = vst [vmem:[%s1264 + $0x14] sm:$0x1] %v1279
      %v1281 = vld [vmem:[%s1264 + $0x18] sm:$0xf]
      %v1282 = vsel %vm1266, %v984, %v1281
      %1283 = vst [vmem:[%s1264 + $0x18] sm:$0xf] %v1282
      %1284 = vst.msk [vmem:[%s1264 + $0x1c] sm:$0xf] %vm724, %v993
      %v1285 = vld [vmem:[%s1264 + $0x20] sm:$0x1]
      %v1286 = vsel %vm735, %v994, %v1285
      %1287 = vst [vmem:[%s1264 + $0x20] sm:$0x1] %v1286
      %v1288 = vld [vmem:[%s1264 + $0x24] sm:$0xf]
      %v1289 = vsel %vm1266, %v1001, %v1288
      %1290 = vst [vmem:[%s1264 + $0x24] sm:$0xf] %v1289
      %1291 = vst.msk [vmem:[%s1264 + $0x28] sm:$0xf] %vm724, %v1010
      %v1292 = vld [vmem:[%s1264 + $0x2c] sm:$0x1]
      %v1293 = vsel %vm735, %v1011, %v1292
      %1294 = vst [vmem:[%s1264 + $0x2c] sm:$0x1] %v1293
      %v1295 = vld [vmem:[%s1264 + $0x30] sm:$0xf]
      %v1296 = vsel %vm1266, %v1018, %v1295
      %1297 = vst [vmem:[%s1264 + $0x30] sm:$0xf] %v1296
      %1298 = vst.msk [vmem:[%s1264 + $0x34] sm:$0xf] %vm724, %v1027
      %v1299 = vld [vmem:[%s1264 + $0x38] sm:$0x1]
      %v1300 = vsel %vm735, %v1028, %v1299
      %1301 = vst [vmem:[%s1264 + $0x38] sm:$0x1] %v1300
      %v1302 = vld [vmem:[%s1264 + $0x3c] sm:$0xf]
      %v1303 = vsel %vm1266, %v1035, %v1302
      %1304 = vst [vmem:[%s1264 + $0x3c] sm:$0xf] %v1303
      %1305 = vst.msk [vmem:[%s1264 + $0x40] sm:$0xf] %vm724, %v1044
      %v1306 = vld [vmem:[%s1264 + $0x44] sm:$0x1]
      %v1307 = vsel %vm735, %v1045, %v1306
      %1308 = vst [vmem:[%s1264 + $0x44] sm:$0x1] %v1307
      %v1309 = vld [vmem:[%s1264 + $0x48] sm:$0xf]
      %v1310 = vsel %vm1266, %v1052, %v1309
      %1311 = vst [vmem:[%s1264 + $0x48] sm:$0xf] %v1310
      %1312 = vst.msk [vmem:[%s1264 + $0x4c] sm:$0xf] %vm724, %v1061
      %v1313 = vld [vmem:[%s1264 + $0x50] sm:$0x1]
      %v1314 = vsel %vm735, %v1062, %v1313
      %1315 = vst [vmem:[%s1264 + $0x50] sm:$0x1] %v1314
      %v1316 = vld [vmem:[%s1264 + $0x54] sm:$0xf]
      %v1317 = vsel %vm1266, %v1069, %v1316
      %1318 = vst [vmem:[%s1264 + $0x54] sm:$0xf] %v1317
      %1319 = vst.msk [vmem:[%s1264 + $0x58] sm:$0xf] %vm724, %v1078
      %v1320 = vld [vmem:[%s1264 + $0x5c] sm:$0x1]
      %v1321 = vsel %vm735, %v1079, %v1320
      %1322 = vst [vmem:[%s1264 + $0x5c] sm:$0x1] %v1321
      %v1323 = vld [vmem:[%s1264 + $0x60] sm:$0xf]
      %v1324 = vsel %vm1266, %v1086, %v1323
      %1325 = vst [vmem:[%s1264 + $0x60] sm:$0xf] %v1324
      %1326 = vst.msk [vmem:[%s1264 + $0x64] sm:$0xf] %vm724, %v1095
      %v1327 = vld [vmem:[%s1264 + $0x68] sm:$0x1]
      %v1328 = vsel %vm735, %v1096, %v1327
      %1329 = vst [vmem:[%s1264 + $0x68] sm:$0x1] %v1328
      %v1330 = vld [vmem:[%s1264 + $0x6c] sm:$0xf]
      %v1331 = vsel %vm1266, %v1103, %v1330
      %1332 = vst [vmem:[%s1264 + $0x6c] sm:$0xf] %v1331
      %1333 = vst.msk [vmem:[%s1264 + $0x70] sm:$0xf] %vm724, %v1112
      %v1334 = vld [vmem:[%s1264 + $0x74] sm:$0x1]
      %v1335 = vsel %vm735, %v1113, %v1334
      %1336 = vst [vmem:[%s1264 + $0x74] sm:$0x1] %v1335
      %v1337 = vld [vmem:[%s1264 + $0x78] sm:$0xf]
      %v1338 = vsel %vm1266, %v1120, %v1337
      %1339 = vst [vmem:[%s1264 + $0x78] sm:$0xf] %v1338
      %1340 = vst.msk [vmem:[%s1264 + $0x7c] sm:$0xf] %vm724, %v1129
      %v1341 = vld [vmem:[%s1264 + $0x80] sm:$0x1]
      %v1342 = vsel %vm735, %v1130, %v1341
      %1343 = vst [vmem:[%s1264 + $0x80] sm:$0x1] %v1342
      %v1344 = vld [vmem:[%s1264 + $0x84] sm:$0xf]
      %v1345 = vsel %vm1266, %v1137, %v1344
      %1346 = vst [vmem:[%s1264 + $0x84] sm:$0xf] %v1345
      %1347 = vst.msk [vmem:[%s1264 + $0x88] sm:$0xf] %vm724, %v1146
      %v1348 = vld [vmem:[%s1264 + $0x8c] sm:$0x1]
      %v1349 = vsel %vm735, %v1147, %v1348
      %1350 = vst [vmem:[%s1264 + $0x8c] sm:$0x1] %v1349
      %v1351 = vld [vmem:[%s1264 + $0x90] sm:$0xf]
      %v1352 = vsel %vm1266, %v1154, %v1351
      %1353 = vst [vmem:[%s1264 + $0x90] sm:$0xf] %v1352
      %1354 = vst.msk [vmem:[%s1264 + $0x94] sm:$0xf] %vm724, %v1163
      %v1355 = vld [vmem:[%s1264 + $0x98] sm:$0x1]
      %v1356 = vsel %vm735, %v1164, %v1355
      %1357 = vst [vmem:[%s1264 + $0x98] sm:$0x1] %v1356
      %v1358 = vld [vmem:[%s1264 + $0x9c] sm:$0xf]
      %v1359 = vsel %vm1266, %v1171, %v1358
      %1360 = vst [vmem:[%s1264 + $0x9c] sm:$0xf] %v1359
      %1361 = vst.msk [vmem:[%s1264 + $0xa0] sm:$0xf] %vm724, %v1180
      %v1362 = vld [vmem:[%s1264 + $0xa4] sm:$0x1]
      %v1363 = vsel %vm735, %v1181, %v1362
      %1364 = vst [vmem:[%s1264 + $0xa4] sm:$0x1] %v1363
      %v1365 = vld [vmem:[%s1264 + $0xa8] sm:$0xf]
      %v1366 = vsel %vm1266, %v1188, %v1365
      %1367 = vst [vmem:[%s1264 + $0xa8] sm:$0xf] %v1366
      %1368 = vst.msk [vmem:[%s1264 + $0xac] sm:$0xf] %vm724, %v1197
      %v1369 = vld [vmem:[%s1264 + $0xb0] sm:$0x1]
      %v1370 = vsel %vm735, %v1198, %v1369
      %1371 = vst [vmem:[%s1264 + $0xb0] sm:$0x1] %v1370
      %v1372 = vld [vmem:[%s1264 + $0xb4] sm:$0xf]
      %v1373 = vsel %vm1266, %v1205, %v1372
      %1374 = vst [vmem:[%s1264 + $0xb4] sm:$0xf] %v1373
      %1375 = vst.msk [vmem:[%s1264 + $0xb8] sm:$0xf] %vm724, %v1214
      %v1376 = vld [vmem:[%s1264 + $0xbc] sm:$0x1]
      %v1377 = vsel %vm735, %v1215, %v1376
      %1378 = vst [vmem:[%s1264 + $0xbc] sm:$0x1] %v1377
      %v1379 = vld [vmem:[#allocation2] sm:$0xf]
      %v1380 = vld [vmem:[#allocation2 + $0x4] sm:$0xf]
      %v1381 = vld [vmem:[#allocation2 + $0xc] sm:$0xf]
      %v1382 = vld [vmem:[#allocation2 + $0x10] sm:$0xf]
      %v1383 = vld [vmem:[#allocation2 + $0x18] sm:$0xf]
      %v1384 = vld [vmem:[#allocation2 + $0x1c] sm:$0xf]
      %v1385 = vld [vmem:[#allocation2 + $0x24] sm:$0xf]
      %v1386 = vld [vmem:[#allocation2 + $0x28] sm:$0xf]
      %v1387 = vld [vmem:[#allocation2 + $0x30] sm:$0xf]
      %v1388 = vld [vmem:[#allocation2 + $0x34] sm:$0xf]
      %v1389 = vld [vmem:[#allocation2 + $0x3c] sm:$0xf]
      %v1390 = vld [vmem:[#allocation2 + $0x40] sm:$0xf]
      %v1391 = vld [vmem:[#allocation2 + $0x48] sm:$0xf]
      %v1392 = vld [vmem:[#allocation2 + $0x4c] sm:$0xf]
      %v1393 = vld [vmem:[#allocation2 + $0x54] sm:$0xf]
      %v1394 = vld [vmem:[#allocation2 + $0x58] sm:$0xf]
      %v1395 = vld [vmem:[#allocation2 + $0x60] sm:$0xf]
      %v1396 = vld [vmem:[#allocation2 + $0x64] sm:$0xf]
      %v1397 = vld [vmem:[#allocation2 + $0x6c] sm:$0xf]
      %v1398 = vld [vmem:[#allocation2 + $0x70] sm:$0xf]
      %v1399 = vld [vmem:[#allocation2 + $0x78] sm:$0xf]
      %v1400 = vld [vmem:[#allocation2 + $0x7c] sm:$0xf]
      %v1401 = vld [vmem:[#allocation2 + $0x84] sm:$0xf]
      %v1402 = vld [vmem:[#allocation2 + $0x88] sm:$0xf]
      %v1403 = vld [vmem:[#allocation2 + $0x90] sm:$0xf]
      %v1404 = vld [vmem:[#allocation2 + $0x94] sm:$0xf]
      %v1405 = vld [vmem:[#allocation2 + $0x9c] sm:$0xf]
      %v1406 = vld [vmem:[#allocation2 + $0xa0] sm:$0xf]
      %v1407 = vld [vmem:[#allocation2 + $0xa8] sm:$0xf]
      %v1408 = vld [vmem:[#allocation2 + $0xac] sm:$0xf]
      %v1409 = vld [vmem:[#allocation2 + $0xb4] sm:$0xf]
      %v1410 = vld [vmem:[#allocation2 + $0xb8] sm:$0xf]
      %v1411 = vld [vmem:[%s5] sm:$0xf]
      %v1412 = vld [vmem:[%s5 + $0x4] sm:$0xf]
      %v1413 = vld [vmem:[#allocation2 + $0x8] sm:$0x1]
      %v1414 = vld [vmem:[#allocation2 + $0x14] sm:$0x1]
      %v1415 = vld [vmem:[#allocation2 + $0x20] sm:$0x1]
      %v1416 = vld [vmem:[#allocation2 + $0x2c] sm:$0x1]
      %v1417 = vld [vmem:[#allocation2 + $0x38] sm:$0x1]
      %v1418 = vld [vmem:[#allocation2 + $0x44] sm:$0x1]
      %v1419 = vld [vmem:[#allocation2 + $0x50] sm:$0x1]
      %v1420 = vld [vmem:[#allocation2 + $0x5c] sm:$0x1]
      %v1421 = vld [vmem:[#allocation2 + $0x68] sm:$0x1]
      %v1422 = vld [vmem:[#allocation2 + $0x74] sm:$0x1]
      %v1423 = vld [vmem:[#allocation2 + $0x80] sm:$0x1]
      %v1424 = vld [vmem:[#allocation2 + $0x8c] sm:$0x1]
      %v1425 = vld [vmem:[#allocation2 + $0x98] sm:$0x1]
      %v1426 = vld [vmem:[#allocation2 + $0xa4] sm:$0x1]
      %v1427 = vld [vmem:[#allocation2 + $0xb0] sm:$0x1]
      %v1428 = vld [vmem:[#allocation2 + $0xbc] sm:$0x1]
      %vm1429 = vsmask.f32 3328
      %vm1430 = vsmask.f32 7440
      %vm1431 = vmor %vm1429, %vm1430
      %v1433 = vshrl.u32 %v1379, 16
      %v1435 = vrot.slane %v1433, 4
      %v1436 = vshll.u32 %v1379, 16
      %v1438 = vrot.slane %v1436, 5
      %v1439 = vor.u32 %v1435, %v1438
      %v1440 = vrot.slane %v1439, 4
      %v1442 = vshll.u32 %v1380, 16
      %v1444 = vrot.slane %v1442, 5
      %v1445 = vsel %vm1431, %v1440, %v1444
      %v1446 = vshrl.u32 %v1380, 16
      %v1448 = vrot.slane %v1446, 4
      %v1449 = vor.u32 %v1448, %v1444
      %v1450 = vrot.slane %v1449, 4
      %v1452 = vshll.u32 %v1413, 16
      %v1454 = vrot.slane %v1452, 5
      %v1455 = vsel %vm1431, %v1450, %v1454
      %v1457 = vshrl.u32 %v1381, 16
      %v1459 = vrot.slane %v1457, 4
      %v1460 = vshll.u32 %v1381, 16
      %v1462 = vrot.slane %v1460, 5
      %v1463 = vor.u32 %v1459, %v1462
      %v1464 = vrot.slane %v1463, 4
      %v1466 = vshll.u32 %v1382, 16
      %v1468 = vrot.slane %v1466, 5
      %v1469 = vsel %vm1431, %v1464, %v1468
      %v1470 = vshrl.u32 %v1382, 16
      %v1472 = vrot.slane %v1470, 4
      %v1473 = vor.u32 %v1472, %v1468
      %v1474 = vrot.slane %v1473, 4
      %v1476 = vshll.u32 %v1414, 16
      %v1478 = vrot.slane %v1476, 5
      %v1479 = vsel %vm1431, %v1474, %v1478
      %v1481 = vshrl.u32 %v1383, 16
      %v1483 = vrot.slane %v1481, 4
      %v1484 = vshll.u32 %v1383, 16
      %v1486 = vrot.slane %v1484, 5
      %v1487 = vor.u32 %v1483, %v1486
      %v1488 = vrot.slane %v1487, 4
      %v1490 = vshll.u32 %v1384, 16
      %v1492 = vrot.slane %v1490, 5
      %v1493 = vsel %vm1431, %v1488, %v1492
      %v1494 = vshrl.u32 %v1384, 16
      %v1496 = vrot.slane %v1494, 4
      %v1497 = vor.u32 %v1496, %v1492
      %v1498 = vrot.slane %v1497, 4
      %v1500 = vshll.u32 %v1415, 16
      %v1502 = vrot.slane %v1500, 5
      %v1503 = vsel %vm1431, %v1498, %v1502
      %v1505 = vshrl.u32 %v1385, 16
      %v1507 = vrot.slane %v1505, 4
      %v1508 = vshll.u32 %v1385, 16
      %v1510 = vrot.slane %v1508, 5
      %v1511 = vor.u32 %v1507, %v1510
      %v1512 = vrot.slane %v1511, 4
      %v1514 = vshll.u32 %v1386, 16
      %v1516 = vrot.slane %v1514, 5
      %v1517 = vsel %vm1431, %v1512, %v1516
      %v1518 = vshrl.u32 %v1386, 16
      %v1520 = vrot.slane %v1518, 4
      %v1521 = vor.u32 %v1520, %v1516
      %v1522 = vrot.slane %v1521, 4
      %v1524 = vshll.u32 %v1416, 16
      %v1526 = vrot.slane %v1524, 5
      %v1527 = vsel %vm1431, %v1522, %v1526
      %v1529 = vshrl.u32 %v1387, 16
      %v1531 = vrot.slane %v1529, 4
      %v1532 = vshll.u32 %v1387, 16
      %v1534 = vrot.slane %v1532, 5
      %v1535 = vor.u32 %v1531, %v1534
      %v1536 = vrot.slane %v1535, 4
      %v1538 = vshll.u32 %v1388, 16
      %v1540 = vrot.slane %v1538, 5
      %v1541 = vsel %vm1431, %v1536, %v1540
      %v1542 = vshrl.u32 %v1388, 16
      %v1544 = vrot.slane %v1542, 4
      %v1545 = vor.u32 %v1544, %v1540
      %v1546 = vrot.slane %v1545, 4
      %v1548 = vshll.u32 %v1417, 16
      %v1550 = vrot.slane %v1548, 5
      %v1551 = vsel %vm1431, %v1546, %v1550
      %v1553 = vshrl.u32 %v1389, 16
      %v1555 = vrot.slane %v1553, 4
      %v1556 = vshll.u32 %v1389, 16
      %v1558 = vrot.slane %v1556, 5
      %v1559 = vor.u32 %v1555, %v1558
      %v1560 = vrot.slane %v1559, 4
      %v1562 = vshll.u32 %v1390, 16
      %v1564 = vrot.slane %v1562, 5
      %v1565 = vsel %vm1431, %v1560, %v1564
      %v1566 = vshrl.u32 %v1390, 16
      %v1568 = vrot.slane %v1566, 4
      %v1569 = vor.u32 %v1568, %v1564
      %v1570 = vrot.slane %v1569, 4
      %v1572 = vshll.u32 %v1418, 16
      %v1574 = vrot.slane %v1572, 5
      %v1575 = vsel %vm1431, %v1570, %v1574
      %v1577 = vshrl.u32 %v1391, 16
      %v1579 = vrot.slane %v1577, 4
      %v1580 = vshll.u32 %v1391, 16
      %v1582 = vrot.slane %v1580, 5
      %v1583 = vor.u32 %v1579, %v1582
      %v1584 = vrot.slane %v1583, 4
      %v1586 = vshll.u32 %v1392, 16
      %v1588 = vrot.slane %v1586, 5
      %v1589 = vsel %vm1431, %v1584, %v1588
      %v1590 = vshrl.u32 %v1392, 16
      %v1592 = vrot.slane %v1590, 4
      %v1593 = vor.u32 %v1592, %v1588
      %v1594 = vrot.slane %v1593, 4
      %v1596 = vshll.u32 %v1419, 16
      %v1598 = vrot.slane %v1596, 5
      %v1599 = vsel %vm1431, %v1594, %v1598
      %v1601 = vshrl.u32 %v1393, 16
      %v1603 = vrot.slane %v1601, 4
      %v1604 = vshll.u32 %v1393, 16
      %v1606 = vrot.slane %v1604, 5
      %v1607 = vor.u32 %v1603, %v1606
      %v1608 = vrot.slane %v1607, 4
      %v1610 = vshll.u32 %v1394, 16
      %v1612 = vrot.slane %v1610, 5
      %v1613 = vsel %vm1431, %v1608, %v1612
      %v1614 = vshrl.u32 %v1394, 16
      %v1616 = vrot.slane %v1614, 4
      %v1617 = vor.u32 %v1616, %v1612
      %v1618 = vrot.slane %v1617, 4
      %v1620 = vshll.u32 %v1420, 16
      %v1622 = vrot.slane %v1620, 5
      %v1623 = vsel %vm1431, %v1618, %v1622
      %v1625 = vshrl.u32 %v1395, 16
      %v1627 = vrot.slane %v1625, 4
      %v1628 = vshll.u32 %v1395, 16
      %v1630 = vrot.slane %v1628, 5
      %v1631 = vor.u32 %v1627, %v1630
      %v1632 = vrot.slane %v1631, 4
      %v1634 = vshll.u32 %v1396, 16
      %v1636 = vrot.slane %v1634, 5
      %v1637 = vsel %vm1431, %v1632, %v1636
      %v1638 = vshrl.u32 %v1396, 16
      %v1640 = vrot.slane %v1638, 4
      %v1641 = vor.u32 %v1640, %v1636
      %v1642 = vrot.slane %v1641, 4
      %v1644 = vshll.u32 %v1421, 16
      %v1646 = vrot.slane %v1644, 5
      %v1647 = vsel %vm1431, %v1642, %v1646
      %v1649 = vshrl.u32 %v1397, 16
      %v1651 = vrot.slane %v1649, 4
      %v1652 = vshll.u32 %v1397, 16
      %v1654 = vrot.slane %v1652, 5
      %v1655 = vor.u32 %v1651, %v1654
      %v1656 = vrot.slane %v1655, 4
      %v1658 = vshll.u32 %v1398, 16
      %v1660 = vrot.slane %v1658, 5
      %v1661 = vsel %vm1431, %v1656, %v1660
      %v1662 = vshrl.u32 %v1398, 16
      %v1664 = vrot.slane %v1662, 4
      %v1665 = vor.u32 %v1664, %v1660
      %v1666 = vrot.slane %v1665, 4
      %v1668 = vshll.u32 %v1422, 16
      %v1670 = vrot.slane %v1668, 5
      %v1671 = vsel %vm1431, %v1666, %v1670
      %v1673 = vshrl.u32 %v1399, 16
      %v1675 = vrot.slane %v1673, 4
      %v1676 = vshll.u32 %v1399, 16
      %v1678 = vrot.slane %v1676, 5
      %v1679 = vor.u32 %v1675, %v1678
      %v1680 = vrot.slane %v1679, 4
      %v1682 = vshll.u32 %v1400, 16
      %v1684 = vrot.slane %v1682, 5
      %v1685 = vsel %vm1431, %v1680, %v1684
      %v1686 = vshrl.u32 %v1400, 16
      %v1688 = vrot.slane %v1686, 4
      %v1689 = vor.u32 %v1688, %v1684
      %v1690 = vrot.slane %v1689, 4
      %v1692 = vshll.u32 %v1423, 16
      %v1694 = vrot.slane %v1692, 5
      %v1695 = vsel %vm1431, %v1690, %v1694
      %v1697 = vshrl.u32 %v1401, 16
      %v1699 = vrot.slane %v1697, 4
      %v1700 = vshll.u32 %v1401, 16
      %v1702 = vrot.slane %v1700, 5
      %v1703 = vor.u32 %v1699, %v1702
      %v1704 = vrot.slane %v1703, 4
      %v1706 = vshll.u32 %v1402, 16
      %v1708 = vrot.slane %v1706, 5
      %v1709 = vsel %vm1431, %v1704, %v1708
      %v1710 = vshrl.u32 %v1402, 16
      %v1712 = vrot.slane %v1710, 4
      %v1713 = vor.u32 %v1712, %v1708
      %v1714 = vrot.slane %v1713, 4
      %v1716 = vshll.u32 %v1424, 16
      %v1718 = vrot.slane %v1716, 5
      %v1719 = vsel %vm1431, %v1714, %v1718
      %v1721 = vshrl.u32 %v1403, 16
      %v1723 = vrot.slane %v1721, 4
      %v1724 = vshll.u32 %v1403, 16
      %v1726 = vrot.slane %v1724, 5
      %v1727 = vor.u32 %v1723, %v1726
      %v1728 = vrot.slane %v1727, 4
      %v1730 = vshll.u32 %v1404, 16
      %v1732 = vrot.slane %v1730, 5
      %v1733 = vsel %vm1431, %v1728, %v1732
      %v1734 = vshrl.u32 %v1404, 16
      %v1736 = vrot.slane %v1734, 4
      %v1737 = vor.u32 %v1736, %v1732
      %v1738 = vrot.slane %v1737, 4
      %v1740 = vshll.u32 %v1425, 16
      %v1742 = vrot.slane %v1740, 5
      %v1743 = vsel %vm1431, %v1738, %v1742
      %v1745 = vshrl.u32 %v1405, 16
      %v1747 = vrot.slane %v1745, 4
      %v1748 = vshll.u32 %v1405, 16
      %v1750 = vrot.slane %v1748, 5
      %v1751 = vor.u32 %v1747, %v1750
      %v1752 = vrot.slane %v1751, 4
      %v1754 = vshll.u32 %v1406, 16
      %v1756 = vrot.slane %v1754, 5
      %v1757 = vsel %vm1431, %v1752, %v1756
      %v1758 = vshrl.u32 %v1406, 16
      %v1760 = vrot.slane %v1758, 4
      %v1761 = vor.u32 %v1760, %v1756
      %v1762 = vrot.slane %v1761, 4
      %v1764 = vshll.u32 %v1426, 16
      %v1766 = vrot.slane %v1764, 5
      %v1767 = vsel %vm1431, %v1762, %v1766
      %v1769 = vshrl.u32 %v1407, 16
      %v1771 = vrot.slane %v1769, 4
      %v1772 = vshll.u32 %v1407, 16
      %v1774 = vrot.slane %v1772, 5
      %v1775 = vor.u32 %v1771, %v1774
      %v1776 = vrot.slane %v1775, 4
      %v1778 = vshll.u32 %v1408, 16
      %v1780 = vrot.slane %v1778, 5
      %v1781 = vsel %vm1431, %v1776, %v1780
      %v1782 = vshrl.u32 %v1408, 16
      %v1784 = vrot.slane %v1782, 4
      %v1785 = vor.u32 %v1784, %v1780
      %v1786 = vrot.slane %v1785, 4
      %v1788 = vshll.u32 %v1427, 16
      %v1790 = vrot.slane %v1788, 5
      %v1791 = vsel %vm1431, %v1786, %v1790
      %v1793 = vshrl.u32 %v1409, 16
      %v1795 = vrot.slane %v1793, 4
      %v1796 = vshll.u32 %v1409, 16
      %v1798 = vrot.slane %v1796, 5
      %v1799 = vor.u32 %v1795, %v1798
      %v1800 = vrot.slane %v1799, 4
      %v1802 = vshll.u32 %v1410, 16
      %v1804 = vrot.slane %v1802, 5
      %v1805 = vsel %vm1431, %v1800, %v1804
      %v1806 = vshrl.u32 %v1410, 16
      %v1808 = vrot.slane %v1806, 4
      %v1809 = vor.u32 %v1808, %v1804
      %v1810 = vrot.slane %v1809, 4
      %v1812 = vshll.u32 %v1428, 16
      %v1814 = vrot.slane %v1812, 5
      %v1815 = vsel %vm1431, %v1810, %v1814
      %s1816 = scalar_lea.vmem %s5, 8
      %v1817 = vld [vmem:[%s1816] sm:$0xf]
      %v1818 = vld [vmem:[%s1816 + $0x4] sm:$0xf]
      %v1819 = vunpack.c.l.b16 %v1445
      %v1820 = vunpack.c.l.b16 %v1455
      %v1821 = vunpack.c.l.b16 %v1469
      %v1822 = vunpack.c.l.b16 %v1479
      %v1823 = vunpack.c.l.b16 %v1493
      %v1824 = vunpack.c.l.b16 %v1503
      %v1825 = vunpack.c.l.b16 %v1517
      %v1826 = vunpack.c.l.b16 %v1527
      %v1827 = vunpack.c.l.b16 %v1541
      %v1828 = vunpack.c.l.b16 %v1551
      %v1829 = vunpack.c.l.b16 %v1565
      %v1830 = vunpack.c.l.b16 %v1575
      %v1831 = vunpack.c.l.b16 %v1589
      %v1832 = vunpack.c.l.b16 %v1599
      %v1833 = vunpack.c.l.b16 %v1613
      %v1834 = vunpack.c.l.b16 %v1623
      %v1835 = vunpack.c.l.b16 %v1637
      %v1836 = vunpack.c.l.b16 %v1647
      %v1837 = vunpack.c.l.b16 %v1661
      %v1838 = vunpack.c.l.b16 %v1671
      %v1839 = vunpack.c.l.b16 %v1685
      %v1840 = vunpack.c.l.b16 %v1695
      %v1841 = vunpack.c.l.b16 %v1709
      %v1842 = vunpack.c.l.b16 %v1719
      %v1843 = vunpack.c.l.b16 %v1733
      %v1844 = vunpack.c.l.b16 %v1743
      %v1845 = vunpack.c.l.b16 %v1757
      %v1846 = vunpack.c.l.b16 %v1767
      %v1847 = vunpack.c.l.b16 %v1781
      %v1848 = vunpack.c.l.b16 %v1791
      %v1849 = vunpack.c.l.b16 %v1805
      %v1850 = vunpack.c.l.b16 %v1815
      %v1851 = vpack.c.b16 %v1820, %v1819
      %v1852 = vpack.c.b16 %v1822, %v1821
      %v1853 = vpack.c.b16 %v1824, %v1823
      %v1854 = vpack.c.b16 %v1826, %v1825
      %v1855 = vpack.c.b16 %v1828, %v1827
      %v1856 = vpack.c.b16 %v1830, %v1829
      %v1857 = vpack.c.b16 %v1832, %v1831
      %v1858 = vpack.c.b16 %v1834, %v1833
      %v1859 = vpack.c.b16 %v1836, %v1835
      %v1860 = vpack.c.b16 %v1838, %v1837
      %v1861 = vpack.c.b16 %v1840, %v1839
      %v1862 = vpack.c.b16 %v1842, %v1841
      %v1863 = vpack.c.b16 %v1844, %v1843
      %v1864 = vpack.c.b16 %v1846, %v1845
      %v1865 = vpack.c.b16 %v1848, %v1847
      %v1866 = vpack.c.b16 %v1850, %v1849
      %v1869 = vunpack.c.l.b16 %v1817
      %v1870 = vunpack.c.l.b16 %v1818
      %v1871 = vpack.c.b16 %v1870, %v1869
      %vm1873 = vcmask 130048
      %v1875 = vsel %vm1873, %v1851, 0
      %v1878 = vsel %vm1873, %v1852, 0
      %v1881 = vsel %vm1873, %v1853, 0
      %v1884 = vsel %vm1873, %v1854, 0
      %v1887 = vsel %vm1873, %v1855, 0
      %v1890 = vsel %vm1873, %v1856, 0
      %v1893 = vsel %vm1873, %v1857, 0
      %v1896 = vsel %vm1873, %v1858, 0
      %v1899 = vsel %vm1873, %v1859, 0
      %v1902 = vsel %vm1873, %v1860, 0
      %v1905 = vsel %vm1873, %v1861, 0
      %v1908 = vsel %vm1873, %v1862, 0
      %v1911 = vsel %vm1873, %v1863, 0
      %v1914 = vsel %vm1873, %v1864, 0
      %v1917 = vsel %vm1873, %v1865, 0
      %v1920 = vsel %vm1873, %v1866, 0
      %1922 = vmatprep.subr.bf16.mxu0 0
      %1923 = vmatpush1.bf16.msra.mxu0 %v1871
      %1924 = vmatprep.subr.bf16.mxu0 0
      %1925 = vmatpush1.bf16.msra.mxu0 0
      %1926 = vmatprep.subr.bf16.mxu0 0
      %1927 = vmatpush1.bf16.msra.mxu0 0
      %1928 = vmatprep.subr.bf16.mxu0 0
      %1929 = vmatpush1.bf16.msra.mxu0 0
      %1930 = vmatprep.subr.bf16.mxu0 0
      %1931 = vmatpush1.bf16.msra.mxu0 0
      %1932 = vmatprep.subr.bf16.mxu0 0
      %1933 = vmatpush1.bf16.msra.mxu0 0
      %1934 = vmatprep.subr.bf16.mxu0 0
      %1935 = vmatpush1.bf16.msra.mxu0 0
      %1936 = vmatprep.subr.bf16.mxu0 0
      %1937 = vmatpush1.bf16.msra.mxu0 0
      %1938 = vmatprep.subr.bf16.mxu0 0
      %1939 = vmatpush1.bf16.msra.mxu0 0
      %1940 = vmatprep.subr.bf16.mxu0 0
      %1941 = vmatpush1.bf16.msra.mxu0 0
      %1942 = vmatprep.subr.bf16.mxu0 0
      %1943 = vmatpush1.bf16.msra.mxu0 0
      %1944 = vmatprep.subr.bf16.mxu0 0
      %1945 = vmatpush1.bf16.msra.mxu0 0
      %1946 = vmatprep.subr.bf16.mxu0 0
      %1947 = vmatpush1.bf16.msra.mxu0 0
      %1948 = vmatprep.subr.bf16.mxu0 0
      %1949 = vmatpush1.bf16.msra.mxu0 0
      %1950 = vmatprep.subr.bf16.mxu0 0
      %1951 = vmatpush1.bf16.msra.mxu0 0
      %1952 = vmatprep.subr.bf16.mxu0 0
      %1953 = vmatpush1.bf16.msra.mxu0 0
      %1954 = vmatprep.mubr.bf16.mxu0 0
      %1955 = vmatmul.mubr.bf16.gmra.mrb[0].mxu0 %v1875
      %v1956 = vpop.f32.mrb[0].mxu0
      %v1957 = vadd.f32 0.0, %v1956
      %v1958 = vpop.f32.mrb[0].mxu0
      %v1959 = vpop.f32.mrb[0].mxu0
      %v1960 = vadd.f32 0.0, %v1959
      %v1961 = vpop.f32.mrb[0].mxu0
      %1962 = vmatprep.mubr.bf16.mxu0 0
      %1963 = vmatmul.mubr.bf16.gmra.mrb[0].mxu0 %v1878
      %v1964 = vpop.f32.mrb[0].mxu0
      %v1965 = vadd.f32 0.0, %v1964
      %v1966 = vpop.f32.mrb[0].mxu0
      %v1967 = vpop.f32.mrb[0].mxu0
      %v1968 = vadd.f32 0.0, %v1967
      %v1969 = vpop.f32.mrb[0].mxu0
      %1970 = vmatprep.mubr.bf16.mxu0 0
      %1971 = vmatmul.mubr.bf16.gmra.mrb[0].mxu0 %v1881
      %v1972 = vpop.f32.mrb[0].mxu0
      %v1973 = vadd.f32 0.0, %v1972
      %v1974 = vpop.f32.mrb[0].mxu0
      %v1975 = vpop.f32.mrb[0].mxu0
      %v1976 = vadd.f32 0.0, %v1975
      %v1977 = vpop.f32.mrb[0].mxu0
      %1978 = vmatprep.mubr.bf16.mxu0 0
      %1979 = vmatmul.mubr.bf16.gmra.mrb[0].mxu0 %v1884
      %v1980 = vpop.f32.mrb[0].mxu0
      %v1981 = vadd.f32 0.0, %v1980
      %v1982 = vpop.f32.mrb[0].mxu0
      %v1983 = vpop.f32.mrb[0].mxu0
      %v1984 = vadd.f32 0.0, %v1983
      %v1985 = vpop.f32.mrb[0].mxu0
      %1986 = vmatprep.mubr.bf16.mxu0 0
      %1987 = vmatmul.mubr.bf16.gmra.mrb[0].mxu0 %v1887
      %v1988 = vpop.f32.mrb[0].mxu0
      %v1989 = vadd.f32 0.0, %v1988
      %v1990 = vpop.f32.mrb[0].mxu0
      %v1991 = vpop.f32.mrb[0].mxu0
      %v1992 = vadd.f32 0.0, %v1991
      %v1993 = vpop.f32.mrb[0].mxu0
      %1994 = vmatprep.mubr.bf16.mxu0 0
      %1995 = vmatmul.mubr.bf16.gmra.mrb[0].mxu0 %v1890
      %v1996 = vpop.f32.mrb[0].mxu0
      %v1997 = vadd.f32 0.0, %v1996
      %v1998 = vpop.f32.mrb[0].mxu0
      %v1999 = vpop.f32.mrb[0].mxu0
      %v2000 = vadd.f32 0.0, %v1999
      %v2001 = vpop.f32.mrb[0].mxu0
      %2002 = vmatprep.mubr.bf16.mxu0 0
      %2003 = vmatmul.mubr.bf16.gmra.mrb[0].mxu0 %v1893
      %v2004 = vpop.f32.mrb[0].mxu0
      %v2005 = vadd.f32 0.0, %v2004
      %v2006 = vpop.f32.mrb[0].mxu0
      %v2007 = vpop.f32.mrb[0].mxu0
      %v2008 = vadd.f32 0.0, %v2007
      %v2009 = vpop.f32.mrb[0].mxu0
      %2010 = vmatprep.mubr.bf16.mxu0 0
      %2011 = vmatmul.mubr.bf16.gmra.mrb[0].mxu0 %v1896
      %v2012 = vpop.f32.mrb[0].mxu0
      %v2013 = vadd.f32 0.0, %v2012
      %v2014 = vpop.f32.mrb[0].mxu0
      %v2015 = vpop.f32.mrb[0].mxu0
      %v2016 = vadd.f32 0.0, %v2015
      %v2017 = vpop.f32.mrb[0].mxu0
      %2018 = vmatprep.mubr.bf16.mxu0 0
      %2019 = vmatmul.mubr.bf16.gmra.mrb[0].mxu0 %v1899
      %v2020 = vpop.f32.mrb[0].mxu0
      %v2021 = vadd.f32 0.0, %v2020
      %v2022 = vpop.f32.mrb[0].mxu0
      %v2023 = vpop.f32.mrb[0].mxu0
      %v2024 = vadd.f32 0.0, %v2023
      %v2025 = vpop.f32.mrb[0].mxu0
      %2026 = vmatprep.mubr.bf16.mxu0 0
      %2027 = vmatmul.mubr.bf16.gmra.mrb[0].mxu0 %v1902
      %v2028 = vpop.f32.mrb[0].mxu0
      %v2029 = vadd.f32 0.0, %v2028
      %v2030 = vpop.f32.mrb[0].mxu0
      %v2031 = vpop.f32.mrb[0].mxu0
      %v2032 = vadd.f32 0.0, %v2031
      %v2033 = vpop.f32.mrb[0].mxu0
      %2034 = vmatprep.mubr.bf16.mxu0 0
      %2035 = vmatmul.mubr.bf16.gmra.mrb[0].mxu0 %v1905
      %v2036 = vpop.f32.mrb[0].mxu0
      %v2037 = vadd.f32 0.0, %v2036
      %v2038 = vpop.f32.mrb[0].mxu0
      %v2039 = vpop.f32.mrb[0].mxu0
      %v2040 = vadd.f32 0.0, %v2039
      %v2041 = vpop.f32.mrb[0].mxu0
      %2042 = vmatprep.mubr.bf16.mxu0 0
      %2043 = vmatmul.mubr.bf16.gmra.mrb[0].mxu0 %v1908
      %v2044 = vpop.f32.mrb[0].mxu0
      %v2045 = vadd.f32 0.0, %v2044
      %v2046 = vpop.f32.mrb[0].mxu0
      %v2047 = vpop.f32.mrb[0].mxu0
      %v2048 = vadd.f32 0.0, %v2047
      %v2049 = vpop.f32.mrb[0].mxu0
      %2050 = vmatprep.mubr.bf16.mxu0 0
      %2051 = vmatmul.mubr.bf16.gmra.mrb[0].mxu0 %v1911
      %v2052 = vpop.f32.mrb[0].mxu0
      %v2053 = vadd.f32 0.0, %v2052
      %v2054 = vpop.f32.mrb[0].mxu0
      %v2055 = vpop.f32.mrb[0].mxu0
      %v2056 = vadd.f32 0.0, %v2055
      %v2057 = vpop.f32.mrb[0].mxu0
      %2058 = vmatprep.mubr.bf16.mxu0 0
      %2059 = vmatmul.mubr.bf16.gmra.mrb[0].mxu0 %v1914
      %v2060 = vpop.f32.mrb[0].mxu0
      %v2061 = vadd.f32 0.0, %v2060
      %v2062 = vpop.f32.mrb[0].mxu0
      %v2063 = vpop.f32.mrb[0].mxu0
      %v2064 = vadd.f32 0.0, %v2063
      %v2065 = vpop.f32.mrb[0].mxu0
      %2066 = vmatprep.mubr.bf16.mxu0 0
      %2067 = vmatmul.mubr.bf16.gmra.mrb[0].mxu0 %v1917
      %v2068 = vpop.f32.mrb[0].mxu0
      %v2069 = vadd.f32 0.0, %v2068
      %v2070 = vpop.f32.mrb[0].mxu0
      %v2071 = vpop.f32.mrb[0].mxu0
      %v2072 = vadd.f32 0.0, %v2071
      %v2073 = vpop.f32.mrb[0].mxu0
      %2074 = vmatprep.mubr.bf16.mxu0 0
      %2075 = vmatmul.mubr.bf16.gmra.mrb[0].mxu0 %v1920
      %v2076 = vpop.f32.mrb[0].mxu0
      %v2077 = vadd.f32 0.0, %v2076
      %v2078 = vpop.f32.mrb[0].mxu0
      %v2079 = vpop.f32.mrb[0].mxu0
      %v2080 = vadd.f32 0.0, %v2079
      %v2081 = vpop.f32.mrb[0].mxu0
      %2082 = vdwg.mxu0
      %v2115 = vunpack.c.l.b16 %v1379
      %v2116 = vunpack.c.l.b16 %v1380
      %v2117 = vunpack.c.l.b16 %v1381
      %v2118 = vunpack.c.l.b16 %v1382
      %v2119 = vunpack.c.l.b16 %v1383
      %v2120 = vunpack.c.l.b16 %v1384
      %v2121 = vunpack.c.l.b16 %v1385
      %v2122 = vunpack.c.l.b16 %v1386
      %v2123 = vunpack.c.l.b16 %v1387
      %v2124 = vunpack.c.l.b16 %v1388
      %v2125 = vunpack.c.l.b16 %v1389
      %v2126 = vunpack.c.l.b16 %v1390
      %v2127 = vunpack.c.l.b16 %v1391
      %v2128 = vunpack.c.l.b16 %v1392
      %v2129 = vunpack.c.l.b16 %v1393
      %v2130 = vunpack.c.l.b16 %v1394
      %v2131 = vunpack.c.l.b16 %v1395
      %v2132 = vunpack.c.l.b16 %v1396
      %v2133 = vunpack.c.l.b16 %v1397
      %v2134 = vunpack.c.l.b16 %v1398
      %v2135 = vunpack.c.l.b16 %v1399
      %v2136 = vunpack.c.l.b16 %v1400
      %v2137 = vunpack.c.l.b16 %v1401
      %v2138 = vunpack.c.l.b16 %v1402
      %v2139 = vunpack.c.l.b16 %v1403
      %v2140 = vunpack.c.l.b16 %v1404
      %v2141 = vunpack.c.l.b16 %v1405
      %v2142 = vunpack.c.l.b16 %v1406
      %v2143 = vunpack.c.l.b16 %v1407
      %v2144 = vunpack.c.l.b16 %v1408
      %v2145 = vunpack.c.l.b16 %v1409
      %v2146 = vunpack.c.l.b16 %v1410
      %v2147 = vpack.c.b16 %v2116, %v2115
      %v2148 = vpack.c.b16 %v2118, %v2117
      %v2149 = vpack.c.b16 %v2120, %v2119
      %v2150 = vpack.c.b16 %v2122, %v2121
      %v2151 = vpack.c.b16 %v2124, %v2123
      %v2152 = vpack.c.b16 %v2126, %v2125
      %v2153 = vpack.c.b16 %v2128, %v2127
      %v2154 = vpack.c.b16 %v2130, %v2129
      %v2155 = vpack.c.b16 %v2132, %v2131
      %v2156 = vpack.c.b16 %v2134, %v2133
      %v2157 = vpack.c.b16 %v2136, %v2135
      %v2158 = vpack.c.b16 %v2138, %v2137
      %v2159 = vpack.c.b16 %v2140, %v2139
      %v2160 = vpack.c.b16 %v2142, %v2141
      %v2161 = vpack.c.b16 %v2144, %v2143
      %v2162 = vpack.c.b16 %v2146, %v2145
      %v2165 = vunpack.c.l.b16 %v1411
      %v2166 = vunpack.c.l.b16 %v1412
      %v2167 = vpack.c.b16 %v2166, %v2165
      %v2170 = vsel %vm1873, %v2147, 0
      %v2173 = vsel %vm1873, %v2148, 0
      %v2176 = vsel %vm1873, %v2149, 0
      %v2179 = vsel %vm1873, %v2150, 0
      %v2182 = vsel %vm1873, %v2151, 0
      %v2185 = vsel %vm1873, %v2152, 0
      %v2188 = vsel %vm1873, %v2153, 0
      %v2191 = vsel %vm1873, %v2154, 0
      %v2194 = vsel %vm1873, %v2155, 0
      %v2197 = vsel %vm1873, %v2156, 0
      %v2200 = vsel %vm1873, %v2157, 0
      %v2203 = vsel %vm1873, %v2158, 0
      %v2206 = vsel %vm1873, %v2159, 0
      %v2209 = vsel %vm1873, %v2160, 0
      %v2212 = vsel %vm1873, %v2161, 0
      %v2215 = vsel %vm1873, %v2162, 0
      %2217 = vmatprep.subr.bf16.mxu0 0
      %2218 = vmatpush1.bf16.msra.mxu0 %v2167
      %2219 = vmatprep.subr.bf16.mxu0 0
      %2220 = vmatpush1.bf16.msra.mxu0 0
      %2221 = vmatprep.subr.bf16.mxu0 0
      %2222 = vmatpush1.bf16.msra.mxu0 0
      %2223 = vmatprep.subr.bf16.mxu0 0
      %2224 = vmatpush1.bf16.msra.mxu0 0
      %2225 = vmatprep.subr.bf16.mxu0 0
      %2226 = vmatpush1.bf16.msra.mxu0 0
      %2227 = vmatprep.subr.bf16.mxu0 0
      %2228 = vmatpush1.bf16.msra.mxu0 0
      %2229 = vmatprep.subr.bf16.mxu0 0
      %2230 = vmatpush1.bf16.msra.mxu0 0
      %2231 = vmatprep.subr.bf16.mxu0 0
      %2232 = vmatpush1.bf16.msra.mxu0 0
      %2233 = vmatprep.subr.bf16.mxu0 0
      %2234 = vmatpush1.bf16.msra.mxu0 0
      %2235 = vmatprep.subr.bf16.mxu0 0
      %2236 = vmatpush1.bf16.msra.mxu0 0
      %2237 = vmatprep.subr.bf16.mxu0 0
      %2238 = vmatpush1.bf16.msra.mxu0 0
      %2239 = vmatprep.subr.bf16.mxu0 0
      %2240 = vmatpush1.bf16.msra.mxu0 0
      %2241 = vmatprep.subr.bf16.mxu0 0
      %2242 = vmatpush1.bf16.msra.mxu0 0
      %2243 = vmatprep.subr.bf16.mxu0 0
      %2244 = vmatpush1.bf16.msra.mxu0 0
      %2245 = vmatprep.subr.bf16.mxu0 0
      %2246 = vmatpush1.bf16.msra.mxu0 0
      %2247 = vmatprep.subr.bf16.mxu0 0
      %2248 = vmatpush1.bf16.msra.mxu0 0
      %2249 = vmatprep.mubr.bf16.mxu0 0
      %2250 = vmatmul.mubr.bf16.gmra.mrb[0].mxu0 %v2170
      %v2251 = vpop.f32.mrb[0].mxu0
      %v2252 = vadd.f32 %v1957, %v2251
      %v2253 = vpop.f32.mrb[0].mxu0
      %v2254 = vpop.f32.mrb[0].mxu0
      %v2255 = vadd.f32 %v1960, %v2254
      %v2256 = vpop.f32.mrb[0].mxu0
      %2257 = vmatprep.mubr.bf16.mxu0 0
      %2258 = vmatmul.mubr.bf16.gmra.mrb[0].mxu0 %v2173
      %v2259 = vpop.f32.mrb[0].mxu0
      %v2260 = vadd.f32 %v1965, %v2259
      %v2261 = vpop.f32.mrb[0].mxu0
      %v2262 = vpop.f32.mrb[0].mxu0
      %v2263 = vadd.f32 %v1968, %v2262
      %v2264 = vpop.f32.mrb[0].mxu0
      %2265 = vmatprep.mubr.bf16.mxu0 0
      %2266 = vmatmul.mubr.bf16.gmra.mrb[0].mxu0 %v2176
      %v2267 = vpop.f32.mrb[0].mxu0
      %v2268 = vadd.f32 %v1973, %v2267
      %v2269 = vpop.f32.mrb[0].mxu0
      %v2270 = vpop.f32.mrb[0].mxu0
      %v2271 = vadd.f32 %v1976, %v2270
      %v2272 = vpop.f32.mrb[0].mxu0
      %2273 = vmatprep.mubr.bf16.mxu0 0
      %2274 = vmatmul.mubr.bf16.gmra.mrb[0].mxu0 %v2179
      %v2275 = vpop.f32.mrb[0].mxu0
      %v2276 = vadd.f32 %v1981, %v2275
      %v2277 = vpop.f32.mrb[0].mxu0
      %v2278 = vpop.f32.mrb[0].mxu0
      %v2279 = vadd.f32 %v1984, %v2278
      %v2280 = vpop.f32.mrb[0].mxu0
      %2281 = vmatprep.mubr.bf16.mxu0 0
      %2282 = vmatmul.mubr.bf16.gmra.mrb[0].mxu0 %v2182
      %v2283 = vpop.f32.mrb[0].mxu0
      %v2284 = vadd.f32 %v1989, %v2283
      %v2285 = vpop.f32.mrb[0].mxu0
      %v2286 = vpop.f32.mrb[0].mxu0
      %v2287 = vadd.f32 %v1992, %v2286
      %v2288 = vpop.f32.mrb[0].mxu0
      %2289 = vmatprep.mubr.bf16.mxu0 0
      %2290 = vmatmul.mubr.bf16.gmra.mrb[0].mxu0 %v2185
      %v2291 = vpop.f32.mrb[0].mxu0
      %v2292 = vadd.f32 %v1997, %v2291
      %v2293 = vpop.f32.mrb[0].mxu0
      %v2294 = vpop.f32.mrb[0].mxu0
      %v2295 = vadd.f32 %v2000, %v2294
      %v2296 = vpop.f32.mrb[0].mxu0
      %2297 = vmatprep.mubr.bf16.mxu0 0
      %2298 = vmatmul.mubr.bf16.gmra.mrb[0].mxu0 %v2188
      %v2299 = vpop.f32.mrb[0].mxu0
      %v2300 = vadd.f32 %v2005, %v2299
      %v2301 = vpop.f32.mrb[0].mxu0
      %v2302 = vpop.f32.mrb[0].mxu0
      %v2303 = vadd.f32 %v2008, %v2302
      %v2304 = vpop.f32.mrb[0].mxu0
      %2305 = vmatprep.mubr.bf16.mxu0 0
      %2306 = vmatmul.mubr.bf16.gmra.mrb[0].mxu0 %v2191
      %v2307 = vpop.f32.mrb[0].mxu0
      %v2308 = vadd.f32 %v2013, %v2307
      %v2309 = vpop.f32.mrb[0].mxu0
      %v2310 = vpop.f32.mrb[0].mxu0
      %v2311 = vadd.f32 %v2016, %v2310
      %v2312 = vpop.f32.mrb[0].mxu0
      %2313 = vmatprep.mubr.bf16.mxu0 0
      %2314 = vmatmul.mubr.bf16.gmra.mrb[0].mxu0 %v2194
      %v2315 = vpop.f32.mrb[0].mxu0
      %v2316 = vadd.f32 %v2021, %v2315
      %v2317 = vpop.f32.mrb[0].mxu0
      %v2318 = vpop.f32.mrb[0].mxu0
      %v2319 = vadd.f32 %v2024, %v2318
      %v2320 = vpop.f32.mrb[0].mxu0
      %2321 = vmatprep.mubr.bf16.mxu0 0
      %2322 = vmatmul.mubr.bf16.gmra.mrb[0].mxu0 %v2197
      %v2323 = vpop.f32.mrb[0].mxu0
      %v2324 = vadd.f32 %v2029, %v2323
      %v2325 = vpop.f32.mrb[0].mxu0
      %v2326 = vpop.f32.mrb[0].mxu0
      %v2327 = vadd.f32 %v2032, %v2326
      %v2328 = vpop.f32.mrb[0].mxu0
      %2329 = vmatprep.mubr.bf16.mxu0 0
      %2330 = vmatmul.mubr.bf16.gmra.mrb[0].mxu0 %v2200
      %v2331 = vpop.f32.mrb[0].mxu0
      %v2332 = vadd.f32 %v2037, %v2331
      %v2333 = vpop.f32.mrb[0].mxu0
      %v2334 = vpop.f32.mrb[0].mxu0
      %v2335 = vadd.f32 %v2040, %v2334
      %v2336 = vpop.f32.mrb[0].mxu0
      %2337 = vmatprep.mubr.bf16.mxu0 0
      %2338 = vmatmul.mubr.bf16.gmra.mrb[0].mxu0 %v2203
      %v2339 = vpop.f32.mrb[0].mxu0
      %v2340 = vadd.f32 %v2045, %v2339
      %v2341 = vpop.f32.mrb[0].mxu0
      %v2342 = vpop.f32.mrb[0].mxu0
      %v2343 = vadd.f32 %v2048, %v2342
      %v2344 = vpop.f32.mrb[0].mxu0
      %2345 = vmatprep.mubr.bf16.mxu0 0
      %2346 = vmatmul.mubr.bf16.gmra.mrb[0].mxu0 %v2206
      %v2347 = vpop.f32.mrb[0].mxu0
      %v2348 = vadd.f32 %v2053, %v2347
      %v2349 = vpop.f32.mrb[0].mxu0
      %v2350 = vpop.f32.mrb[0].mxu0
      %v2351 = vadd.f32 %v2056, %v2350
      %v2352 = vpop.f32.mrb[0].mxu0
      %2353 = vmatprep.mubr.bf16.mxu0 0
      %2354 = vmatmul.mubr.bf16.gmra.mrb[0].mxu0 %v2209
      %v2355 = vpop.f32.mrb[0].mxu0
      %v2356 = vadd.f32 %v2061, %v2355
      %v2357 = vpop.f32.mrb[0].mxu0
      %v2358 = vpop.f32.mrb[0].mxu0
      %v2359 = vadd.f32 %v2064, %v2358
      %v2360 = vpop.f32.mrb[0].mxu0
      %2361 = vmatprep.mubr.bf16.mxu0 0
      %2362 = vmatmul.mubr.bf16.gmra.mrb[0].mxu0 %v2212
      %v2363 = vpop.f32.mrb[0].mxu0
      %v2364 = vadd.f32 %v2069, %v2363
      %v2365 = vpop.f32.mrb[0].mxu0
      %v2366 = vpop.f32.mrb[0].mxu0
      %v2367 = vadd.f32 %v2072, %v2366
      %v2368 = vpop.f32.mrb[0].mxu0
      %2369 = vmatprep.mubr.bf16.mxu0 0
      %2370 = vmatmul.mubr.bf16.gmra.mrb[0].mxu0 %v2215
      %v2371 = vpop.f32.mrb[0].mxu0
      %v2372 = vadd.f32 %v2077, %v2371
      %v2373 = vpop.f32.mrb[0].mxu0
      %v2374 = vpop.f32.mrb[0].mxu0
      %v2375 = vadd.f32 %v2080, %v2374
      %v2376 = vpop.f32.mrb[0].mxu0
      %2377 = vdwg.mxu0
      %v2378 = vld [vmem:[#allocation2] sm:$0xe]
      %v2379 = vld [vmem:[#allocation2 + $0xc] sm:$0xe]
      %v2380 = vld [vmem:[#allocation2 + $0x18] sm:$0xe]
      %v2381 = vld [vmem:[#allocation2 + $0x24] sm:$0xe]
      %v2382 = vld [vmem:[#allocation2 + $0x30] sm:$0xe]
      %v2383 = vld [vmem:[#allocation2 + $0x3c] sm:$0xe]
      %v2384 = vld [vmem:[#allocation2 + $0x48] sm:$0xe]
      %v2385 = vld [vmem:[#allocation2 + $0x54] sm:$0xe]
      %v2386 = vld [vmem:[#allocation2 + $0x60] sm:$0xe]
      %v2387 = vld [vmem:[#allocation2 + $0x6c] sm:$0xe]
      %v2388 = vld [vmem:[#allocation2 + $0x78] sm:$0xe]
      %v2389 = vld [vmem:[#allocation2 + $0x84] sm:$0xe]
      %v2390 = vld [vmem:[#allocation2 + $0x90] sm:$0xe]
      %v2391 = vld [vmem:[#allocation2 + $0x9c] sm:$0xe]
      %v2392 = vld [vmem:[#allocation2 + $0xa8] sm:$0xe]
      %v2393 = vld [vmem:[#allocation2 + $0xb4] sm:$0xe]
      %vm2426 = vcmask 1042432
      %vm2427 = vcmask 1046532
      %vm2428 = vmor %vm2426, %vm2427
      %v2429 = vrot.slane %v2378, 5
      %v2430 = vrot.slane %v2429, 4
      %v2431 = vrot.slane %v1380, 5
      %v2432 = vsel %vm2428, %v2430, %v2431
      %v2433 = vrot.slane %v2431, 4
      %v2434 = vrot.slane %v1413, 5
      %v2435 = vsel %vm2428, %v2433, %v2434
      %v2436 = vrot.slane %v2379, 5
      %v2437 = vrot.slane %v2436, 4
      %v2438 = vrot.slane %v1382, 5
      %v2439 = vsel %vm2428, %v2437, %v2438
      %v2440 = vrot.slane %v2438, 4
      %v2441 = vrot.slane %v1414, 5
      %v2442 = vsel %vm2428, %v2440, %v2441
      %v2443 = vrot.slane %v2380, 5
      %v2444 = vrot.slane %v2443, 4
      %v2445 = vrot.slane %v1384, 5
      %v2446 = vsel %vm2428, %v2444, %v2445
      %v2447 = vrot.slane %v2445, 4
      %v2448 = vrot.slane %v1415, 5
      %v2449 = vsel %vm2428, %v2447, %v2448
      %v2450 = vrot.slane %v2381, 5
      %v2451 = vrot.slane %v2450, 4
      %v2452 = vrot.slane %v1386, 5
      %v2453 = vsel %vm2428, %v2451, %v2452
      %v2454 = vrot.slane %v2452, 4
      %v2455 = vrot.slane %v1416, 5
      %v2456 = vsel %vm2428, %v2454, %v2455
      %v2457 = vrot.slane %v2382, 5
      %v2458 = vrot.slane %v2457, 4
      %v2459 = vrot.slane %v1388, 5
      %v2460 = vsel %vm2428, %v2458, %v2459
      %v2461 = vrot.slane %v2459, 4
      %v2462 = vrot.slane %v1417, 5
      %v2463 = vsel %vm2428, %v2461, %v2462
      %v2464 = vrot.slane %v2383, 5
      %v2465 = vrot.slane %v2464, 4
      %v2466 = vrot.slane %v1390, 5
      %v2467 = vsel %vm2428, %v2465, %v2466
      %v2468 = vrot.slane %v2466, 4
      %v2469 = vrot.slane %v1418, 5
      %v2470 = vsel %vm2428, %v2468, %v2469
      %v2471 = vrot.slane %v2384, 5
      %v2472 = vrot.slane %v2471, 4
      %v2473 = vrot.slane %v1392, 5
      %v2474 = vsel %vm2428, %v2472, %v2473
      %v2475 = vrot.slane %v2473, 4
      %v2476 = vrot.slane %v1419, 5
      %v2477 = vsel %vm2428, %v2475, %v2476
      %v2478 = vrot.slane %v2385, 5
      %v2479 = vrot.slane %v2478, 4
      %v2480 = vrot.slane %v1394, 5
      %v2481 = vsel %vm2428, %v2479, %v2480
      %v2482 = vrot.slane %v2480, 4
      %v2483 = vrot.slane %v1420, 5
      %v2484 = vsel %vm2428, %v2482, %v2483
      %v2485 = vrot.slane %v2386, 5
      %v2486 = vrot.slane %v2485, 4
      %v2487 = vrot.slane %v1396, 5
      %v2488 = vsel %vm2428, %v2486, %v2487
      %v2489 = vrot.slane %v2487, 4
      %v2490 = vrot.slane %v1421, 5
      %v2491 = vsel %vm2428, %v2489, %v2490
      %v2492 = vrot.slane %v2387, 5
      %v2493 = vrot.slane %v2492, 4
      %v2494 = vrot.slane %v1398, 5
      %v2495 = vsel %vm2428, %v2493, %v2494
      %v2496 = vrot.slane %v2494, 4
      %v2497 = vrot.slane %v1422, 5
      %v2498 = vsel %vm2428, %v2496, %v2497
      %v2499 = vrot.slane %v2388, 5
      %v2500 = vrot.slane %v2499, 4
      %v2501 = vrot.slane %v1400, 5
      %v2502 = vsel %vm2428, %v2500, %v2501
      %v2503 = vrot.slane %v2501, 4
      %v2504 = vrot.slane %v1423, 5
      %v2505 = vsel %vm2428, %v2503, %v2504
      %v2506 = vrot.slane %v2389, 5
      %v2507 = vrot.slane %v2506, 4
      %v2508 = vrot.slane %v1402, 5
      %v2509 = vsel %vm2428, %v2507, %v2508
      %v2510 = vrot.slane %v2508, 4
      %v2511 = vrot.slane %v1424, 5
      %v2512 = vsel %vm2428, %v2510, %v2511
      %v2513 = vrot.slane %v2390, 5
      %v2514 = vrot.slane %v2513, 4
      %v2515 = vrot.slane %v1404, 5
      %v2516 = vsel %vm2428, %v2514, %v2515
      %v2517 = vrot.slane %v2515, 4
      %v2518 = vrot.slane %v1425, 5
      %v2519 = vsel %vm2428, %v2517, %v2518
      %v2520 = vrot.slane %v2391, 5
      %v2521 = vrot.slane %v2520, 4
      %v2522 = vrot.slane %v1406, 5
      %v2523 = vsel %vm2428, %v2521, %v2522
      %v2524 = vrot.slane %v2522, 4
      %v2525 = vrot.slane %v1426, 5
      %v2526 = vsel %vm2428, %v2524, %v2525
      %v2527 = vrot.slane %v2392, 5
      %v2528 = vrot.slane %v2527, 4
      %v2529 = vrot.slane %v1408, 5
      %v2530 = vsel %vm2428, %v2528, %v2529
      %v2531 = vrot.slane %v2529, 4
      %v2532 = vrot.slane %v1427, 5
      %v2533 = vsel %vm2428, %v2531, %v2532
      %v2534 = vrot.slane %v2393, 5
      %v2535 = vrot.slane %v2534, 4
      %v2536 = vrot.slane %v1410, 5
      %v2537 = vsel %vm2428, %v2535, %v2536
      %v2538 = vrot.slane %v2536, 4
      %v2539 = vrot.slane %v1428, 5
      %v2540 = vsel %vm2428, %v2538, %v2539
      %s2541 = scalar_lea.vmem %s5, 16
      %v2542 = vld [vmem:[%s2541] sm:$0xf]
      %v2543 = vld [vmem:[%s2541 + $0x4] sm:$0xf]
      %v2544 = vunpack.c.l.b16 %v2432
      %v2545 = vunpack.c.l.b16 %v2435
      %v2546 = vunpack.c.l.b16 %v2439
      %v2547 = vunpack.c.l.b16 %v2442
      %v2548 = vunpack.c.l.b16 %v2446
      %v2549 = vunpack.c.l.b16 %v2449
      %v2550 = vunpack.c.l.b16 %v2453
      %v2551 = vunpack.c.l.b16 %v2456
      %v2552 = vunpack.c.l.b16 %v2460
      %v2553 = vunpack.c.l.b16 %v2463
      %v2554 = vunpack.c.l.b16 %v2467
      %v2555 = vunpack.c.l.b16 %v2470
      %v2556 = vunpack.c.l.b16 %v2474
      %v2557 = vunpack.c.l.b16 %v2477
      %v2558 = vunpack.c.l.b16 %v2481
      %v2559 = vunpack.c.l.b16 %v2484
      %v2560 = vunpack.c.l.b16 %v2488
      %v2561 = vunpack.c.l.b16 %v2491
      %v2562 = vunpack.c.l.b16 %v2495
      %v2563 = vunpack.c.l.b16 %v2498
      %v2564 = vunpack.c.l.b16 %v2502
      %v2565 = vunpack.c.l.b16 %v2505
      %v2566 = vunpack.c.l.b16 %v2509
      %v2567 = vunpack.c.l.b16 %v2512
      %v2568 = vunpack.c.l.b16 %v2516
      %v2569 = vunpack.c.l.b16 %v2519
      %v2570 = vunpack.c.l.b16 %v2523
      %v2571 = vunpack.c.l.b16 %v2526
      %v2572 = vunpack.c.l.b16 %v2530
      %v2573 = vunpack.c.l.b16 %v2533
      %v2574 = vunpack.c.l.b16 %v2537
      %v2575 = vunpack.c.l.b16 %v2540
      %v2576 = vpack.c.b16 %v2545, %v2544
      %v2577 = vpack.c.b16 %v2547, %v2546
      %v2578 = vpack.c.b16 %v2549, %v2548
      %v2579 = vpack.c.b16 %v2551, %v2550
      %v2580 = vpack.c.b16 %v2553, %v2552
      %v2581 = vpack.c.b16 %v2555, %v2554
      %v2582 = vpack.c.b16 %v2557, %v2556
      %v2583 = vpack.c.b16 %v2559, %v2558
      %v2584 = vpack.c.b16 %v2561, %v2560
      %v2585 = vpack.c.b16 %v2563, %v2562
      %v2586 = vpack.c.b16 %v2565, %v2564
      %v2587 = vpack.c.b16 %v2567, %v2566
      %v2588 = vpack.c.b16 %v2569, %v2568
      %v2589 = vpack.c.b16 %v2571, %v2570
      %v2590 = vpack.c.b16 %v2573, %v2572
      %v2591 = vpack.c.b16 %v2575, %v2574
      %v2594 = vunpack.c.l.b16 %v2542
      %v2595 = vunpack.c.l.b16 %v2543
      %v2596 = vpack.c.b16 %v2595, %v2594
      %v2599 = vsel %vm1873, %v2576, 0
      %v2602 = vsel %vm1873, %v2577, 0
      %v2605 = vsel %vm1873, %v2578, 0
      %v2608 = vsel %vm1873, %v2579, 0
      %v2611 = vsel %vm1873, %v2580, 0
      %v2614 = vsel %vm1873, %v2581, 0
      %v2617 = vsel %vm1873, %v2582, 0
      %v2620 = vsel %vm1873, %v2583, 0
      %v2623 = vsel %vm1873, %v2584, 0
      %v2626 = vsel %vm1873, %v2585, 0
      %v2629 = vsel %vm1873, %v2586, 0
      %v2632 = vsel %vm1873, %v2587, 0
      %v2635 = vsel %vm1873, %v2588, 0
      %v2638 = vsel %vm1873, %v2589, 0
      %v2641 = vsel %vm1873, %v2590, 0
      %v2644 = vsel %vm1873, %v2591, 0
      %2646 = vmatprep.subr.bf16.mxu0 0
      %2647 = vmatpush1.bf16.msra.mxu0 %v2596
      %2648 = vmatprep.subr.bf16.mxu0 0
      %2649 = vmatpush1.bf16.msra.mxu0 0
      %2650 = vmatprep.subr.bf16.mxu0 0
      %2651 = vmatpush1.bf16.msra.mxu0 0
      %2652 = vmatprep.subr.bf16.mxu0 0
      %2653 = vmatpush1.bf16.msra.mxu0 0
      %2654 = vmatprep.subr.bf16.mxu0 0
      %2655 = vmatpush1.bf16.msra.mxu0 0
      %2656 = vmatprep.subr.bf16.mxu0 0
      %2657 = vmatpush1.bf16.msra.mxu0 0
      %2658 = vmatprep.subr.bf16.mxu0 0
      %2659 = vmatpush1.bf16.msra.mxu0 0
      %2660 = vmatprep.subr.bf16.mxu0 0
      %2661 = vmatpush1.bf16.msra.mxu0 0
      %2662 = vmatprep.subr.bf16.mxu0 0
      %2663 = vmatpush1.bf16.msra.mxu0 0
      %2664 = vmatprep.subr.bf16.mxu0 0
      %2665 = vmatpush1.bf16.msra.mxu0 0
      %2666 = vmatprep.subr.bf16.mxu0 0
      %2667 = vmatpush1.bf16.msra.mxu0 0
      %2668 = vmatprep.subr.bf16.mxu0 0
      %2669 = vmatpush1.bf16.msra.mxu0 0
      %2670 = vmatprep.subr.bf16.mxu0 0
      %2671 = vmatpush1.bf16.msra.mxu0 0
      %2672 = vmatprep.subr.bf16.mxu0 0
      %2673 = vmatpush1.bf16.msra.mxu0 0
      %2674 = vmatprep.subr.bf16.mxu0 0
      %2675 = vmatpush1.bf16.msra.mxu0 0
      %2676 = vmatprep.subr.bf16.mxu0 0
      %2677 = vmatpush1.bf16.msra.mxu0 0
      %2678 = vmatprep.mubr.bf16.mxu0 0
      %2679 = vmatmul.mubr.bf16.gmra.mrb[0].mxu0 %v2599
      %v2680 = vpop.f32.mrb[0].mxu0
      %v2681 = vadd.f32 0.0, %v2680
      %v2682 = vpop.f32.mrb[0].mxu0
      %v2683 = vpop.f32.mrb[0].mxu0
      %v2684 = vadd.f32 0.0, %v2683
      %v2685 = vpop.f32.mrb[0].mxu0
      %2686 = vmatprep.mubr.bf16.mxu0 0
      %2687 = vmatmul.mubr.bf16.gmra.mrb[0].mxu0 %v2602
      %v2688 = vpop.f32.mrb[0].mxu0
      %v2689 = vadd.f32 0.0, %v2688
      %v2690 = vpop.f32.mrb[0].mxu0
      %v2691 = vpop.f32.mrb[0].mxu0
      %v2692 = vadd.f32 0.0, %v2691
      %v2693 = vpop.f32.mrb[0].mxu0
      %2694 = vmatprep.mubr.bf16.mxu0 0
      %2695 = vmatmul.mubr.bf16.gmra.mrb[0].mxu0 %v2605
      %v2696 = vpop.f32.mrb[0].mxu0
      %v2697 = vadd.f32 0.0, %v2696
      %v2698 = vpop.f32.mrb[0].mxu0
      %v2699 = vpop.f32.mrb[0].mxu0
      %v2700 = vadd.f32 0.0, %v2699
      %v2701 = vpop.f32.mrb[0].mxu0
      %2702 = vmatprep.mubr.bf16.mxu0 0
      %2703 = vmatmul.mubr.bf16.gmra.mrb[0].mxu0 %v2608
      %v2704 = vpop.f32.mrb[0].mxu0
      %v2705 = vadd.f32 0.0, %v2704
      %v2706 = vpop.f32.mrb[0].mxu0
      %v2707 = vpop.f32.mrb[0].mxu0
      %v2708 = vadd.f32 0.0, %v2707
      %v2709 = vpop.f32.mrb[0].mxu0
      %2710 = vmatprep.mubr.bf16.mxu0 0
      %2711 = vmatmul.mubr.bf16.gmra.mrb[0].mxu0 %v2611
      %v2712 = vpop.f32.mrb[0].mxu0
      %v2713 = vadd.f32 0.0, %v2712
      %v2714 = vpop.f32.mrb[0].mxu0
      %v2715 = vpop.f32.mrb[0].mxu0
      %v2716 = vadd.f32 0.0, %v2715
      %v2717 = vpop.f32.mrb[0].mxu0
      %2718 = vmatprep.mubr.bf16.mxu0 0
      %2719 = vmatmul.mubr.bf16.gmra.mrb[0].mxu0 %v2614
      %v2720 = vpop.f32.mrb[0].mxu0
      %v2721 = vadd.f32 0.0, %v2720
      %v2722 = vpop.f32.mrb[0].mxu0
      %v2723 = vpop.f32.mrb[0].mxu0
      %v2724 = vadd.f32 0.0, %v2723
      %v2725 = vpop.f32.mrb[0].mxu0
      %2726 = vmatprep.mubr.bf16.mxu0 0
      %2727 = vmatmul.mubr.bf16.gmra.mrb[0].mxu0 %v2617
      %v2728 = vpop.f32.mrb[0].mxu0
      %v2729 = vadd.f32 0.0, %v2728
      %v2730 = vpop.f32.mrb[0].mxu0
      %v2731 = vpop.f32.mrb[0].mxu0
      %v2732 = vadd.f32 0.0, %v2731
      %v2733 = vpop.f32.mrb[0].mxu0
      %2734 = vmatprep.mubr.bf16.mxu0 0
      %2735 = vmatmul.mubr.bf16.gmra.mrb[0].mxu0 %v2620
      %v2736 = vpop.f32.mrb[0].mxu0
      %v2737 = vadd.f32 0.0, %v2736
      %v2738 = vpop.f32.mrb[0].mxu0
      %v2739 = vpop.f32.mrb[0].mxu0
      %v2740 = vadd.f32 0.0, %v2739
      %v2741 = vpop.f32.mrb[0].mxu0
      %2742 = vmatprep.mubr.bf16.mxu0 0
      %2743 = vmatmul.mubr.bf16.gmra.mrb[0].mxu0 %v2623
      %v2744 = vpop.f32.mrb[0].mxu0
      %v2745 = vadd.f32 0.0, %v2744
      %v2746 = vpop.f32.mrb[0].mxu0
      %v2747 = vpop.f32.mrb[0].mxu0
      %v2748 = vadd.f32 0.0, %v2747
      %v2749 = vpop.f32.mrb[0].mxu0
      %2750 = vmatprep.mubr.bf16.mxu0 0
      %2751 = vmatmul.mubr.bf16.gmra.mrb[0].mxu0 %v2626
      %v2752 = vpop.f32.mrb[0].mxu0
      %v2753 = vadd.f32 0.0, %v2752
      %v2754 = vpop.f32.mrb[0].mxu0
      %v2755 = vpop.f32.mrb[0].mxu0
      %v2756 = vadd.f32 0.0, %v2755
      %v2757 = vpop.f32.mrb[0].mxu0
      %2758 = vmatprep.mubr.bf16.mxu0 0
      %2759 = vmatmul.mubr.bf16.gmra.mrb[0].mxu0 %v2629
      %v2760 = vpop.f32.mrb[0].mxu0
      %v2761 = vadd.f32 0.0, %v2760
      %v2762 = vpop.f32.mrb[0].mxu0
      %v2763 = vpop.f32.mrb[0].mxu0
      %v2764 = vadd.f32 0.0, %v2763
      %v2765 = vpop.f32.mrb[0].mxu0
      %2766 = vmatprep.mubr.bf16.mxu0 0
      %2767 = vmatmul.mubr.bf16.gmra.mrb[0].mxu0 %v2632
      %v2768 = vpop.f32.mrb[0].mxu0
      %v2769 = vadd.f32 0.0, %v2768
      %v2770 = vpop.f32.mrb[0].mxu0
      %v2771 = vpop.f32.mrb[0].mxu0
      %v2772 = vadd.f32 0.0, %v2771
      %v2773 = vpop.f32.mrb[0].mxu0
      %2774 = vmatprep.mubr.bf16.mxu0 0
      %2775 = vmatmul.mubr.bf16.gmra.mrb[0].mxu0 %v2635
      %v2776 = vpop.f32.mrb[0].mxu0
      %v2777 = vadd.f32 0.0, %v2776
      %v2778 = vpop.f32.mrb[0].mxu0
      %v2779 = vpop.f32.mrb[0].mxu0
      %v2780 = vadd.f32 0.0, %v2779
      %v2781 = vpop.f32.mrb[0].mxu0
      %2782 = vmatprep.mubr.bf16.mxu0 0
      %2783 = vmatmul.mubr.bf16.gmra.mrb[0].mxu0 %v2638
      %v2784 = vpop.f32.mrb[0].mxu0
      %v2785 = vadd.f32 0.0, %v2784
      %v2786 = vpop.f32.mrb[0].mxu0
      %v2787 = vpop.f32.mrb[0].mxu0
      %v2788 = vadd.f32 0.0, %v2787
      %v2789 = vpop.f32.mrb[0].mxu0
      %2790 = vmatprep.mubr.bf16.mxu0 0
      %2791 = vmatmul.mubr.bf16.gmra.mrb[0].mxu0 %v2641
      %v2792 = vpop.f32.mrb[0].mxu0
      %v2793 = vadd.f32 0.0, %v2792
      %v2794 = vpop.f32.mrb[0].mxu0
      %v2795 = vpop.f32.mrb[0].mxu0
      %v2796 = vadd.f32 0.0, %v2795
      %v2797 = vpop.f32.mrb[0].mxu0
      %2798 = vmatprep.mubr.bf16.mxu0 0
      %2799 = vmatmul.mubr.bf16.gmra.mrb[0].mxu0 %v2644
      %v2800 = vpop.f32.mrb[0].mxu0
      %v2801 = vadd.f32 0.0, %v2800
      %v2802 = vpop.f32.mrb[0].mxu0
      %v2803 = vpop.f32.mrb[0].mxu0
      %v2804 = vadd.f32 0.0, %v2803
      %v2805 = vpop.f32.mrb[0].mxu0
      %2806 = vdwg.mxu0
      %v2807 = vadd.f32 %v2252, %v2681
      %v2808 = vadd.f32 %v2255, %v2684
      %v2809 = vadd.f32 %v2260, %v2689
      %v2810 = vadd.f32 %v2263, %v2692
      %v2811 = vadd.f32 %v2268, %v2697
      %v2812 = vadd.f32 %v2271, %v2700
      %v2813 = vadd.f32 %v2276, %v2705
      %v2814 = vadd.f32 %v2279, %v2708
      %v2815 = vadd.f32 %v2284, %v2713
      %v2816 = vadd.f32 %v2287, %v2716
      %v2817 = vadd.f32 %v2292, %v2721
      %v2818 = vadd.f32 %v2295, %v2724
      %v2819 = vadd.f32 %v2300, %v2729
      %v2820 = vadd.f32 %v2303, %v2732
      %v2821 = vadd.f32 %v2308, %v2737
      %v2822 = vadd.f32 %v2311, %v2740
      %v2823 = vadd.f32 %v2316, %v2745
      %v2824 = vadd.f32 %v2319, %v2748
      %v2825 = vadd.f32 %v2324, %v2753
      %v2826 = vadd.f32 %v2327, %v2756
      %v2827 = vadd.f32 %v2332, %v2761
      %v2828 = vadd.f32 %v2335, %v2764
      %v2829 = vadd.f32 %v2340, %v2769
      %v2830 = vadd.f32 %v2343, %v2772
      %v2831 = vadd.f32 %v2348, %v2777
      %v2832 = vadd.f32 %v2351, %v2780
      %v2833 = vadd.f32 %v2356, %v2785
      %v2834 = vadd.f32 %v2359, %v2788
      %v2835 = vadd.f32 %v2364, %v2793
      %v2836 = vadd.f32 %v2367, %v2796
      %v2837 = vadd.f32 %v2372, %v2801
      %v2838 = vadd.f32 %v2375, %v2804
      %v2839 = vld [vmem:[%s1264] sm:$0xf]
      %v2840 = vld [vmem:[%s1264 + $0x4] sm:$0xf]
      %v2841 = vld [vmem:[%s1264 + $0xc] sm:$0xf]
      %v2842 = vld [vmem:[%s1264 + $0x10] sm:$0xf]
      %v2843 = vld [vmem:[%s1264 + $0x18] sm:$0xf]
      %v2844 = vld [vmem:[%s1264 + $0x1c] sm:$0xf]
      %v2845 = vld [vmem:[%s1264 + $0x24] sm:$0xf]
      %v2846 = vld [vmem:[%s1264 + $0x28] sm:$0xf]
      %v2847 = vld [vmem:[%s1264 + $0x30] sm:$0xf]
      %v2848 = vld [vmem:[%s1264 + $0x34] sm:$0xf]
      %v2849 = vld [vmem:[%s1264 + $0x3c] sm:$0xf]
      %v2850 = vld [vmem:[%s1264 + $0x40] sm:$0xf]
      %v2851 = vld [vmem:[%s1264 + $0x48] sm:$0xf]
      %v2852 = vld [vmem:[%s1264 + $0x4c] sm:$0xf]
      %v2853 = vld [vmem:[%s1264 + $0x54] sm:$0xf]
      %v2854 = vld [vmem:[%s1264 + $0x58] sm:$0xf]
      %v2855 = vld [vmem:[%s1264 + $0x60] sm:$0xf]
      %v2856 = vld [vmem:[%s1264 + $0x64] sm:$0xf]
      %v2857 = vld [vmem:[%s1264 + $0x6c] sm:$0xf]
      %v2858 = vld [vmem:[%s1264 + $0x70] sm:$0xf]
      %v2859 = vld [vmem:[%s1264 + $0x78] sm:$0xf]
      %v2860 = vld [vmem:[%s1264 + $0x7c] sm:$0xf]
      %v2861 = vld [vmem:[%s1264 + $0x84] sm:$0xf]
      %v2862 = vld [vmem:[%s1264 + $0x88] sm:$0xf]
      %v2863 = vld [vmem:[%s1264 + $0x90] sm:$0xf]
      %v2864 = vld [vmem:[%s1264 + $0x94] sm:$0xf]
      %v2865 = vld [vmem:[%s1264 + $0x9c] sm:$0xf]
      %v2866 = vld [vmem:[%s1264 + $0xa0] sm:$0xf]
      %v2867 = vld [vmem:[%s1264 + $0xa8] sm:$0xf]
      %v2868 = vld [vmem:[%s1264 + $0xac] sm:$0xf]
      %v2869 = vld [vmem:[%s1264 + $0xb4] sm:$0xf]
      %v2870 = vld [vmem:[%s1264 + $0xb8] sm:$0xf]
      %s2871 = scalar_lea.vmem %s5, 24
      %v2872 = vld [vmem:[%s2871] sm:$0xf]
      %v2873 = vld [vmem:[%s2871 + $0x4] sm:$0xf]
      %v2906 = vunpack.c.l.b16 %v2839
      %v2907 = vunpack.c.l.b16 %v2840
      %v2908 = vunpack.c.l.b16 %v2841
      %v2909 = vunpack.c.l.b16 %v2842
      %v2910 = vunpack.c.l.b16 %v2843
      %v2911 = vunpack.c.l.b16 %v2844
      %v2912 = vunpack.c.l.b16 %v2845
      %v2913 = vunpack.c.l.b16 %v2846
      %v2914 = vunpack.c.l.b16 %v2847
      %v2915 = vunpack.c.l.b16 %v2848
      %v2916 = vunpack.c.l.b16 %v2849
      %v2917 = vunpack.c.l.b16 %v2850
      %v2918 = vunpack.c.l.b16 %v2851
      %v2919 = vunpack.c.l.b16 %v2852
      %v2920 = vunpack.c.l.b16 %v2853
      %v2921 = vunpack.c.l.b16 %v2854
      %v2922 = vunpack.c.l.b16 %v2855
      %v2923 = vunpack.c.l.b16 %v2856
      %v2924 = vunpack.c.l.b16 %v2857
      %v2925 = vunpack.c.l.b16 %v2858
      %v2926 = vunpack.c.l.b16 %v2859
      %v2927 = vunpack.c.l.b16 %v2860
      %v2928 = vunpack.c.l.b16 %v2861
      %v2929 = vunpack.c.l.b16 %v2862
      %v2930 = vunpack.c.l.b16 %v2863
      %v2931 = vunpack.c.l.b16 %v2864
      %v2932 = vunpack.c.l.b16 %v2865
      %v2933 = vunpack.c.l.b16 %v2866
      %v2934 = vunpack.c.l.b16 %v2867
      %v2935 = vunpack.c.l.b16 %v2868
      %v2936 = vunpack.c.l.b16 %v2869
      %v2937 = vunpack.c.l.b16 %v2870
      %v2938 = vpack.c.b16 %v2907, %v2906
      %v2939 = vpack.c.b16 %v2909, %v2908
      %v2940 = vpack.c.b16 %v2911, %v2910
      %v2941 = vpack.c.b16 %v2913, %v2912
      %v2942 = vpack.c.b16 %v2915, %v2914
      %v2943 = vpack.c.b16 %v2917, %v2916
      %v2944 = vpack.c.b16 %v2919, %v2918
      %v2945 = vpack.c.b16 %v2921, %v2920
      %v2946 = vpack.c.b16 %v2923, %v2922
      %v2947 = vpack.c.b16 %v2925, %v2924
      %v2948 = vpack.c.b16 %v2927, %v2926
      %v2949 = vpack.c.b16 %v2929, %v2928
      %v2950 = vpack.c.b16 %v2931, %v2930
      %v2951 = vpack.c.b16 %v2933, %v2932
      %v2952 = vpack.c.b16 %v2935, %v2934
      %v2953 = vpack.c.b16 %v2937, %v2936
      %v2956 = vunpack.c.l.b16 %v2872
      %v2957 = vunpack.c.l.b16 %v2873
      %v2958 = vpack.c.b16 %v2957, %v2956
      %v2961 = vsel %vm1873, %v2938, 0
      %v2964 = vsel %vm1873, %v2939, 0
      %v2967 = vsel %vm1873, %v2940, 0
      %v2970 = vsel %vm1873, %v2941, 0
      %v2973 = vsel %vm1873, %v2942, 0
      %v2976 = vsel %vm1873, %v2943, 0
      %v2979 = vsel %vm1873, %v2944, 0
      %v2982 = vsel %vm1873, %v2945, 0
      %v2985 = vsel %vm1873, %v2946, 0
      %v2988 = vsel %vm1873, %v2947, 0
      %v2991 = vsel %vm1873, %v2948, 0
      %v2994 = vsel %vm1873, %v2949, 0
      %v2997 = vsel %vm1873, %v2950, 0
      %v3000 = vsel %vm1873, %v2951, 0
      %v3003 = vsel %vm1873, %v2952, 0
      %v3006 = vsel %vm1873, %v2953, 0
      %3008 = vmatprep.subr.bf16.mxu0 0
      %3009 = vmatpush1.bf16.msra.mxu0 %v2958
      %3010 = vmatprep.subr.bf16.mxu0 0
      %3011 = vmatpush1.bf16.msra.mxu0 0
      %3012 = vmatprep.subr.bf16.mxu0 0
      %3013 = vmatpush1.bf16.msra.mxu0 0
      %3014 = vmatprep.subr.bf16.mxu0 0
      %3015 = vmatpush1.bf16.msra.mxu0 0
      %3016 = vmatprep.subr.bf16.mxu0 0
      %3017 = vmatpush1.bf16.msra.mxu0 0
      %3018 = vmatprep.subr.bf16.mxu0 0
      %3019 = vmatpush1.bf16.msra.mxu0 0
      %3020 = vmatprep.subr.bf16.mxu0 0
      %3021 = vmatpush1.bf16.msra.mxu0 0
      %3022 = vmatprep.subr.bf16.mxu0 0
      %3023 = vmatpush1.bf16.msra.mxu0 0
      %3024 = vmatprep.subr.bf16.mxu0 0
      %3025 = vmatpush1.bf16.msra.mxu0 0
      %3026 = vmatprep.subr.bf16.mxu0 0
      %3027 = vmatpush1.bf16.msra.mxu0 0
      %3028 = vmatprep.subr.bf16.mxu0 0
      %3029 = vmatpush1.bf16.msra.mxu0 0
      %3030 = vmatprep.subr.bf16.mxu0 0
      %3031 = vmatpush1.bf16.msra.mxu0 0
      %3032 = vmatprep.subr.bf16.mxu0 0
      %3033 = vmatpush1.bf16.msra.mxu0 0
      %3034 = vmatprep.subr.bf16.mxu0 0
      %3035 = vmatpush1.bf16.msra.mxu0 0
      %3036 = vmatprep.subr.bf16.mxu0 0
      %3037 = vmatpush1.bf16.msra.mxu0 0
      %3038 = vmatprep.subr.bf16.mxu0 0
      %3039 = vmatpush1.bf16.msra.mxu0 0
      %3040 = vmatprep.mubr.bf16.mxu0 0
      %3041 = vmatmul.mubr.bf16.gmra.mrb[0].mxu0 %v2961
      %v3042 = vpop.f32.mrb[0].mxu0
      %v3043 = vadd.f32 0.0, %v3042
      %v3044 = vpop.f32.mrb[0].mxu0
      %v3045 = vpop.f32.mrb[0].mxu0
      %v3046 = vadd.f32 0.0, %v3045
      %v3047 = vpop.f32.mrb[0].mxu0
      %3048 = vmatprep.mubr.bf16.mxu0 0
      %3049 = vmatmul.mubr.bf16.gmra.mrb[0].mxu0 %v2964
      %v3050 = vpop.f32.mrb[0].mxu0
      %v3051 = vadd.f32 0.0, %v3050
      %v3052 = vpop.f32.mrb[0].mxu0
      %v3053 = vpop.f32.mrb[0].mxu0
      %v3054 = vadd.f32 0.0, %v3053
      %v3055 = vpop.f32.mrb[0].mxu0
      %3056 = vmatprep.mubr.bf16.mxu0 0
      %3057 = vmatmul.mubr.bf16.gmra.mrb[0].mxu0 %v2967
      %v3058 = vpop.f32.mrb[0].mxu0
      %v3059 = vadd.f32 0.0, %v3058
      %v3060 = vpop.f32.mrb[0].mxu0
      %v3061 = vpop.f32.mrb[0].mxu0
      %v3062 = vadd.f32 0.0, %v3061
      %v3063 = vpop.f32.mrb[0].mxu0
      %3064 = vmatprep.mubr.bf16.mxu0 0
      %3065 = vmatmul.mubr.bf16.gmra.mrb[0].mxu0 %v2970
      %v3066 = vpop.f32.mrb[0].mxu0
      %v3067 = vadd.f32 0.0, %v3066
      %v3068 = vpop.f32.mrb[0].mxu0
      %v3069 = vpop.f32.mrb[0].mxu0
      %v3070 = vadd.f32 0.0, %v3069
      %v3071 = vpop.f32.mrb[0].mxu0
      %3072 = vmatprep.mubr.bf16.mxu0 0
      %3073 = vmatmul.mubr.bf16.gmra.mrb[0].mxu0 %v2973
      %v3074 = vpop.f32.mrb[0].mxu0
      %v3075 = vadd.f32 0.0, %v3074
      %v3076 = vpop.f32.mrb[0].mxu0
      %v3077 = vpop.f32.mrb[0].mxu0
      %v3078 = vadd.f32 0.0, %v3077
      %v3079 = vpop.f32.mrb[0].mxu0
      %3080 = vmatprep.mubr.bf16.mxu0 0
      %3081 = vmatmul.mubr.bf16.gmra.mrb[0].mxu0 %v2976
      %v3082 = vpop.f32.mrb[0].mxu0
      %v3083 = vadd.f32 0.0, %v3082
      %v3084 = vpop.f32.mrb[0].mxu0
      %v3085 = vpop.f32.mrb[0].mxu0
      %v3086 = vadd.f32 0.0, %v3085
      %v3087 = vpop.f32.mrb[0].mxu0
      %3088 = vmatprep.mubr.bf16.mxu0 0
      %3089 = vmatmul.mubr.bf16.gmra.mrb[0].mxu0 %v2979
      %v3090 = vpop.f32.mrb[0].mxu0
      %v3091 = vadd.f32 0.0, %v3090
      %v3092 = vpop.f32.mrb[0].mxu0
      %v3093 = vpop.f32.mrb[0].mxu0
      %v3094 = vadd.f32 0.0, %v3093
      %v3095 = vpop.f32.mrb[0].mxu0
      %3096 = vmatprep.mubr.bf16.mxu0 0
      %3097 = vmatmul.mubr.bf16.gmra.mrb[0].mxu0 %v2982
      %v3098 = vpop.f32.mrb[0].mxu0
      %v3099 = vadd.f32 0.0, %v3098
      %v3100 = vpop.f32.mrb[0].mxu0
      %v3101 = vpop.f32.mrb[0].mxu0
      %v3102 = vadd.f32 0.0, %v3101
      %v3103 = vpop.f32.mrb[0].mxu0
      %3104 = vmatprep.mubr.bf16.mxu0 0
      %3105 = vmatmul.mubr.bf16.gmra.mrb[0].mxu0 %v2985
      %v3106 = vpop.f32.mrb[0].mxu0
      %v3107 = vadd.f32 0.0, %v3106
      %v3108 = vpop.f32.mrb[0].mxu0
      %v3109 = vpop.f32.mrb[0].mxu0
      %v3110 = vadd.f32 0.0, %v3109
      %v3111 = vpop.f32.mrb[0].mxu0
      %3112 = vmatprep.mubr.bf16.mxu0 0
      %3113 = vmatmul.mubr.bf16.gmra.mrb[0].mxu0 %v2988
      %v3114 = vpop.f32.mrb[0].mxu0
      %v3115 = vadd.f32 0.0, %v3114
      %v3116 = vpop.f32.mrb[0].mxu0
      %v3117 = vpop.f32.mrb[0].mxu0
      %v3118 = vadd.f32 0.0, %v3117
      %v3119 = vpop.f32.mrb[0].mxu0
      %3120 = vmatprep.mubr.bf16.mxu0 0
      %3121 = vmatmul.mubr.bf16.gmra.mrb[0].mxu0 %v2991
      %v3122 = vpop.f32.mrb[0].mxu0
      %v3123 = vadd.f32 0.0, %v3122
      %v3124 = vpop.f32.mrb[0].mxu0
      %v3125 = vpop.f32.mrb[0].mxu0
      %v3126 = vadd.f32 0.0, %v3125
      %v3127 = vpop.f32.mrb[0].mxu0
      %3128 = vmatprep.mubr.bf16.mxu0 0
      %3129 = vmatmul.mubr.bf16.gmra.mrb[0].mxu0 %v2994
      %v3130 = vpop.f32.mrb[0].mxu0
      %v3131 = vadd.f32 0.0, %v3130
      %v3132 = vpop.f32.mrb[0].mxu0
      %v3133 = vpop.f32.mrb[0].mxu0
      %v3134 = vadd.f32 0.0, %v3133
      %v3135 = vpop.f32.mrb[0].mxu0
      %3136 = vmatprep.mubr.bf16.mxu0 0
      %3137 = vmatmul.mubr.bf16.gmra.mrb[0].mxu0 %v2997
      %v3138 = vpop.f32.mrb[0].mxu0
      %v3139 = vadd.f32 0.0, %v3138
      %v3140 = vpop.f32.mrb[0].mxu0
      %v3141 = vpop.f32.mrb[0].mxu0
      %v3142 = vadd.f32 0.0, %v3141
      %v3143 = vpop.f32.mrb[0].mxu0
      %3144 = vmatprep.mubr.bf16.mxu0 0
      %3145 = vmatmul.mubr.bf16.gmra.mrb[0].mxu0 %v3000
      %v3146 = vpop.f32.mrb[0].mxu0
      %v3147 = vadd.f32 0.0, %v3146
      %v3148 = vpop.f32.mrb[0].mxu0
      %v3149 = vpop.f32.mrb[0].mxu0
      %v3150 = vadd.f32 0.0, %v3149
      %v3151 = vpop.f32.mrb[0].mxu0
      %3152 = vmatprep.mubr.bf16.mxu0 0
      %3153 = vmatmul.mubr.bf16.gmra.mrb[0].mxu0 %v3003
      %v3154 = vpop.f32.mrb[0].mxu0
      %v3155 = vadd.f32 0.0, %v3154
      %v3156 = vpop.f32.mrb[0].mxu0
      %v3157 = vpop.f32.mrb[0].mxu0
      %v3158 = vadd.f32 0.0, %v3157
      %v3159 = vpop.f32.mrb[0].mxu0
      %3160 = vmatprep.mubr.bf16.mxu0 0
      %3161 = vmatmul.mubr.bf16.gmra.mrb[0].mxu0 %v3006
      %v3162 = vpop.f32.mrb[0].mxu0
      %v3163 = vadd.f32 0.0, %v3162
      %v3164 = vpop.f32.mrb[0].mxu0
      %v3165 = vpop.f32.mrb[0].mxu0
      %v3166 = vadd.f32 0.0, %v3165
      %v3167 = vpop.f32.mrb[0].mxu0
      %3168 = vdwg.mxu0
      %v3169 = vadd.f32 %v2807, %v3043
      %v3170 = vadd.f32 %v2808, %v3046
      %v3171 = vadd.f32 %v2809, %v3051
      %v3172 = vadd.f32 %v2810, %v3054
      %v3173 = vadd.f32 %v2811, %v3059
      %v3174 = vadd.f32 %v2812, %v3062
      %v3175 = vadd.f32 %v2813, %v3067
      %v3176 = vadd.f32 %v2814, %v3070
      %v3177 = vadd.f32 %v2815, %v3075
      %v3178 = vadd.f32 %v2816, %v3078
      %v3179 = vadd.f32 %v2817, %v3083
      %v3180 = vadd.f32 %v2818, %v3086
      %v3181 = vadd.f32 %v2819, %v3091
      %v3182 = vadd.f32 %v2820, %v3094
      %v3183 = vadd.f32 %v2821, %v3099
      %v3184 = vadd.f32 %v2822, %v3102
      %v3185 = vadd.f32 %v2823, %v3107
      %v3186 = vadd.f32 %v2824, %v3110
      %v3187 = vadd.f32 %v2825, %v3115
      %v3188 = vadd.f32 %v2826, %v3118
      %v3189 = vadd.f32 %v2827, %v3123
      %v3190 = vadd.f32 %v2828, %v3126
      %v3191 = vadd.f32 %v2829, %v3131
      %v3192 = vadd.f32 %v2830, %v3134
      %v3193 = vadd.f32 %v2831, %v3139
      %v3194 = vadd.f32 %v2832, %v3142
      %v3195 = vadd.f32 %v2833, %v3147
      %v3196 = vadd.f32 %v2834, %v3150
      %v3197 = vadd.f32 %v2835, %v3155
      %v3198 = vadd.f32 %v2836, %v3158
      %v3199 = vadd.f32 %v2837, %v3163
      %v3200 = vadd.f32 %v2838, %v3166
      %v3201 = vld [vmem:[%s1264] sm:$0xf]
      %v3202 = vld [vmem:[%s1264 + $0x4] sm:$0xf]
      %v3203 = vld [vmem:[%s1264 + $0x8] sm:$0x1]
      %v3204 = vld [vmem:[%s1264 + $0xc] sm:$0xf]
      %v3205 = vld [vmem:[%s1264 + $0x10] sm:$0xf]
      %v3206 = vld [vmem:[%s1264 + $0x14] sm:$0x1]
      %v3207 = vld [vmem:[%s1264 + $0x18] sm:$0xf]
      %v3208 = vld [vmem:[%s1264 + $0x1c] sm:$0xf]
      %v3209 = vld [vmem:[%s1264 + $0x20] sm:$0x1]
      %v3210 = vld [vmem:[%s1264 + $0x24] sm:$0xf]
      %v3211 = vld [vmem:[%s1264 + $0x28] sm:$0xf]
      %v3212 = vld [vmem:[%s1264 + $0x2c] sm:$0x1]
      %v3213 = vld [vmem:[%s1264 + $0x30] sm:$0xf]
      %v3214 = vld [vmem:[%s1264 + $0x34] sm:$0xf]
      %v3215 = vld [vmem:[%s1264 + $0x38] sm:$0x1]
      %v3216 = vld [vmem:[%s1264 + $0x3c] sm:$0xf]
      %v3217 = vld [vmem:[%s1264 + $0x40] sm:$0xf]
      %v3218 = vld [vmem:[%s1264 + $0x44] sm:$0x1]
      %v3219 = vld [vmem:[%s1264 + $0x48] sm:$0xf]
      %v3220 = vld [vmem:[%s1264 + $0x4c] sm:$0xf]
      %v3221 = vld [vmem:[%s1264 + $0x50] sm:$0x1]
      %v3222 = vld [vmem:[%s1264 + $0x54] sm:$0xf]
      %v3223 = vld [vmem:[%s1264 + $0x58] sm:$0xf]
      %v3224 = vld [vmem:[%s1264 + $0x5c] sm:$0x1]
      %v3225 = vld [vmem:[%s1264 + $0x60] sm:$0xf]
      %v3226 = vld [vmem:[%s1264 + $0x64] sm:$0xf]
      %v3227 = vld [vmem:[%s1264 + $0x68] sm:$0x1]
      %v3228 = vld [vmem:[%s1264 + $0x6c] sm:$0xf]
      %v3229 = vld [vmem:[%s1264 + $0x70] sm:$0xf]
      %v3230 = vld [vmem:[%s1264 + $0x74] sm:$0x1]
      %v3231 = vld [vmem:[%s1264 + $0x78] sm:$0xf]
      %v3232 = vld [vmem:[%s1264 + $0x7c] sm:$0xf]
      %v3233 = vld [vmem:[%s1264 + $0x80] sm:$0x1]
      %v3234 = vld [vmem:[%s1264 + $0x84] sm:$0xf]
      %v3235 = vld [vmem:[%s1264 + $0x88] sm:$0xf]
      %v3236 = vld [vmem:[%s1264 + $0x8c] sm:$0x1]
      %v3237 = vld [vmem:[%s1264 + $0x90] sm:$0xf]
      %v3238 = vld [vmem:[%s1264 + $0x94] sm:$0xf]
      %v3239 = vld [vmem:[%s1264 + $0x98] sm:$0x1]
      %v3240 = vld [vmem:[%s1264 + $0x9c] sm:$0xf]
      %v3241 = vld [vmem:[%s1264 + $0xa0] sm:$0xf]
      %v3242 = vld [vmem:[%s1264 + $0xa4] sm:$0x1]
      %v3243 = vld [vmem:[%s1264 + $0xa8] sm:$0xf]
      %v3244 = vld [vmem:[%s1264 + $0xac] sm:$0xf]
      %v3245 = vld [vmem:[%s1264 + $0xb0] sm:$0x1]
      %v3246 = vld [vmem:[%s1264 + $0xb4] sm:$0xf]
      %v3247 = vld [vmem:[%s1264 + $0xb8] sm:$0xf]
      %v3248 = vld [vmem:[%s1264 + $0xbc] sm:$0x1]
      %v3250 = vshrl.u32 %v3201, 16
      %v3252 = vrot.slane %v3250, 4
      %v3253 = vshll.u32 %v3201, 16
      %v3255 = vrot.slane %v3253, 5
      %v3256 = vor.u32 %v3252, %v3255
      %v3257 = vrot.slane %v3256, 4
      %v3259 = vshll.u32 %v3202, 16
      %v3261 = vrot.slane %v3259, 5
      %v3262 = vsel %vm1431, %v3257, %v3261
      %v3263 = vshrl.u32 %v3202, 16
      %v3265 = vrot.slane %v3263, 4
      %v3266 = vor.u32 %v3265, %v3261
      %v3267 = vrot.slane %v3266, 4
      %v3269 = vshll.u32 %v3203, 16
      %v3271 = vrot.slane %v3269, 5
      %v3272 = vsel %vm1431, %v3267, %v3271
      %v3274 = vshrl.u32 %v3204, 16
      %v3276 = vrot.slane %v3274, 4
      %v3277 = vshll.u32 %v3204, 16
      %v3279 = vrot.slane %v3277, 5
      %v3280 = vor.u32 %v3276, %v3279
      %v3281 = vrot.slane %v3280, 4
      %v3283 = vshll.u32 %v3205, 16
      %v3285 = vrot.slane %v3283, 5
      %v3286 = vsel %vm1431, %v3281, %v3285
      %v3287 = vshrl.u32 %v3205, 16
      %v3289 = vrot.slane %v3287, 4
      %v3290 = vor.u32 %v3289, %v3285
      %v3291 = vrot.slane %v3290, 4
      %v3293 = vshll.u32 %v3206, 16
      %v3295 = vrot.slane %v3293, 5
      %v3296 = vsel %vm1431, %v3291, %v3295
      %v3298 = vshrl.u32 %v3207, 16
      %v3300 = vrot.slane %v3298, 4
      %v3301 = vshll.u32 %v3207, 16
      %v3303 = vrot.slane %v3301, 5
      %v3304 = vor.u32 %v3300, %v3303
      %v3305 = vrot.slane %v3304, 4
      %v3307 = vshll.u32 %v3208, 16
      %v3309 = vrot.slane %v3307, 5
      %v3310 = vsel %vm1431, %v3305, %v3309
      %v3311 = vshrl.u32 %v3208, 16
      %v3313 = vrot.slane %v3311, 4
      %v3314 = vor.u32 %v3313, %v3309
      %v3315 = vrot.slane %v3314, 4
      %v3317 = vshll.u32 %v3209, 16
      %v3319 = vrot.slane %v3317, 5
      %v3320 = vsel %vm1431, %v3315, %v3319
      %v3322 = vshrl.u32 %v3210, 16
      %v3324 = vrot.slane %v3322, 4
      %v3325 = vshll.u32 %v3210, 16
      %v3327 = vrot.slane %v3325, 5
      %v3328 = vor.u32 %v3324, %v3327
      %v3329 = vrot.slane %v3328, 4
      %v3331 = vshll.u32 %v3211, 16
      %v3333 = vrot.slane %v3331, 5
      %v3334 = vsel %vm1431, %v3329, %v3333
      %v3335 = vshrl.u32 %v3211, 16
      %v3337 = vrot.slane %v3335, 4
      %v3338 = vor.u32 %v3337, %v3333
      %v3339 = vrot.slane %v3338, 4
      %v3341 = vshll.u32 %v3212, 16
      %v3343 = vrot.slane %v3341, 5
      %v3344 = vsel %vm1431, %v3339, %v3343
      %v3346 = vshrl.u32 %v3213, 16
      %v3348 = vrot.slane %v3346, 4
      %v3349 = vshll.u32 %v3213, 16
      %v3351 = vrot.slane %v3349, 5
      %v3352 = vor.u32 %v3348, %v3351
      %v3353 = vrot.slane %v3352, 4
      %v3355 = vshll.u32 %v3214, 16
      %v3357 = vrot.slane %v3355, 5
      %v3358 = vsel %vm1431, %v3353, %v3357
      %v3359 = vshrl.u32 %v3214, 16
      %v3361 = vrot.slane %v3359, 4
      %v3362 = vor.u32 %v3361, %v3357
      %v3363 = vrot.slane %v3362, 4
      %v3365 = vshll.u32 %v3215, 16
      %v3367 = vrot.slane %v3365, 5
      %v3368 = vsel %vm1431, %v3363, %v3367
      %v3370 = vshrl.u32 %v3216, 16
      %v3372 = vrot.slane %v3370, 4
      %v3373 = vshll.u32 %v3216, 16
      %v3375 = vrot.slane %v3373, 5
      %v3376 = vor.u32 %v3372, %v3375
      %v3377 = vrot.slane %v3376, 4
      %v3379 = vshll.u32 %v3217, 16
      %v3381 = vrot.slane %v3379, 5
      %v3382 = vsel %vm1431, %v3377, %v3381
      %v3383 = vshrl.u32 %v3217, 16
      %v3385 = vrot.slane %v3383, 4
      %v3386 = vor.u32 %v3385, %v3381
      %v3387 = vrot.slane %v3386, 4
      %v3389 = vshll.u32 %v3218, 16
      %v3391 = vrot.slane %v3389, 5
      %v3392 = vsel %vm1431, %v3387, %v3391
      %v3394 = vshrl.u32 %v3219, 16
      %v3396 = vrot.slane %v3394, 4
      %v3397 = vshll.u32 %v3219, 16
      %v3399 = vrot.slane %v3397, 5
      %v3400 = vor.u32 %v3396, %v3399
      %v3401 = vrot.slane %v3400, 4
      %v3403 = vshll.u32 %v3220, 16
      %v3405 = vrot.slane %v3403, 5
      %v3406 = vsel %vm1431, %v3401, %v3405
      %v3407 = vshrl.u32 %v3220, 16
      %v3409 = vrot.slane %v3407, 4
      %v3410 = vor.u32 %v3409, %v3405
      %v3411 = vrot.slane %v3410, 4
      %v3413 = vshll.u32 %v3221, 16
      %v3415 = vrot.slane %v3413, 5
      %v3416 = vsel %vm1431, %v3411, %v3415
      %v3418 = vshrl.u32 %v3222, 16
      %v3420 = vrot.slane %v3418, 4
      %v3421 = vshll.u32 %v3222, 16
      %v3423 = vrot.slane %v3421, 5
      %v3424 = vor.u32 %v3420, %v3423
      %v3425 = vrot.slane %v3424, 4
      %v3427 = vshll.u32 %v3223, 16
      %v3429 = vrot.slane %v3427, 5
      %v3430 = vsel %vm1431, %v3425, %v3429
      %v3431 = vshrl.u32 %v3223, 16
      %v3433 = vrot.slane %v3431, 4
      %v3434 = vor.u32 %v3433, %v3429
      %v3435 = vrot.slane %v3434, 4
      %v3437 = vshll.u32 %v3224, 16
      %v3439 = vrot.slane %v3437, 5
      %v3440 = vsel %vm1431, %v3435, %v3439
      %v3442 = vshrl.u32 %v3225, 16
      %v3444 = vrot.slane %v3442, 4
      %v3445 = vshll.u32 %v3225, 16
      %v3447 = vrot.slane %v3445, 5
      %v3448 = vor.u32 %v3444, %v3447
      %v3449 = vrot.slane %v3448, 4
      %v3451 = vshll.u32 %v3226, 16
      %v3453 = vrot.slane %v3451, 5
      %v3454 = vsel %vm1431, %v3449, %v3453
      %v3455 = vshrl.u32 %v3226, 16
      %v3457 = vrot.slane %v3455, 4
      %v3458 = vor.u32 %v3457, %v3453
      %v3459 = vrot.slane %v3458, 4
      %v3461 = vshll.u32 %v3227, 16
      %v3463 = vrot.slane %v3461, 5
      %v3464 = vsel %vm1431, %v3459, %v3463
      %v3466 = vshrl.u32 %v3228, 16
      %v3468 = vrot.slane %v3466, 4
      %v3469 = vshll.u32 %v3228, 16
      %v3471 = vrot.slane %v3469, 5
      %v3472 = vor.u32 %v3468, %v3471
      %v3473 = vrot.slane %v3472, 4
      %v3475 = vshll.u32 %v3229, 16
      %v3477 = vrot.slane %v3475, 5
      %v3478 = vsel %vm1431, %v3473, %v3477
      %v3479 = vshrl.u32 %v3229, 16
      %v3481 = vrot.slane %v3479, 4
      %v3482 = vor.u32 %v3481, %v3477
      %v3483 = vrot.slane %v3482, 4
      %v3485 = vshll.u32 %v3230, 16
      %v3487 = vrot.slane %v3485, 5
      %v3488 = vsel %vm1431, %v3483, %v3487
      %v3490 = vshrl.u32 %v3231, 16
      %v3492 = vrot.slane %v3490, 4
      %v3493 = vshll.u32 %v3231, 16
      %v3495 = vrot.slane %v3493, 5
      %v3496 = vor.u32 %v3492, %v3495
      %v3497 = vrot.slane %v3496, 4
      %v3499 = vshll.u32 %v3232, 16
      %v3501 = vrot.slane %v3499, 5
      %v3502 = vsel %vm1431, %v3497, %v3501
      %v3503 = vshrl.u32 %v3232, 16
      %v3505 = vrot.slane %v3503, 4
      %v3506 = vor.u32 %v3505, %v3501
      %v3507 = vrot.slane %v3506, 4
      %v3509 = vshll.u32 %v3233, 16
      %v3511 = vrot.slane %v3509, 5
      %v3512 = vsel %vm1431, %v3507, %v3511
      %v3514 = vshrl.u32 %v3234, 16
      %v3516 = vrot.slane %v3514, 4
      %v3517 = vshll.u32 %v3234, 16
      %v3519 = vrot.slane %v3517, 5
      %v3520 = vor.u32 %v3516, %v3519
      %v3521 = vrot.slane %v3520, 4
      %v3523 = vshll.u32 %v3235, 16
      %v3525 = vrot.slane %v3523, 5
      %v3526 = vsel %vm1431, %v3521, %v3525
      %v3527 = vshrl.u32 %v3235, 16
      %v3529 = vrot.slane %v3527, 4
      %v3530 = vor.u32 %v3529, %v3525
      %v3531 = vrot.slane %v3530, 4
      %v3533 = vshll.u32 %v3236, 16
      %v3535 = vrot.slane %v3533, 5
      %v3536 = vsel %vm1431, %v3531, %v3535
      %v3538 = vshrl.u32 %v3237, 16
      %v3540 = vrot.slane %v3538, 4
      %v3541 = vshll.u32 %v3237, 16
      %v3543 = vrot.slane %v3541, 5
      %v3544 = vor.u32 %v3540, %v3543
      %v3545 = vrot.slane %v3544, 4
      %v3547 = vshll.u32 %v3238, 16
      %v3549 = vrot.slane %v3547, 5
      %v3550 = vsel %vm1431, %v3545, %v3549
      %v3551 = vshrl.u32 %v3238, 16
      %v3553 = vrot.slane %v3551, 4
      %v3554 = vor.u32 %v3553, %v3549
      %v3555 = vrot.slane %v3554, 4
      %v3557 = vshll.u32 %v3239, 16
      %v3559 = vrot.slane %v3557, 5
      %v3560 = vsel %vm1431, %v3555, %v3559
      %v3562 = vshrl.u32 %v3240, 16
      %v3564 = vrot.slane %v3562, 4
      %v3565 = vshll.u32 %v3240, 16
      %v3567 = vrot.slane %v3565, 5
      %v3568 = vor.u32 %v3564, %v3567
      %v3569 = vrot.slane %v3568, 4
      %v3571 = vshll.u32 %v3241, 16
      %v3573 = vrot.slane %v3571, 5
      %v3574 = vsel %vm1431, %v3569, %v3573
      %v3575 = vshrl.u32 %v3241, 16
      %v3577 = vrot.slane %v3575, 4
      %v3578 = vor.u32 %v3577, %v3573
      %v3579 = vrot.slane %v3578, 4
      %v3581 = vshll.u32 %v3242, 16
      %v3583 = vrot.slane %v3581, 5
      %v3584 = vsel %vm1431, %v3579, %v3583
      %v3586 = vshrl.u32 %v3243, 16
      %v3588 = vrot.slane %v3586, 4
      %v3589 = vshll.u32 %v3243, 16
      %v3591 = vrot.slane %v3589, 5
      %v3592 = vor.u32 %v3588, %v3591
      %v3593 = vrot.slane %v3592, 4
      %v3595 = vshll.u32 %v3244, 16
      %v3597 = vrot.slane %v3595, 5
      %v3598 = vsel %vm1431, %v3593, %v3597
      %v3599 = vshrl.u32 %v3244, 16
      %v3601 = vrot.slane %v3599, 4
      %v3602 = vor.u32 %v3601, %v3597
      %v3603 = vrot.slane %v3602, 4
      %v3605 = vshll.u32 %v3245, 16
      %v3607 = vrot.slane %v3605, 5
      %v3608 = vsel %vm1431, %v3603, %v3607
      %v3610 = vshrl.u32 %v3246, 16
      %v3612 = vrot.slane %v3610, 4
      %v3613 = vshll.u32 %v3246, 16
      %v3615 = vrot.slane %v3613, 5
      %v3616 = vor.u32 %v3612, %v3615
      %v3617 = vrot.slane %v3616, 4
      %v3619 = vshll.u32 %v3247, 16
      %v3621 = vrot.slane %v3619, 5
      %v3622 = vsel %vm1431, %v3617, %v3621
      %v3623 = vshrl.u32 %v3247, 16
      %v3625 = vrot.slane %v3623, 4
      %v3626 = vor.u32 %v3625, %v3621
      %v3627 = vrot.slane %v3626, 4
      %v3629 = vshll.u32 %v3248, 16
      %v3631 = vrot.slane %v3629, 5
      %v3632 = vsel %vm1431, %v3627, %v3631
      %s3633 = scalar_lea.vmem %s5, 32
      %v3634 = vld [vmem:[%s3633] sm:$0xf]
      %v3635 = vld [vmem:[%s3633 + $0x4] sm:$0xf]
      %v3636 = vunpack.c.l.b16 %v3262
      %v3637 = vunpack.c.l.b16 %v3272
      %v3638 = vunpack.c.l.b16 %v3286
      %v3639 = vunpack.c.l.b16 %v3296
      %v3640 = vunpack.c.l.b16 %v3310
      %v3641 = vunpack.c.l.b16 %v3320
      %v3642 = vunpack.c.l.b16 %v3334
      %v3643 = vunpack.c.l.b16 %v3344
      %v3644 = vunpack.c.l.b16 %v3358
      %v3645 = vunpack.c.l.b16 %v3368
      %v3646 = vunpack.c.l.b16 %v3382
      %v3647 = vunpack.c.l.b16 %v3392
      %v3648 = vunpack.c.l.b16 %v3406
      %v3649 = vunpack.c.l.b16 %v3416
      %v3650 = vunpack.c.l.b16 %v3430
      %v3651 = vunpack.c.l.b16 %v3440
      %v3652 = vunpack.c.l.b16 %v3454
      %v3653 = vunpack.c.l.b16 %v3464
      %v3654 = vunpack.c.l.b16 %v3478
      %v3655 = vunpack.c.l.b16 %v3488
      %v3656 = vunpack.c.l.b16 %v3502
      %v3657 = vunpack.c.l.b16 %v3512
      %v3658 = vunpack.c.l.b16 %v3526
      %v3659 = vunpack.c.l.b16 %v3536
      %v3660 = vunpack.c.l.b16 %v3550
      %v3661 = vunpack.c.l.b16 %v3560
      %v3662 = vunpack.c.l.b16 %v3574
      %v3663 = vunpack.c.l.b16 %v3584
      %v3664 = vunpack.c.l.b16 %v3598
      %v3665 = vunpack.c.l.b16 %v3608
      %v3666 = vunpack.c.l.b16 %v3622
      %v3667 = vunpack.c.l.b16 %v3632
      %v3668 = vpack.c.b16 %v3637, %v3636
      %v3669 = vpack.c.b16 %v3639, %v3638
      %v3670 = vpack.c.b16 %v3641, %v3640
      %v3671 = vpack.c.b16 %v3643, %v3642
      %v3672 = vpack.c.b16 %v3645, %v3644
      %v3673 = vpack.c.b16 %v3647, %v3646
      %v3674 = vpack.c.b16 %v3649, %v3648
      %v3675 = vpack.c.b16 %v3651, %v3650
      %v3676 = vpack.c.b16 %v3653, %v3652
      %v3677 = vpack.c.b16 %v3655, %v3654
      %v3678 = vpack.c.b16 %v3657, %v3656
      %v3679 = vpack.c.b16 %v3659, %v3658
      %v3680 = vpack.c.b16 %v3661, %v3660
      %v3681 = vpack.c.b16 %v3663, %v3662
      %v3682 = vpack.c.b16 %v3665, %v3664
      %v3683 = vpack.c.b16 %v3667, %v3666
      %v3686 = vunpack.c.l.b16 %v3634
      %v3687 = vunpack.c.l.b16 %v3635
      %v3688 = vpack.c.b16 %v3687, %v3686
      %v3691 = vsel %vm1873, %v3668, 0
      %v3694 = vsel %vm1873, %v3669, 0
      %v3697 = vsel %vm1873, %v3670, 0
      %v3700 = vsel %vm1873, %v3671, 0
      %v3703 = vsel %vm1873, %v3672, 0
      %v3706 = vsel %vm1873, %v3673, 0
      %v3709 = vsel %vm1873, %v3674, 0
      %v3712 = vsel %vm1873, %v3675, 0
      %v3715 = vsel %vm1873, %v3676, 0
      %v3718 = vsel %vm1873, %v3677, 0
      %v3721 = vsel %vm1873, %v3678, 0
      %v3724 = vsel %vm1873, %v3679, 0
      %v3727 = vsel %vm1873, %v3680, 0
      %v3730 = vsel %vm1873, %v3681, 0
      %v3733 = vsel %vm1873, %v3682, 0
      %v3736 = vsel %vm1873, %v3683, 0
      %3738 = vmatprep.subr.bf16.mxu0 0
      %3739 = vmatpush1.bf16.msra.mxu0 %v3688
      %3740 = vmatprep.subr.bf16.mxu0 0
      %3741 = vmatpush1.bf16.msra.mxu0 0
      %3742 = vmatprep.subr.bf16.mxu0 0
      %3743 = vmatpush1.bf16.msra.mxu0 0
      %3744 = vmatprep.subr.bf16.mxu0 0
      %3745 = vmatpush1.bf16.msra.mxu0 0
      %3746 = vmatprep.subr.bf16.mxu0 0
      %3747 = vmatpush1.bf16.msra.mxu0 0
      %3748 = vmatprep.subr.bf16.mxu0 0
      %3749 = vmatpush1.bf16.msra.mxu0 0
      %3750 = vmatprep.subr.bf16.mxu0 0
      %3751 = vmatpush1.bf16.msra.mxu0 0
      %3752 = vmatprep.subr.bf16.mxu0 0
      %3753 = vmatpush1.bf16.msra.mxu0 0
      %3754 = vmatprep.subr.bf16.mxu0 0
      %3755 = vmatpush1.bf16.msra.mxu0 0
      %3756 = vmatprep.subr.bf16.mxu0 0
      %3757 = vmatpush1.bf16.msra.mxu0 0
      %3758 = vmatprep.subr.bf16.mxu0 0
      %3759 = vmatpush1.bf16.msra.mxu0 0
      %3760 = vmatprep.subr.bf16.mxu0 0
      %3761 = vmatpush1.bf16.msra.mxu0 0
      %3762 = vmatprep.subr.bf16.mxu0 0
      %3763 = vmatpush1.bf16.msra.mxu0 0
      %3764 = vmatprep.subr.bf16.mxu0 0
      %3765 = vmatpush1.bf16.msra.mxu0 0
      %3766 = vmatprep.subr.bf16.mxu0 0
      %3767 = vmatpush1.bf16.msra.mxu0 0
      %3768 = vmatprep.subr.bf16.mxu0 0
      %3769 = vmatpush1.bf16.msra.mxu0 0
      %3770 = vmatprep.mubr.bf16.mxu0 0
      %3771 = vmatmul.mubr.bf16.gmra.mrb[0].mxu0 %v3691
      %v3772 = vpop.f32.mrb[0].mxu0
      %v3773 = vadd.f32 0.0, %v3772
      %v3774 = vpop.f32.mrb[0].mxu0
      %v3775 = vpop.f32.mrb[0].mxu0
      %v3776 = vadd.f32 0.0, %v3775
      %v3777 = vpop.f32.mrb[0].mxu0
      %3778 = vmatprep.mubr.bf16.mxu0 0
      %3779 = vmatmul.mubr.bf16.gmra.mrb[0].mxu0 %v3694
      %v3780 = vpop.f32.mrb[0].mxu0
      %v3781 = vadd.f32 0.0, %v3780
      %v3782 = vpop.f32.mrb[0].mxu0
      %v3783 = vpop.f32.mrb[0].mxu0
      %v3784 = vadd.f32 0.0, %v3783
      %v3785 = vpop.f32.mrb[0].mxu0
      %3786 = vmatprep.mubr.bf16.mxu0 0
      %3787 = vmatmul.mubr.bf16.gmra.mrb[0].mxu0 %v3697
      %v3788 = vpop.f32.mrb[0].mxu0
      %v3789 = vadd.f32 0.0, %v3788
      %v3790 = vpop.f32.mrb[0].mxu0
      %v3791 = vpop.f32.mrb[0].mxu0
      %v3792 = vadd.f32 0.0, %v3791
      %v3793 = vpop.f32.mrb[0].mxu0
      %3794 = vmatprep.mubr.bf16.mxu0 0
      %3795 = vmatmul.mubr.bf16.gmra.mrb[0].mxu0 %v3700
      %v3796 = vpop.f32.mrb[0].mxu0
      %v3797 = vadd.f32 0.0, %v3796
      %v3798 = vpop.f32.mrb[0].mxu0
      %v3799 = vpop.f32.mrb[0].mxu0
      %v3800 = vadd.f32 0.0, %v3799
      %v3801 = vpop.f32.mrb[0].mxu0
      %3802 = vmatprep.mubr.bf16.mxu0 0
      %3803 = vmatmul.mubr.bf16.gmra.mrb[0].mxu0 %v3703
      %v3804 = vpop.f32.mrb[0].mxu0
      %v3805 = vadd.f32 0.0, %v3804
      %v3806 = vpop.f32.mrb[0].mxu0
      %v3807 = vpop.f32.mrb[0].mxu0
      %v3808 = vadd.f32 0.0, %v3807
      %v3809 = vpop.f32.mrb[0].mxu0
      %3810 = vmatprep.mubr.bf16.mxu0 0
      %3811 = vmatmul.mubr.bf16.gmra.mrb[0].mxu0 %v3706
      %v3812 = vpop.f32.mrb[0].mxu0
      %v3813 = vadd.f32 0.0, %v3812
      %v3814 = vpop.f32.mrb[0].mxu0
      %v3815 = vpop.f32.mrb[0].mxu0
      %v3816 = vadd.f32 0.0, %v3815
      %v3817 = vpop.f32.mrb[0].mxu0
      %3818 = vmatprep.mubr.bf16.mxu0 0
      %3819 = vmatmul.mubr.bf16.gmra.mrb[0].mxu0 %v3709
      %v3820 = vpop.f32.mrb[0].mxu0
      %v3821 = vadd.f32 0.0, %v3820
      %v3822 = vpop.f32.mrb[0].mxu0
      %v3823 = vpop.f32.mrb[0].mxu0
      %v3824 = vadd.f32 0.0, %v3823
      %v3825 = vpop.f32.mrb[0].mxu0
      %3826 = vmatprep.mubr.bf16.mxu0 0
      %3827 = vmatmul.mubr.bf16.gmra.mrb[0].mxu0 %v3712
      %v3828 = vpop.f32.mrb[0].mxu0
      %v3829 = vadd.f32 0.0, %v3828
      %v3830 = vpop.f32.mrb[0].mxu0
      %v3831 = vpop.f32.mrb[0].mxu0
      %v3832 = vadd.f32 0.0, %v3831
      %v3833 = vpop.f32.mrb[0].mxu0
      %3834 = vmatprep.mubr.bf16.mxu0 0
      %3835 = vmatmul.mubr.bf16.gmra.mrb[0].mxu0 %v3715
      %v3836 = vpop.f32.mrb[0].mxu0
      %v3837 = vadd.f32 0.0, %v3836
      %v3838 = vpop.f32.mrb[0].mxu0
      %v3839 = vpop.f32.mrb[0].mxu0
      %v3840 = vadd.f32 0.0, %v3839
      %v3841 = vpop.f32.mrb[0].mxu0
      %3842 = vmatprep.mubr.bf16.mxu0 0
      %3843 = vmatmul.mubr.bf16.gmra.mrb[0].mxu0 %v3718
      %v3844 = vpop.f32.mrb[0].mxu0
      %v3845 = vadd.f32 0.0, %v3844
      %v3846 = vpop.f32.mrb[0].mxu0
      %v3847 = vpop.f32.mrb[0].mxu0
      %v3848 = vadd.f32 0.0, %v3847
      %v3849 = vpop.f32.mrb[0].mxu0
      %3850 = vmatprep.mubr.bf16.mxu0 0
      %3851 = vmatmul.mubr.bf16.gmra.mrb[0].mxu0 %v3721
      %v3852 = vpop.f32.mrb[0].mxu0
      %v3853 = vadd.f32 0.0, %v3852
      %v3854 = vpop.f32.mrb[0].mxu0
      %v3855 = vpop.f32.mrb[0].mxu0
      %v3856 = vadd.f32 0.0, %v3855
      %v3857 = vpop.f32.mrb[0].mxu0
      %3858 = vmatprep.mubr.bf16.mxu0 0
      %3859 = vmatmul.mubr.bf16.gmra.mrb[0].mxu0 %v3724
      %v3860 = vpop.f32.mrb[0].mxu0
      %v3861 = vadd.f32 0.0, %v3860
      %v3862 = vpop.f32.mrb[0].mxu0
      %v3863 = vpop.f32.mrb[0].mxu0
      %v3864 = vadd.f32 0.0, %v3863
      %v3865 = vpop.f32.mrb[0].mxu0
      %3866 = vmatprep.mubr.bf16.mxu0 0
      %3867 = vmatmul.mubr.bf16.gmra.mrb[0].mxu0 %v3727
      %v3868 = vpop.f32.mrb[0].mxu0
      %v3869 = vadd.f32 0.0, %v3868
      %v3870 = vpop.f32.mrb[0].mxu0
      %v3871 = vpop.f32.mrb[0].mxu0
      %v3872 = vadd.f32 0.0, %v3871
      %v3873 = vpop.f32.mrb[0].mxu0
      %3874 = vmatprep.mubr.bf16.mxu0 0
      %3875 = vmatmul.mubr.bf16.gmra.mrb[0].mxu0 %v3730
      %v3876 = vpop.f32.mrb[0].mxu0
      %v3877 = vadd.f32 0.0, %v3876
      %v3878 = vpop.f32.mrb[0].mxu0
      %v3879 = vpop.f32.mrb[0].mxu0
      %v3880 = vadd.f32 0.0, %v3879
      %v3881 = vpop.f32.mrb[0].mxu0
      %3882 = vmatprep.mubr.bf16.mxu0 0
      %3883 = vmatmul.mubr.bf16.gmra.mrb[0].mxu0 %v3733
      %v3884 = vpop.f32.mrb[0].mxu0
      %v3885 = vadd.f32 0.0, %v3884
      %v3886 = vpop.f32.mrb[0].mxu0
      %v3887 = vpop.f32.mrb[0].mxu0
      %v3888 = vadd.f32 0.0, %v3887
      %v3889 = vpop.f32.mrb[0].mxu0
      %3890 = vmatprep.mubr.bf16.mxu0 0
      %3891 = vmatmul.mubr.bf16.gmra.mrb[0].mxu0 %v3736
      %v3892 = vpop.f32.mrb[0].mxu0
      %v3893 = vadd.f32 0.0, %v3892
      %v3894 = vpop.f32.mrb[0].mxu0
      %v3895 = vpop.f32.mrb[0].mxu0
      %v3896 = vadd.f32 0.0, %v3895
      %v3897 = vpop.f32.mrb[0].mxu0
      %3898 = vdwg.mxu0
      %v3899 = vadd.f32 %v3169, %v3773
      %v3900 = vadd.f32 %v3170, %v3776
      %v3901 = vadd.f32 %v3171, %v3781
      %v3902 = vadd.f32 %v3172, %v3784
      %v3903 = vadd.f32 %v3173, %v3789
      %v3904 = vadd.f32 %v3174, %v3792
      %v3905 = vadd.f32 %v3175, %v3797
      %v3906 = vadd.f32 %v3176, %v3800
      %v3907 = vadd.f32 %v3177, %v3805
      %v3908 = vadd.f32 %v3178, %v3808
      %v3909 = vadd.f32 %v3179, %v3813
      %v3910 = vadd.f32 %v3180, %v3816
      %v3911 = vadd.f32 %v3181, %v3821
      %v3912 = vadd.f32 %v3182, %v3824
      %v3913 = vadd.f32 %v3183, %v3829
      %v3914 = vadd.f32 %v3184, %v3832
      %v3915 = vadd.f32 %v3185, %v3837
      %v3916 = vadd.f32 %v3186, %v3840
      %v3917 = vadd.f32 %v3187, %v3845
      %v3918 = vadd.f32 %v3188, %v3848
      %v3919 = vadd.f32 %v3189, %v3853
      %v3920 = vadd.f32 %v3190, %v3856
      %v3921 = vadd.f32 %v3191, %v3861
      %v3922 = vadd.f32 %v3192, %v3864
      %v3923 = vadd.f32 %v3193, %v3869
      %v3924 = vadd.f32 %v3194, %v3872
      %v3925 = vadd.f32 %v3195, %v3877
      %v3926 = vadd.f32 %v3196, %v3880
      %v3927 = vadd.f32 %v3197, %v3885
      %v3928 = vadd.f32 %v3198, %v3888
      %v3929 = vadd.f32 %v3199, %v3893
      %v3930 = vadd.f32 %v3200, %v3896
      %v3931 = vld [vmem:[%s1264] sm:$0xe]
      %v3932 = vld [vmem:[%s1264 + $0xc] sm:$0xe]
      %v3933 = vld [vmem:[%s1264 + $0x18] sm:$0xe]
      %v3934 = vld [vmem:[%s1264 + $0x24] sm:$0xe]
      %v3935 = vld [vmem:[%s1264 + $0x30] sm:$0xe]
      %v3936 = vld [vmem:[%s1264 + $0x3c] sm:$0xe]
      %v3937 = vld [vmem:[%s1264 + $0x48] sm:$0xe]
      %v3938 = vld [vmem:[%s1264 + $0x54] sm:$0xe]
      %v3939 = vld [vmem:[%s1264 + $0x60] sm:$0xe]
      %v3940 = vld [vmem:[%s1264 + $0x6c] sm:$0xe]
      %v3941 = vld [vmem:[%s1264 + $0x78] sm:$0xe]
      %v3942 = vld [vmem:[%s1264 + $0x84] sm:$0xe]
      %v3943 = vld [vmem:[%s1264 + $0x90] sm:$0xe]
      %v3944 = vld [vmem:[%s1264 + $0x9c] sm:$0xe]
      %v3945 = vld [vmem:[%s1264 + $0xa8] sm:$0xe]
      %v3946 = vld [vmem:[%s1264 + $0xb4] sm:$0xe]
      %v3995 = vrot.slane %v3931, 5
      %v3996 = vrot.slane %v3995, 4
      %v3997 = vrot.slane %v3202, 5
      %v3998 = vsel %vm2428, %v3996, %v3997
      %v3999 = vrot.slane %v3997, 4
      %v4000 = vrot.slane %v3203, 5
      %v4001 = vsel %vm2428, %v3999, %v4000
      %v4002 = vrot.slane %v3932, 5
      %v4003 = vrot.slane %v4002, 4
      %v4004 = vrot.slane %v3205, 5
      %v4005 = vsel %vm2428, %v4003, %v4004
      %v4006 = vrot.slane %v4004, 4
      %v4007 = vrot.slane %v3206, 5
      %v4008 = vsel %vm2428, %v4006, %v4007
      %v4009 = vrot.slane %v3933, 5
      %v4010 = vrot.slane %v4009, 4
      %v4011 = vrot.slane %v3208, 5
      %v4012 = vsel %vm2428, %v4010, %v4011
      %v4013 = vrot.slane %v4011, 4
      %v4014 = vrot.slane %v3209, 5
      %v4015 = vsel %vm2428, %v4013, %v4014
      %v4016 = vrot.slane %v3934, 5
      %v4017 = vrot.slane %v4016, 4
      %v4018 = vrot.slane %v3211, 5
      %v4019 = vsel %vm2428, %v4017, %v4018
      %v4020 = vrot.slane %v4018, 4
      %v4021 = vrot.slane %v3212, 5
      %v4022 = vsel %vm2428, %v4020, %v4021
      %v4023 = vrot.slane %v3935, 5
      %v4024 = vrot.slane %v4023, 4
      %v4025 = vrot.slane %v3214, 5
      %v4026 = vsel %vm2428, %v4024, %v4025
      %v4027 = vrot.slane %v4025, 4
      %v4028 = vrot.slane %v3215, 5
      %v4029 = vsel %vm2428, %v4027, %v4028
      %v4030 = vrot.slane %v3936, 5
      %v4031 = vrot.slane %v4030, 4
      %v4032 = vrot.slane %v3217, 5
      %v4033 = vsel %vm2428, %v4031, %v4032
      %v4034 = vrot.slane %v4032, 4
      %v4035 = vrot.slane %v3218, 5
      %v4036 = vsel %vm2428, %v4034, %v4035
      %v4037 = vrot.slane %v3937, 5
      %v4038 = vrot.slane %v4037, 4
      %v4039 = vrot.slane %v3220, 5
      %v4040 = vsel %vm2428, %v4038, %v4039
      %v4041 = vrot.slane %v4039, 4
      %v4042 = vrot.slane %v3221, 5
      %v4043 = vsel %vm2428, %v4041, %v4042
      %v4044 = vrot.slane %v3938, 5
      %v4045 = vrot.slane %v4044, 4
      %v4046 = vrot.slane %v3223, 5
      %v4047 = vsel %vm2428, %v4045, %v4046
      %v4048 = vrot.slane %v4046, 4
      %v4049 = vrot.slane %v3224, 5
      %v4050 = vsel %vm2428, %v4048, %v4049
      %v4051 = vrot.slane %v3939, 5
      %v4052 = vrot.slane %v4051, 4
      %v4053 = vrot.slane %v3226, 5
      %v4054 = vsel %vm2428, %v4052, %v4053
      %v4055 = vrot.slane %v4053, 4
      %v4056 = vrot.slane %v3227, 5
      %v4057 = vsel %vm2428, %v4055, %v4056
      %v4058 = vrot.slane %v3940, 5
      %v4059 = vrot.slane %v4058, 4
      %v4060 = vrot.slane %v3229, 5
      %v4061 = vsel %vm2428, %v4059, %v4060
      %v4062 = vrot.slane %v4060, 4
      %v4063 = vrot.slane %v3230, 5
      %v4064 = vsel %vm2428, %v4062, %v4063
      %v4065 = vrot.slane %v3941, 5
      %v4066 = vrot.slane %v4065, 4
      %v4067 = vrot.slane %v3232, 5
      %v4068 = vsel %vm2428, %v4066, %v4067
      %v4069 = vrot.slane %v4067, 4
      %v4070 = vrot.slane %v3233, 5
      %v4071 = vsel %vm2428, %v4069, %v4070
      %v4072 = vrot.slane %v3942, 5
      %v4073 = vrot.slane %v4072, 4
      %v4074 = vrot.slane %v3235, 5
      %v4075 = vsel %vm2428, %v4073, %v4074
      %v4076 = vrot.slane %v4074, 4
      %v4077 = vrot.slane %v3236, 5
      %v4078 = vsel %vm2428, %v4076, %v4077
      %v4079 = vrot.slane %v3943, 5
      %v4080 = vrot.slane %v4079, 4
      %v4081 = vrot.slane %v3238, 5
      %v4082 = vsel %vm2428, %v4080, %v4081
      %v4083 = vrot.slane %v4081, 4
      %v4084 = vrot.slane %v3239, 5
      %v4085 = vsel %vm2428, %v4083, %v4084
      %v4086 = vrot.slane %v3944, 5
      %v4087 = vrot.slane %v4086, 4
      %v4088 = vrot.slane %v3241, 5
      %v4089 = vsel %vm2428, %v4087, %v4088
      %v4090 = vrot.slane %v4088, 4
      %v4091 = vrot.slane %v3242, 5
      %v4092 = vsel %vm2428, %v4090, %v4091
      %v4093 = vrot.slane %v3945, 5
      %v4094 = vrot.slane %v4093, 4
      %v4095 = vrot.slane %v3244, 5
      %v4096 = vsel %vm2428, %v4094, %v4095
      %v4097 = vrot.slane %v4095, 4
      %v4098 = vrot.slane %v3245, 5
      %v4099 = vsel %vm2428, %v4097, %v4098
      %v4100 = vrot.slane %v3946, 5
      %v4101 = vrot.slane %v4100, 4
      %v4102 = vrot.slane %v3247, 5
      %v4103 = vsel %vm2428, %v4101, %v4102
      %v4104 = vrot.slane %v4102, 4
      %v4105 = vrot.slane %v3248, 5
      %v4106 = vsel %vm2428, %v4104, %v4105
      %s4107 = scalar_lea.vmem %s5, 40
      %v4108 = vld [vmem:[%s4107] sm:$0xf]
      %v4109 = vld [vmem:[%s4107 + $0x4] sm:$0xf]
      %v4110 = vunpack.c.l.b16 %v3998
      %v4111 = vunpack.c.l.b16 %v4001
      %v4112 = vunpack.c.l.b16 %v4005
      %v4113 = vunpack.c.l.b16 %v4008
      %v4114 = vunpack.c.l.b16 %v4012
      %v4115 = vunpack.c.l.b16 %v4015
      %v4116 = vunpack.c.l.b16 %v4019
      %v4117 = vunpack.c.l.b16 %v4022
      %v4118 = vunpack.c.l.b16 %v4026
      %v4119 = vunpack.c.l.b16 %v4029
      %v4120 = vunpack.c.l.b16 %v4033
      %v4121 = vunpack.c.l.b16 %v4036
      %v4122 = vunpack.c.l.b16 %v4040
      %v4123 = vunpack.c.l.b16 %v4043
      %v4124 = vunpack.c.l.b16 %v4047
      %v4125 = vunpack.c.l.b16 %v4050
      %v4126 = vunpack.c.l.b16 %v4054
      %v4127 = vunpack.c.l.b16 %v4057
      %v4128 = vunpack.c.l.b16 %v4061
      %v4129 = vunpack.c.l.b16 %v4064
      %v4130 = vunpack.c.l.b16 %v4068
      %v4131 = vunpack.c.l.b16 %v4071
      %v4132 = vunpack.c.l.b16 %v4075
      %v4133 = vunpack.c.l.b16 %v4078
      %v4134 = vunpack.c.l.b16 %v4082
      %v4135 = vunpack.c.l.b16 %v4085
      %v4136 = vunpack.c.l.b16 %v4089
      %v4137 = vunpack.c.l.b16 %v4092
      %v4138 = vunpack.c.l.b16 %v4096
      %v4139 = vunpack.c.l.b16 %v4099
      %v4140 = vunpack.c.l.b16 %v4103
      %v4141 = vunpack.c.l.b16 %v4106
      %v4142 = vpack.c.b16 %v4111, %v4110
      %v4143 = vpack.c.b16 %v4113, %v4112
      %v4144 = vpack.c.b16 %v4115, %v4114
      %v4145 = vpack.c.b16 %v4117, %v4116
      %v4146 = vpack.c.b16 %v4119, %v4118
      %v4147 = vpack.c.b16 %v4121, %v4120
      %v4148 = vpack.c.b16 %v4123, %v4122
      %v4149 = vpack.c.b16 %v4125, %v4124
      %v4150 = vpack.c.b16 %v4127, %v4126
      %v4151 = vpack.c.b16 %v4129, %v4128
      %v4152 = vpack.c.b16 %v4131, %v4130
      %v4153 = vpack.c.b16 %v4133, %v4132
      %v4154 = vpack.c.b16 %v4135, %v4134
      %v4155 = vpack.c.b16 %v4137, %v4136
      %v4156 = vpack.c.b16 %v4139, %v4138
      %v4157 = vpack.c.b16 %v4141, %v4140
      %v4160 = vunpack.c.l.b16 %v4108
      %v4161 = vunpack.c.l.b16 %v4109
      %v4162 = vpack.c.b16 %v4161, %v4160
      %v4165 = vsel %vm1873, %v4142, 0
      %v4168 = vsel %vm1873, %v4143, 0
      %v4171 = vsel %vm1873, %v4144, 0
      %v4174 = vsel %vm1873, %v4145, 0
      %v4177 = vsel %vm1873, %v4146, 0
      %v4180 = vsel %vm1873, %v4147, 0
      %v4183 = vsel %vm1873, %v4148, 0
      %v4186 = vsel %vm1873, %v4149, 0
      %v4189 = vsel %vm1873, %v4150, 0
      %v4192 = vsel %vm1873, %v4151, 0
      %v4195 = vsel %vm1873, %v4152, 0
      %v4198 = vsel %vm1873, %v4153, 0
      %v4201 = vsel %vm1873, %v4154, 0
      %v4204 = vsel %vm1873, %v4155, 0
      %v4207 = vsel %vm1873, %v4156, 0
      %v4210 = vsel %vm1873, %v4157, 0
      %4212 = vmatprep.subr.bf16.mxu0 0
      %4213 = vmatpush1.bf16.msra.mxu0 %v4162
      %4214 = vmatprep.subr.bf16.mxu0 0
      %4215 = vmatpush1.bf16.msra.mxu0 0
      %4216 = vmatprep.subr.bf16.mxu0 0
      %4217 = vmatpush1.bf16.msra.mxu0 0
      %4218 = vmatprep.subr.bf16.mxu0 0
      %4219 = vmatpush1.bf16.msra.mxu0 0
      %4220 = vmatprep.subr.bf16.mxu0 0
      %4221 = vmatpush1.bf16.msra.mxu0 0
      %4222 = vmatprep.subr.bf16.mxu0 0
      %4223 = vmatpush1.bf16.msra.mxu0 0
      %4224 = vmatprep.subr.bf16.mxu0 0
      %4225 = vmatpush1.bf16.msra.mxu0 0
      %4226 = vmatprep.subr.bf16.mxu0 0
      %4227 = vmatpush1.bf16.msra.mxu0 0
      %4228 = vmatprep.subr.bf16.mxu0 0
      %4229 = vmatpush1.bf16.msra.mxu0 0
      %4230 = vmatprep.subr.bf16.mxu0 0
      %4231 = vmatpush1.bf16.msra.mxu0 0
      %4232 = vmatprep.subr.bf16.mxu0 0
      %4233 = vmatpush1.bf16.msra.mxu0 0
      %4234 = vmatprep.subr.bf16.mxu0 0
      %4235 = vmatpush1.bf16.msra.mxu0 0
      %4236 = vmatprep.subr.bf16.mxu0 0
      %4237 = vmatpush1.bf16.msra.mxu0 0
      %4238 = vmatprep.subr.bf16.mxu0 0
      %4239 = vmatpush1.bf16.msra.mxu0 0
      %4240 = vmatprep.subr.bf16.mxu0 0
      %4241 = vmatpush1.bf16.msra.mxu0 0
      %4242 = vmatprep.subr.bf16.mxu0 0
      %4243 = vmatpush1.bf16.msra.mxu0 0
      %4244 = vmatprep.mubr.bf16.mxu0 0
      %4245 = vmatmul.mubr.bf16.gmra.mrb[0].mxu0 %v4165
      %v4246 = vpop.f32.mrb[0].mxu0
      %v4247 = vadd.f32 0.0, %v4246
      %v4248 = vpop.f32.mrb[0].mxu0
      %v4249 = vpop.f32.mrb[0].mxu0
      %v4250 = vadd.f32 0.0, %v4249
      %v4251 = vpop.f32.mrb[0].mxu0
      %4252 = vmatprep.mubr.bf16.mxu0 0
      %4253 = vmatmul.mubr.bf16.gmra.mrb[0].mxu0 %v4168
      %v4254 = vpop.f32.mrb[0].mxu0
      %v4255 = vadd.f32 0.0, %v4254
      %v4256 = vpop.f32.mrb[0].mxu0
      %v4257 = vpop.f32.mrb[0].mxu0
      %v4258 = vadd.f32 0.0, %v4257
      %v4259 = vpop.f32.mrb[0].mxu0
      %4260 = vmatprep.mubr.bf16.mxu0 0
      %4261 = vmatmul.mubr.bf16.gmra.mrb[0].mxu0 %v4171
      %v4262 = vpop.f32.mrb[0].mxu0
      %v4263 = vadd.f32 0.0, %v4262
      %v4264 = vpop.f32.mrb[0].mxu0
      %v4265 = vpop.f32.mrb[0].mxu0
      %v4266 = vadd.f32 0.0, %v4265
      %v4267 = vpop.f32.mrb[0].mxu0
      %4268 = vmatprep.mubr.bf16.mxu0 0
      %4269 = vmatmul.mubr.bf16.gmra.mrb[0].mxu0 %v4174
      %v4270 = vpop.f32.mrb[0].mxu0
      %v4271 = vadd.f32 0.0, %v4270
      %v4272 = vpop.f32.mrb[0].mxu0
      %v4273 = vpop.f32.mrb[0].mxu0
      %v4274 = vadd.f32 0.0, %v4273
      %v4275 = vpop.f32.mrb[0].mxu0
      %4276 = vmatprep.mubr.bf16.mxu0 0
      %4277 = vmatmul.mubr.bf16.gmra.mrb[0].mxu0 %v4177
      %v4278 = vpop.f32.mrb[0].mxu0
      %v4279 = vadd.f32 0.0, %v4278
      %v4280 = vpop.f32.mrb[0].mxu0
      %v4281 = vpop.f32.mrb[0].mxu0
      %v4282 = vadd.f32 0.0, %v4281
      %v4283 = vpop.f32.mrb[0].mxu0
      %4284 = vmatprep.mubr.bf16.mxu0 0
      %4285 = vmatmul.mubr.bf16.gmra.mrb[0].mxu0 %v4180
      %v4286 = vpop.f32.mrb[0].mxu0
      %v4287 = vadd.f32 0.0, %v4286
      %v4288 = vpop.f32.mrb[0].mxu0
      %v4289 = vpop.f32.mrb[0].mxu0
      %v4290 = vadd.f32 0.0, %v4289
      %v4291 = vpop.f32.mrb[0].mxu0
      %4292 = vmatprep.mubr.bf16.mxu0 0
      %4293 = vmatmul.mubr.bf16.gmra.mrb[0].mxu0 %v4183
      %v4294 = vpop.f32.mrb[0].mxu0
      %v4295 = vadd.f32 0.0, %v4294
      %v4296 = vpop.f32.mrb[0].mxu0
      %v4297 = vpop.f32.mrb[0].mxu0
      %v4298 = vadd.f32 0.0, %v4297
      %v4299 = vpop.f32.mrb[0].mxu0
      %4300 = vmatprep.mubr.bf16.mxu0 0
      %4301 = vmatmul.mubr.bf16.gmra.mrb[0].mxu0 %v4186
      %v4302 = vpop.f32.mrb[0].mxu0
      %v4303 = vadd.f32 0.0, %v4302
      %v4304 = vpop.f32.mrb[0].mxu0
      %v4305 = vpop.f32.mrb[0].mxu0
      %v4306 = vadd.f32 0.0, %v4305
      %v4307 = vpop.f32.mrb[0].mxu0
      %4308 = vmatprep.mubr.bf16.mxu0 0
      %4309 = vmatmul.mubr.bf16.gmra.mrb[0].mxu0 %v4189
      %v4310 = vpop.f32.mrb[0].mxu0
      %v4311 = vadd.f32 0.0, %v4310
      %v4312 = vpop.f32.mrb[0].mxu0
      %v4313 = vpop.f32.mrb[0].mxu0
      %v4314 = vadd.f32 0.0, %v4313
      %v4315 = vpop.f32.mrb[0].mxu0
      %4316 = vmatprep.mubr.bf16.mxu0 0
      %4317 = vmatmul.mubr.bf16.gmra.mrb[0].mxu0 %v4192
      %v4318 = vpop.f32.mrb[0].mxu0
      %v4319 = vadd.f32 0.0, %v4318
      %v4320 = vpop.f32.mrb[0].mxu0
      %v4321 = vpop.f32.mrb[0].mxu0
      %v4322 = vadd.f32 0.0, %v4321
      %v4323 = vpop.f32.mrb[0].mxu0
      %4324 = vmatprep.mubr.bf16.mxu0 0
      %4325 = vmatmul.mubr.bf16.gmra.mrb[0].mxu0 %v4195
      %v4326 = vpop.f32.mrb[0].mxu0
      %v4327 = vadd.f32 0.0, %v4326
      %v4328 = vpop.f32.mrb[0].mxu0
      %v4329 = vpop.f32.mrb[0].mxu0
      %v4330 = vadd.f32 0.0, %v4329
      %v4331 = vpop.f32.mrb[0].mxu0
      %4332 = vmatprep.mubr.bf16.mxu0 0
      %4333 = vmatmul.mubr.bf16.gmra.mrb[0].mxu0 %v4198
      %v4334 = vpop.f32.mrb[0].mxu0
      %v4335 = vadd.f32 0.0, %v4334
      %v4336 = vpop.f32.mrb[0].mxu0
      %v4337 = vpop.f32.mrb[0].mxu0
      %v4338 = vadd.f32 0.0, %v4337
      %v4339 = vpop.f32.mrb[0].mxu0
      %4340 = vmatprep.mubr.bf16.mxu0 0
      %4341 = vmatmul.mubr.bf16.gmra.mrb[0].mxu0 %v4201
      %v4342 = vpop.f32.mrb[0].mxu0
      %v4343 = vadd.f32 0.0, %v4342
      %v4344 = vpop.f32.mrb[0].mxu0
      %v4345 = vpop.f32.mrb[0].mxu0
      %v4346 = vadd.f32 0.0, %v4345
      %v4347 = vpop.f32.mrb[0].mxu0
      %4348 = vmatprep.mubr.bf16.mxu0 0
      %4349 = vmatmul.mubr.bf16.gmra.mrb[0].mxu0 %v4204
      %v4350 = vpop.f32.mrb[0].mxu0
      %v4351 = vadd.f32 0.0, %v4350
      %v4352 = vpop.f32.mrb[0].mxu0
      %v4353 = vpop.f32.mrb[0].mxu0
      %v4354 = vadd.f32 0.0, %v4353
      %v4355 = vpop.f32.mrb[0].mxu0
      %4356 = vmatprep.mubr.bf16.mxu0 0
      %4357 = vmatmul.mubr.bf16.gmra.mrb[0].mxu0 %v4207
      %v4358 = vpop.f32.mrb[0].mxu0
      %v4359 = vadd.f32 0.0, %v4358
      %v4360 = vpop.f32.mrb[0].mxu0
      %v4361 = vpop.f32.mrb[0].mxu0
      %v4362 = vadd.f32 0.0, %v4361
      %v4363 = vpop.f32.mrb[0].mxu0
      %4364 = vmatprep.mubr.bf16.mxu0 0
      %4365 = vmatmul.mubr.bf16.gmra.mrb[0].mxu0 %v4210
      %v4366 = vpop.f32.mrb[0].mxu0
      %v4367 = vadd.f32 0.0, %v4366
      %v4368 = vpop.f32.mrb[0].mxu0
      %v4369 = vpop.f32.mrb[0].mxu0
      %v4370 = vadd.f32 0.0, %v4369
      %v4371 = vpop.f32.mrb[0].mxu0
      %4372 = vdwg.mxu0
      %v4373 = vadd.f32 %v3899, %v4247
      %v4374 = vadd.f32 %v3900, %v4250
      %v4375 = vadd.f32 %v3901, %v4255
      %v4376 = vadd.f32 %v3902, %v4258
      %v4377 = vadd.f32 %v3903, %v4263
      %v4378 = vadd.f32 %v3904, %v4266
      %v4379 = vadd.f32 %v3905, %v4271
      %v4380 = vadd.f32 %v3906, %v4274
      %v4381 = vadd.f32 %v3907, %v4279
      %v4382 = vadd.f32 %v3908, %v4282
      %v4383 = vadd.f32 %v3909, %v4287
      %v4384 = vadd.f32 %v3910, %v4290
      %v4385 = vadd.f32 %v3911, %v4295
      %v4386 = vadd.f32 %v3912, %v4298
      %v4387 = vadd.f32 %v3913, %v4303
      %v4388 = vadd.f32 %v3914, %v4306
      %v4389 = vadd.f32 %v3915, %v4311
      %v4390 = vadd.f32 %v3916, %v4314
      %v4391 = vadd.f32 %v3917, %v4319
      %v4392 = vadd.f32 %v3918, %v4322
      %v4393 = vadd.f32 %v3919, %v4327
      %v4394 = vadd.f32 %v3920, %v4330
      %v4395 = vadd.f32 %v3921, %v4335
      %v4396 = vadd.f32 %v3922, %v4338
      %v4397 = vadd.f32 %v3923, %v4343
      %v4398 = vadd.f32 %v3924, %v4346
      %v4399 = vadd.f32 %v3925, %v4351
      %v4400 = vadd.f32 %v3926, %v4354
      %v4401 = vadd.f32 %v3927, %v4359
      %v4402 = vadd.f32 %v3928, %v4362
      %v4403 = vadd.f32 %v3929, %v4367
      %v4404 = vadd.f32 %v3930, %v4370
      %s4405 = scalar_lea.vmem [#allocation2], 24
      %v4406 = vld [vmem:[%s4405] sm:$0xf]
      %v4407 = vld [vmem:[%s4405 + $0x4] sm:$0xf]
      %v4408 = vld [vmem:[%s4405 + $0xc] sm:$0xf]
      %v4409 = vld [vmem:[%s4405 + $0x10] sm:$0xf]
      %v4410 = vld [vmem:[%s4405 + $0x18] sm:$0xf]
      %v4411 = vld [vmem:[%s4405 + $0x1c] sm:$0xf]
      %v4412 = vld [vmem:[%s4405 + $0x24] sm:$0xf]
      %v4413 = vld [vmem:[%s4405 + $0x28] sm:$0xf]
      %v4414 = vld [vmem:[%s4405 + $0x30] sm:$0xf]
      %v4415 = vld [vmem:[%s4405 + $0x34] sm:$0xf]
      %v4416 = vld [vmem:[%s4405 + $0x3c] sm:$0xf]
      %v4417 = vld [vmem:[%s4405 + $0x40] sm:$0xf]
      %v4418 = vld [vmem:[%s4405 + $0x48] sm:$0xf]
      %v4419 = vld [vmem:[%s4405 + $0x4c] sm:$0xf]
      %v4420 = vld [vmem:[%s4405 + $0x54] sm:$0xf]
      %v4421 = vld [vmem:[%s4405 + $0x58] sm:$0xf]
      %v4422 = vld [vmem:[%s4405 + $0x60] sm:$0xf]
      %v4423 = vld [vmem:[%s4405 + $0x64] sm:$0xf]
      %v4424 = vld [vmem:[%s4405 + $0x6c] sm:$0xf]
      %v4425 = vld [vmem:[%s4405 + $0x70] sm:$0xf]
      %v4426 = vld [vmem:[%s4405 + $0x78] sm:$0xf]
      %v4427 = vld [vmem:[%s4405 + $0x7c] sm:$0xf]
      %v4428 = vld [vmem:[%s4405 + $0x84] sm:$0xf]
      %v4429 = vld [vmem:[%s4405 + $0x88] sm:$0xf]
      %v4430 = vld [vmem:[%s4405 + $0x90] sm:$0xf]
      %v4431 = vld [vmem:[%s4405 + $0x94] sm:$0xf]
      %v4432 = vld [vmem:[%s4405 + $0x9c] sm:$0xf]
      %v4433 = vld [vmem:[%s4405 + $0xa0] sm:$0xf]
      %v4434 = vld [vmem:[%s4405 + $0xa8] sm:$0xf]
      %v4435 = vld [vmem:[%s4405 + $0xac] sm:$0xf]
      %v4436 = vld [vmem:[%s4405 + $0xb4] sm:$0xf]
      %v4437 = vld [vmem:[%s4405 + $0xb8] sm:$0xf]
      %s4438 = scalar_lea.vmem %s5, 48
      %v4439 = vld [vmem:[%s4438] sm:$0xf]
      %v4440 = vld [vmem:[%s4438 + $0x4] sm:$0xf]
      %v4473 = vunpack.c.l.b16 %v4406
      %v4474 = vunpack.c.l.b16 %v4407
      %v4475 = vunpack.c.l.b16 %v4408
      %v4476 = vunpack.c.l.b16 %v4409
      %v4477 = vunpack.c.l.b16 %v4410
      %v4478 = vunpack.c.l.b16 %v4411
      %v4479 = vunpack.c.l.b16 %v4412
      %v4480 = vunpack.c.l.b16 %v4413
      %v4481 = vunpack.c.l.b16 %v4414
      %v4482 = vunpack.c.l.b16 %v4415
      %v4483 = vunpack.c.l.b16 %v4416
      %v4484 = vunpack.c.l.b16 %v4417
      %v4485 = vunpack.c.l.b16 %v4418
      %v4486 = vunpack.c.l.b16 %v4419
      %v4487 = vunpack.c.l.b16 %v4420
      %v4488 = vunpack.c.l.b16 %v4421
      %v4489 = vunpack.c.l.b16 %v4422
      %v4490 = vunpack.c.l.b16 %v4423
      %v4491 = vunpack.c.l.b16 %v4424
      %v4492 = vunpack.c.l.b16 %v4425
      %v4493 = vunpack.c.l.b16 %v4426
      %v4494 = vunpack.c.l.b16 %v4427
      %v4495 = vunpack.c.l.b16 %v4428
      %v4496 = vunpack.c.l.b16 %v4429
      %v4497 = vunpack.c.l.b16 %v4430
      %v4498 = vunpack.c.l.b16 %v4431
      %v4499 = vunpack.c.l.b16 %v4432
      %v4500 = vunpack.c.l.b16 %v4433
      %v4501 = vunpack.c.l.b16 %v4434
      %v4502 = vunpack.c.l.b16 %v4435
      %v4503 = vunpack.c.l.b16 %v4436
      %v4504 = vunpack.c.l.b16 %v4437
      %v4505 = vpack.c.b16 %v4474, %v4473
      %v4506 = vpack.c.b16 %v4476, %v4475
      %v4507 = vpack.c.b16 %v4478, %v4477
      %v4508 = vpack.c.b16 %v4480, %v4479
      %v4509 = vpack.c.b16 %v4482, %v4481
      %v4510 = vpack.c.b16 %v4484, %v4483
      %v4511 = vpack.c.b16 %v4486, %v4485
      %v4512 = vpack.c.b16 %v4488, %v4487
      %v4513 = vpack.c.b16 %v4490, %v4489
      %v4514 = vpack.c.b16 %v4492, %v4491
      %v4515 = vpack.c.b16 %v4494, %v4493
      %v4516 = vpack.c.b16 %v4496, %v4495
      %v4517 = vpack.c.b16 %v4498, %v4497
      %v4518 = vpack.c.b16 %v4500, %v4499
      %v4519 = vpack.c.b16 %v4502, %v4501
      %v4520 = vpack.c.b16 %v4504, %v4503
      %v4523 = vunpack.c.l.b16 %v4439
      %v4524 = vunpack.c.l.b16 %v4440
      %v4525 = vpack.c.b16 %v4524, %v4523
      %v4528 = vsel %vm1873, %v4505, 0
      %v4531 = vsel %vm1873, %v4506, 0
      %v4534 = vsel %vm1873, %v4507, 0
      %v4537 = vsel %vm1873, %v4508, 0
      %v4540 = vsel %vm1873, %v4509, 0
      %v4543 = vsel %vm1873, %v4510, 0
      %v4546 = vsel %vm1873, %v4511, 0
      %v4549 = vsel %vm1873, %v4512, 0
      %v4552 = vsel %vm1873, %v4513, 0
      %v4555 = vsel %vm1873, %v4514, 0
      %v4558 = vsel %vm1873, %v4515, 0
      %v4561 = vsel %vm1873, %v4516, 0
      %v4564 = vsel %vm1873, %v4517, 0
      %v4567 = vsel %vm1873, %v4518, 0
      %v4570 = vsel %vm1873, %v4519, 0
      %v4573 = vsel %vm1873, %v4520, 0
      %4575 = vmatprep.subr.bf16.mxu0 0
      %4576 = vmatpush1.bf16.msra.mxu0 %v4525
      %4577 = vmatprep.subr.bf16.mxu0 0
      %4578 = vmatpush1.bf16.msra.mxu0 0
      %4579 = vmatprep.subr.bf16.mxu0 0
      %4580 = vmatpush1.bf16.msra.mxu0 0
      %4581 = vmatprep.subr.bf16.mxu0 0
      %4582 = vmatpush1.bf16.msra.mxu0 0
      %4583 = vmatprep.subr.bf16.mxu0 0
      %4584 = vmatpush1.bf16.msra.mxu0 0
      %4585 = vmatprep.subr.bf16.mxu0 0
      %4586 = vmatpush1.bf16.msra.mxu0 0
      %4587 = vmatprep.subr.bf16.mxu0 0
      %4588 = vmatpush1.bf16.msra.mxu0 0
      %4589 = vmatprep.subr.bf16.mxu0 0
      %4590 = vmatpush1.bf16.msra.mxu0 0
      %4591 = vmatprep.subr.bf16.mxu0 0
      %4592 = vmatpush1.bf16.msra.mxu0 0
      %4593 = vmatprep.subr.bf16.mxu0 0
      %4594 = vmatpush1.bf16.msra.mxu0 0
      %4595 = vmatprep.subr.bf16.mxu0 0
      %4596 = vmatpush1.bf16.msra.mxu0 0
      %4597 = vmatprep.subr.bf16.mxu0 0
      %4598 = vmatpush1.bf16.msra.mxu0 0
      %4599 = vmatprep.subr.bf16.mxu0 0
      %4600 = vmatpush1.bf16.msra.mxu0 0
      %4601 = vmatprep.subr.bf16.mxu0 0
      %4602 = vmatpush1.bf16.msra.mxu0 0
      %4603 = vmatprep.subr.bf16.mxu0 0
      %4604 = vmatpush1.bf16.msra.mxu0 0
      %4605 = vmatprep.subr.bf16.mxu0 0
      %4606 = vmatpush1.bf16.msra.mxu0 0
      %4607 = vmatprep.mubr.bf16.mxu0 0
      %4608 = vmatmul.mubr.bf16.gmra.mrb[0].mxu0 %v4528
      %v4609 = vpop.f32.mrb[0].mxu0
      %v4610 = vadd.f32 0.0, %v4609
      %v4611 = vpop.f32.mrb[0].mxu0
      %v4612 = vpop.f32.mrb[0].mxu0
      %v4613 = vadd.f32 0.0, %v4612
      %v4614 = vpop.f32.mrb[0].mxu0
      %4615 = vmatprep.mubr.bf16.mxu0 0
      %4616 = vmatmul.mubr.bf16.gmra.mrb[0].mxu0 %v4531
      %v4617 = vpop.f32.mrb[0].mxu0
      %v4618 = vadd.f32 0.0, %v4617
      %v4619 = vpop.f32.mrb[0].mxu0
      %v4620 = vpop.f32.mrb[0].mxu0
      %v4621 = vadd.f32 0.0, %v4620
      %v4622 = vpop.f32.mrb[0].mxu0
      %4623 = vmatprep.mubr.bf16.mxu0 0
      %4624 = vmatmul.mubr.bf16.gmra.mrb[0].mxu0 %v4534
      %v4625 = vpop.f32.mrb[0].mxu0
      %v4626 = vadd.f32 0.0, %v4625
      %v4627 = vpop.f32.mrb[0].mxu0
      %v4628 = vpop.f32.mrb[0].mxu0
      %v4629 = vadd.f32 0.0, %v4628
      %v4630 = vpop.f32.mrb[0].mxu0
      %4631 = vmatprep.mubr.bf16.mxu0 0
      %4632 = vmatmul.mubr.bf16.gmra.mrb[0].mxu0 %v4537
      %v4633 = vpop.f32.mrb[0].mxu0
      %v4634 = vadd.f32 0.0, %v4633
      %v4635 = vpop.f32.mrb[0].mxu0
      %v4636 = vpop.f32.mrb[0].mxu0
      %v4637 = vadd.f32 0.0, %v4636
      %v4638 = vpop.f32.mrb[0].mxu0
      %4639 = vmatprep.mubr.bf16.mxu0 0
      %4640 = vmatmul.mubr.bf16.gmra.mrb[0].mxu0 %v4540
      %v4641 = vpop.f32.mrb[0].mxu0
      %v4642 = vadd.f32 0.0, %v4641
      %v4643 = vpop.f32.mrb[0].mxu0
      %v4644 = vpop.f32.mrb[0].mxu0
      %v4645 = vadd.f32 0.0, %v4644
      %v4646 = vpop.f32.mrb[0].mxu0
      %4647 = vmatprep.mubr.bf16.mxu0 0
      %4648 = vmatmul.mubr.bf16.gmra.mrb[0].mxu0 %v4543
      %v4649 = vpop.f32.mrb[0].mxu0
      %v4650 = vadd.f32 0.0, %v4649
      %v4651 = vpop.f32.mrb[0].mxu0
      %v4652 = vpop.f32.mrb[0].mxu0
      %v4653 = vadd.f32 0.0, %v4652
      %v4654 = vpop.f32.mrb[0].mxu0
      %4655 = vmatprep.mubr.bf16.mxu0 0
      %4656 = vmatmul.mubr.bf16.gmra.mrb[0].mxu0 %v4546
      %v4657 = vpop.f32.mrb[0].mxu0
      %v4658 = vadd.f32 0.0, %v4657
      %v4659 = vpop.f32.mrb[0].mxu0
      %v4660 = vpop.f32.mrb[0].mxu0
      %v4661 = vadd.f32 0.0, %v4660
      %v4662 = vpop.f32.mrb[0].mxu0
      %4663 = vmatprep.mubr.bf16.mxu0 0
      %4664 = vmatmul.mubr.bf16.gmra.mrb[0].mxu0 %v4549
      %v4665 = vpop.f32.mrb[0].mxu0
      %v4666 = vadd.f32 0.0, %v4665
      %v4667 = vpop.f32.mrb[0].mxu0
      %v4668 = vpop.f32.mrb[0].mxu0
      %v4669 = vadd.f32 0.0, %v4668
      %v4670 = vpop.f32.mrb[0].mxu0
      %4671 = vmatprep.mubr.bf16.mxu0 0
      %4672 = vmatmul.mubr.bf16.gmra.mrb[0].mxu0 %v4552
      %v4673 = vpop.f32.mrb[0].mxu0
      %v4674 = vadd.f32 0.0, %v4673
      %v4675 = vpop.f32.mrb[0].mxu0
      %v4676 = vpop.f32.mrb[0].mxu0
      %v4677 = vadd.f32 0.0, %v4676
      %v4678 = vpop.f32.mrb[0].mxu0
      %4679 = vmatprep.mubr.bf16.mxu0 0
      %4680 = vmatmul.mubr.bf16.gmra.mrb[0].mxu0 %v4555
      %v4681 = vpop.f32.mrb[0].mxu0
      %v4682 = vadd.f32 0.0, %v4681
      %v4683 = vpop.f32.mrb[0].mxu0
      %v4684 = vpop.f32.mrb[0].mxu0
      %v4685 = vadd.f32 0.0, %v4684
      %v4686 = vpop.f32.mrb[0].mxu0
      %4687 = vmatprep.mubr.bf16.mxu0 0
      %4688 = vmatmul.mubr.bf16.gmra.mrb[0].mxu0 %v4558
      %v4689 = vpop.f32.mrb[0].mxu0
      %v4690 = vadd.f32 0.0, %v4689
      %v4691 = vpop.f32.mrb[0].mxu0
      %v4692 = vpop.f32.mrb[0].mxu0
      %v4693 = vadd.f32 0.0, %v4692
      %v4694 = vpop.f32.mrb[0].mxu0
      %4695 = vmatprep.mubr.bf16.mxu0 0
      %4696 = vmatmul.mubr.bf16.gmra.mrb[0].mxu0 %v4561
      %v4697 = vpop.f32.mrb[0].mxu0
      %v4698 = vadd.f32 0.0, %v4697
      %v4699 = vpop.f32.mrb[0].mxu0
      %v4700 = vpop.f32.mrb[0].mxu0
      %v4701 = vadd.f32 0.0, %v4700
      %v4702 = vpop.f32.mrb[0].mxu0
      %4703 = vmatprep.mubr.bf16.mxu0 0
      %4704 = vmatmul.mubr.bf16.gmra.mrb[0].mxu0 %v4564
      %v4705 = vpop.f32.mrb[0].mxu0
      %v4706 = vadd.f32 0.0, %v4705
      %v4707 = vpop.f32.mrb[0].mxu0
      %v4708 = vpop.f32.mrb[0].mxu0
      %v4709 = vadd.f32 0.0, %v4708
      %v4710 = vpop.f32.mrb[0].mxu0
      %4711 = vmatprep.mubr.bf16.mxu0 0
      %4712 = vmatmul.mubr.bf16.gmra.mrb[0].mxu0 %v4567
      %v4713 = vpop.f32.mrb[0].mxu0
      %v4714 = vadd.f32 0.0, %v4713
      %v4715 = vpop.f32.mrb[0].mxu0
      %v4716 = vpop.f32.mrb[0].mxu0
      %v4717 = vadd.f32 0.0, %v4716
      %v4718 = vpop.f32.mrb[0].mxu0
      %4719 = vmatprep.mubr.bf16.mxu0 0
      %4720 = vmatmul.mubr.bf16.gmra.mrb[0].mxu0 %v4570
      %v4721 = vpop.f32.mrb[0].mxu0
      %v4722 = vadd.f32 0.0, %v4721
      %v4723 = vpop.f32.mrb[0].mxu0
      %v4724 = vpop.f32.mrb[0].mxu0
      %v4725 = vadd.f32 0.0, %v4724
      %v4726 = vpop.f32.mrb[0].mxu0
      %4727 = vmatprep.mubr.bf16.mxu0 0
      %4728 = vmatmul.mubr.bf16.gmra.mrb[0].mxu0 %v4573
      %v4729 = vpop.f32.mrb[0].mxu0
      %v4730 = vadd.f32 0.0, %v4729
      %v4731 = vpop.f32.mrb[0].mxu0
      %v4732 = vpop.f32.mrb[0].mxu0
      %v4733 = vadd.f32 0.0, %v4732
      %v4734 = vpop.f32.mrb[0].mxu0
      %4735 = vdwg.mxu0
      %v4736 = vadd.f32 %v4373, %v4610
      %v4737 = vadd.f32 %v4374, %v4613
      %v4738 = vadd.f32 %v4375, %v4618
      %v4739 = vadd.f32 %v4376, %v4621
      %v4740 = vadd.f32 %v4377, %v4626
      %v4741 = vadd.f32 %v4378, %v4629
      %v4742 = vadd.f32 %v4379, %v4634
      %v4743 = vadd.f32 %v4380, %v4637
      %v4744 = vadd.f32 %v4381, %v4642
      %v4745 = vadd.f32 %v4382, %v4645
      %v4746 = vadd.f32 %v4383, %v4650
      %v4747 = vadd.f32 %v4384, %v4653
      %v4748 = vadd.f32 %v4385, %v4658
      %v4749 = vadd.f32 %v4386, %v4661
      %v4750 = vadd.f32 %v4387, %v4666
      %v4751 = vadd.f32 %v4388, %v4669
      %v4752 = vadd.f32 %v4389, %v4674
      %v4753 = vadd.f32 %v4390, %v4677
      %v4754 = vadd.f32 %v4391, %v4682
      %v4755 = vadd.f32 %v4392, %v4685
      %v4756 = vadd.f32 %v4393, %v4690
      %v4757 = vadd.f32 %v4394, %v4693
      %v4758 = vadd.f32 %v4395, %v4698
      %v4759 = vadd.f32 %v4396, %v4701
      %v4760 = vadd.f32 %v4397, %v4706
      %v4761 = vadd.f32 %v4398, %v4709
      %v4762 = vadd.f32 %v4399, %v4714
      %v4763 = vadd.f32 %v4400, %v4717
      %v4764 = vadd.f32 %v4401, %v4722
      %v4765 = vadd.f32 %v4402, %v4725
      %v4766 = vadd.f32 %v4403, %v4730
      %v4767 = vadd.f32 %v4404, %v4733
      %v4768 = vld [vmem:[%s4405] sm:$0xf]
      %v4769 = vld [vmem:[%s4405 + $0x4] sm:$0xf]
      %v4770 = vld [vmem:[%s4405 + $0x8] sm:$0x1]
      %v4771 = vld [vmem:[%s4405 + $0xc] sm:$0xf]
      %v4772 = vld [vmem:[%s4405 + $0x10] sm:$0xf]
      %v4773 = vld [vmem:[%s4405 + $0x14] sm:$0x1]
      %v4774 = vld [vmem:[%s4405 + $0x18] sm:$0xf]
      %v4775 = vld [vmem:[%s4405 + $0x1c] sm:$0xf]
      %v4776 = vld [vmem:[%s4405 + $0x20] sm:$0x1]
      %v4777 = vld [vmem:[%s4405 + $0x24] sm:$0xf]
      %v4778 = vld [vmem:[%s4405 + $0x28] sm:$0xf]
      %v4779 = vld [vmem:[%s4405 + $0x2c] sm:$0x1]
      %v4780 = vld [vmem:[%s4405 + $0x30] sm:$0xf]
      %v4781 = vld [vmem:[%s4405 + $0x34] sm:$0xf]
      %v4782 = vld [vmem:[%s4405 + $0x38] sm:$0x1]
      %v4783 = vld [vmem:[%s4405 + $0x3c] sm:$0xf]
      %v4784 = vld [vmem:[%s4405 + $0x40] sm:$0xf]
      %v4785 = vld [vmem:[%s4405 + $0x44] sm:$0x1]
      %v4786 = vld [vmem:[%s4405 + $0x48] sm:$0xf]
      %v4787 = vld [vmem:[%s4405 + $0x4c] sm:$0xf]
      %v4788 = vld [vmem:[%s4405 + $0x50] sm:$0x1]
      %v4789 = vld [vmem:[%s4405 + $0x54] sm:$0xf]
      %v4790 = vld [vmem:[%s4405 + $0x58] sm:$0xf]
      %v4791 = vld [vmem:[%s4405 + $0x5c] sm:$0x1]
      %v4792 = vld [vmem:[%s4405 + $0x60] sm:$0xf]
      %v4793 = vld [vmem:[%s4405 + $0x64] sm:$0xf]
      %v4794 = vld [vmem:[%s4405 + $0x68] sm:$0x1]
      %v4795 = vld [vmem:[%s4405 + $0x6c] sm:$0xf]
      %v4796 = vld [vmem:[%s4405 + $0x70] sm:$0xf]
      %v4797 = vld [vmem:[%s4405 + $0x74] sm:$0x1]
      %v4798 = vld [vmem:[%s4405 + $0x78] sm:$0xf]
      %v4799 = vld [vmem:[%s4405 + $0x7c] sm:$0xf]
      %v4800 = vld [vmem:[%s4405 + $0x80] sm:$0x1]
      %v4801 = vld [vmem:[%s4405 + $0x84] sm:$0xf]
      %v4802 = vld [vmem:[%s4405 + $0x88] sm:$0xf]
      %v4803 = vld [vmem:[%s4405 + $0x8c] sm:$0x1]
      %v4804 = vld [vmem:[%s4405 + $0x90] sm:$0xf]
      %v4805 = vld [vmem:[%s4405 + $0x94] sm:$0xf]
      %v4806 = vld [vmem:[%s4405 + $0x98] sm:$0x1]
      %v4807 = vld [vmem:[%s4405 + $0x9c] sm:$0xf]
      %v4808 = vld [vmem:[%s4405 + $0xa0] sm:$0xf]
      %v4809 = vld [vmem:[%s4405 + $0xa4] sm:$0x1]
      %v4810 = vld [vmem:[%s4405 + $0xa8] sm:$0xf]
      %v4811 = vld [vmem:[%s4405 + $0xac] sm:$0xf]
      %v4812 = vld [vmem:[%s4405 + $0xb0] sm:$0x1]
      %v4813 = vld [vmem:[%s4405 + $0xb4] sm:$0xf]
      %v4814 = vld [vmem:[%s4405 + $0xb8] sm:$0xf]
      %v4815 = vld [vmem:[%s4405 + $0xbc] sm:$0x1]
      %v4817 = vshrl.u32 %v4768, 16
      %v4819 = vrot.slane %v4817, 4
      %v4820 = vshll.u32 %v4768, 16
      %v4822 = vrot.slane %v4820, 5
      %v4823 = vor.u32 %v4819, %v4822
      %v4824 = vrot.slane %v4823, 4
      %v4826 = vshll.u32 %v4769, 16
      %v4828 = vrot.slane %v4826, 5
      %v4829 = vsel %vm1431, %v4824, %v4828
      %v4830 = vshrl.u32 %v4769, 16
      %v4832 = vrot.slane %v4830, 4
      %v4833 = vor.u32 %v4832, %v4828
      %v4834 = vrot.slane %v4833, 4
      %v4836 = vshll.u32 %v4770, 16
      %v4838 = vrot.slane %v4836, 5
      %v4839 = vsel %vm1431, %v4834, %v4838
      %v4841 = vshrl.u32 %v4771, 16
      %v4843 = vrot.slane %v4841, 4
      %v4844 = vshll.u32 %v4771, 16
      %v4846 = vrot.slane %v4844, 5
      %v4847 = vor.u32 %v4843, %v4846
      %v4848 = vrot.slane %v4847, 4
      %v4850 = vshll.u32 %v4772, 16
      %v4852 = vrot.slane %v4850, 5
      %v4853 = vsel %vm1431, %v4848, %v4852
      %v4854 = vshrl.u32 %v4772, 16
      %v4856 = vrot.slane %v4854, 4
      %v4857 = vor.u32 %v4856, %v4852
      %v4858 = vrot.slane %v4857, 4
      %v4860 = vshll.u32 %v4773, 16
      %v4862 = vrot.slane %v4860, 5
      %v4863 = vsel %vm1431, %v4858, %v4862
      %v4865 = vshrl.u32 %v4774, 16
      %v4867 = vrot.slane %v4865, 4
      %v4868 = vshll.u32 %v4774, 16
      %v4870 = vrot.slane %v4868, 5
      %v4871 = vor.u32 %v4867, %v4870
      %v4872 = vrot.slane %v4871, 4
      %v4874 = vshll.u32 %v4775, 16
      %v4876 = vrot.slane %v4874, 5
      %v4877 = vsel %vm1431, %v4872, %v4876
      %v4878 = vshrl.u32 %v4775, 16
      %v4880 = vrot.slane %v4878, 4
      %v4881 = vor.u32 %v4880, %v4876
      %v4882 = vrot.slane %v4881, 4
      %v4884 = vshll.u32 %v4776, 16
      %v4886 = vrot.slane %v4884, 5
      %v4887 = vsel %vm1431, %v4882, %v4886
      %v4889 = vshrl.u32 %v4777, 16
      %v4891 = vrot.slane %v4889, 4
      %v4892 = vshll.u32 %v4777, 16
      %v4894 = vrot.slane %v4892, 5
      %v4895 = vor.u32 %v4891, %v4894
      %v4896 = vrot.slane %v4895, 4
      %v4898 = vshll.u32 %v4778, 16
      %v4900 = vrot.slane %v4898, 5
      %v4901 = vsel %vm1431, %v4896, %v4900
      %v4902 = vshrl.u32 %v4778, 16
      %v4904 = vrot.slane %v4902, 4
      %v4905 = vor.u32 %v4904, %v4900
      %v4906 = vrot.slane %v4905, 4
      %v4908 = vshll.u32 %v4779, 16
      %v4910 = vrot.slane %v4908, 5
      %v4911 = vsel %vm1431, %v4906, %v4910
      %v4913 = vshrl.u32 %v4780, 16
      %v4915 = vrot.slane %v4913, 4
      %v4916 = vshll.u32 %v4780, 16
      %v4918 = vrot.slane %v4916, 5
      %v4919 = vor.u32 %v4915, %v4918
      %v4920 = vrot.slane %v4919, 4
      %v4922 = vshll.u32 %v4781, 16
      %v4924 = vrot.slane %v4922, 5
      %v4925 = vsel %vm1431, %v4920, %v4924
      %v4926 = vshrl.u32 %v4781, 16
      %v4928 = vrot.slane %v4926, 4
      %v4929 = vor.u32 %v4928, %v4924
      %v4930 = vrot.slane %v4929, 4
      %v4932 = vshll.u32 %v4782, 16
      %v4934 = vrot.slane %v4932, 5
      %v4935 = vsel %vm1431, %v4930, %v4934
      %v4937 = vshrl.u32 %v4783, 16
      %v4939 = vrot.slane %v4937, 4
      %v4940 = vshll.u32 %v4783, 16
      %v4942 = vrot.slane %v4940, 5
      %v4943 = vor.u32 %v4939, %v4942
      %v4944 = vrot.slane %v4943, 4
      %v4946 = vshll.u32 %v4784, 16
      %v4948 = vrot.slane %v4946, 5
      %v4949 = vsel %vm1431, %v4944, %v4948
      %v4950 = vshrl.u32 %v4784, 16
      %v4952 = vrot.slane %v4950, 4
      %v4953 = vor.u32 %v4952, %v4948
      %v4954 = vrot.slane %v4953, 4
      %v4956 = vshll.u32 %v4785, 16
      %v4958 = vrot.slane %v4956, 5
      %v4959 = vsel %vm1431, %v4954, %v4958
      %v4961 = vshrl.u32 %v4786, 16
      %v4963 = vrot.slane %v4961, 4
      %v4964 = vshll.u32 %v4786, 16
      %v4966 = vrot.slane %v4964, 5
      %v4967 = vor.u32 %v4963, %v4966
      %v4968 = vrot.slane %v4967, 4
      %v4970 = vshll.u32 %v4787, 16
      %v4972 = vrot.slane %v4970, 5
      %v4973 = vsel %vm1431, %v4968, %v4972
      %v4974 = vshrl.u32 %v4787, 16
      %v4976 = vrot.slane %v4974, 4
      %v4977 = vor.u32 %v4976, %v4972
      %v4978 = vrot.slane %v4977, 4
      %v4980 = vshll.u32 %v4788, 16
      %v4982 = vrot.slane %v4980, 5
      %v4983 = vsel %vm1431, %v4978, %v4982
      %v4985 = vshrl.u32 %v4789, 16
      %v4987 = vrot.slane %v4985, 4
      %v4988 = vshll.u32 %v4789, 16
      %v4990 = vrot.slane %v4988, 5
      %v4991 = vor.u32 %v4987, %v4990
      %v4992 = vrot.slane %v4991, 4
      %v4994 = vshll.u32 %v4790, 16
      %v4996 = vrot.slane %v4994, 5
      %v4997 = vsel %vm1431, %v4992, %v4996
      %v4998 = vshrl.u32 %v4790, 16
      %v5000 = vrot.slane %v4998, 4
      %v5001 = vor.u32 %v5000, %v4996
      %v5002 = vrot.slane %v5001, 4
      %v5004 = vshll.u32 %v4791, 16
      %v5006 = vrot.slane %v5004, 5
      %v5007 = vsel %vm1431, %v5002, %v5006
      %v5009 = vshrl.u32 %v4792, 16
      %v5011 = vrot.slane %v5009, 4
      %v5012 = vshll.u32 %v4792, 16
      %v5014 = vrot.slane %v5012, 5
      %v5015 = vor.u32 %v5011, %v5014
      %v5016 = vrot.slane %v5015, 4
      %v5018 = vshll.u32 %v4793, 16
      %v5020 = vrot.slane %v5018, 5
      %v5021 = vsel %vm1431, %v5016, %v5020
      %v5022 = vshrl.u32 %v4793, 16
      %v5024 = vrot.slane %v5022, 4
      %v5025 = vor.u32 %v5024, %v5020
      %v5026 = vrot.slane %v5025, 4
      %v5028 = vshll.u32 %v4794, 16
      %v5030 = vrot.slane %v5028, 5
      %v5031 = vsel %vm1431, %v5026, %v5030
      %v5033 = vshrl.u32 %v4795, 16
      %v5035 = vrot.slane %v5033, 4
      %v5036 = vshll.u32 %v4795, 16
      %v5038 = vrot.slane %v5036, 5
      %v5039 = vor.u32 %v5035, %v5038
      %v5040 = vrot.slane %v5039, 4
      %v5042 = vshll.u32 %v4796, 16
      %v5044 = vrot.slane %v5042, 5
      %v5045 = vsel %vm1431, %v5040, %v5044
      %v5046 = vshrl.u32 %v4796, 16
      %v5048 = vrot.slane %v5046, 4
      %v5049 = vor.u32 %v5048, %v5044
      %v5050 = vrot.slane %v5049, 4
      %v5052 = vshll.u32 %v4797, 16
      %v5054 = vrot.slane %v5052, 5
      %v5055 = vsel %vm1431, %v5050, %v5054
      %v5057 = vshrl.u32 %v4798, 16
      %v5059 = vrot.slane %v5057, 4
      %v5060 = vshll.u32 %v4798, 16
      %v5062 = vrot.slane %v5060, 5
      %v5063 = vor.u32 %v5059, %v5062
      %v5064 = vrot.slane %v5063, 4
      %v5066 = vshll.u32 %v4799, 16
      %v5068 = vrot.slane %v5066, 5
      %v5069 = vsel %vm1431, %v5064, %v5068
      %v5070 = vshrl.u32 %v4799, 16
      %v5072 = vrot.slane %v5070, 4
      %v5073 = vor.u32 %v5072, %v5068
      %v5074 = vrot.slane %v5073, 4
      %v5076 = vshll.u32 %v4800, 16
      %v5078 = vrot.slane %v5076, 5
      %v5079 = vsel %vm1431, %v5074, %v5078
      %v5081 = vshrl.u32 %v4801, 16
      %v5083 = vrot.slane %v5081, 4
      %v5084 = vshll.u32 %v4801, 16
      %v5086 = vrot.slane %v5084, 5
      %v5087 = vor.u32 %v5083, %v5086
      %v5088 = vrot.slane %v5087, 4
      %v5090 = vshll.u32 %v4802, 16
      %v5092 = vrot.slane %v5090, 5
      %v5093 = vsel %vm1431, %v5088, %v5092
      %v5094 = vshrl.u32 %v4802, 16
      %v5096 = vrot.slane %v5094, 4
      %v5097 = vor.u32 %v5096, %v5092
      %v5098 = vrot.slane %v5097, 4
      %v5100 = vshll.u32 %v4803, 16
      %v5102 = vrot.slane %v5100, 5
      %v5103 = vsel %vm1431, %v5098, %v5102
      %v5105 = vshrl.u32 %v4804, 16
      %v5107 = vrot.slane %v5105, 4
      %v5108 = vshll.u32 %v4804, 16
      %v5110 = vrot.slane %v5108, 5
      %v5111 = vor.u32 %v5107, %v5110
      %v5112 = vrot.slane %v5111, 4
      %v5114 = vshll.u32 %v4805, 16
      %v5116 = vrot.slane %v5114, 5
      %v5117 = vsel %vm1431, %v5112, %v5116
      %v5118 = vshrl.u32 %v4805, 16
      %v5120 = vrot.slane %v5118, 4
      %v5121 = vor.u32 %v5120, %v5116
      %v5122 = vrot.slane %v5121, 4
      %v5124 = vshll.u32 %v4806, 16
      %v5126 = vrot.slane %v5124, 5
      %v5127 = vsel %vm1431, %v5122, %v5126
      %v5129 = vshrl.u32 %v4807, 16
      %v5131 = vrot.slane %v5129, 4
      %v5132 = vshll.u32 %v4807, 16
      %v5134 = vrot.slane %v5132, 5
      %v5135 = vor.u32 %v5131, %v5134
      %v5136 = vrot.slane %v5135, 4
      %v5138 = vshll.u32 %v4808, 16
      %v5140 = vrot.slane %v5138, 5
      %v5141 = vsel %vm1431, %v5136, %v5140
      %v5142 = vshrl.u32 %v4808, 16
      %v5144 = vrot.slane %v5142, 4
      %v5145 = vor.u32 %v5144, %v5140
      %v5146 = vrot.slane %v5145, 4
      %v5148 = vshll.u32 %v4809, 16
      %v5150 = vrot.slane %v5148, 5
      %v5151 = vsel %vm1431, %v5146, %v5150
      %v5153 = vshrl.u32 %v4810, 16
      %v5155 = vrot.slane %v5153, 4
      %v5156 = vshll.u32 %v4810, 16
      %v5158 = vrot.slane %v5156, 5
      %v5159 = vor.u32 %v5155, %v5158
      %v5160 = vrot.slane %v5159, 4
      %v5162 = vshll.u32 %v4811, 16
      %v5164 = vrot.slane %v5162, 5
      %v5165 = vsel %vm1431, %v5160, %v5164
      %v5166 = vshrl.u32 %v4811, 16
      %v5168 = vrot.slane %v5166, 4
      %v5169 = vor.u32 %v5168, %v5164
      %v5170 = vrot.slane %v5169, 4
      %v5172 = vshll.u32 %v4812, 16
      %v5174 = vrot.slane %v5172, 5
      %v5175 = vsel %vm1431, %v5170, %v5174
      %v5177 = vshrl.u32 %v4813, 16
      %v5179 = vrot.slane %v5177, 4
      %v5180 = vshll.u32 %v4813, 16
      %v5182 = vrot.slane %v5180, 5
      %v5183 = vor.u32 %v5179, %v5182
      %v5184 = vrot.slane %v5183, 4
      %v5186 = vshll.u32 %v4814, 16
      %v5188 = vrot.slane %v5186, 5
      %v5189 = vsel %vm1431, %v5184, %v5188
      %v5190 = vshrl.u32 %v4814, 16
      %v5192 = vrot.slane %v5190, 4
      %v5193 = vor.u32 %v5192, %v5188
      %v5194 = vrot.slane %v5193, 4
      %v5196 = vshll.u32 %v4815, 16
      %v5198 = vrot.slane %v5196, 5
      %v5199 = vsel %vm1431, %v5194, %v5198
      %s5200 = scalar_lea.vmem %s5, 56
      %v5201 = vld [vmem:[%s5200] sm:$0xf]
      %v5202 = vld [vmem:[%s5200 + $0x4] sm:$0xf]
      %v5203 = vunpack.c.l.b16 %v4829
      %v5204 = vunpack.c.l.b16 %v4839
      %v5205 = vunpack.c.l.b16 %v4853
      %v5206 = vunpack.c.l.b16 %v4863
      %v5207 = vunpack.c.l.b16 %v4877
      %v5208 = vunpack.c.l.b16 %v4887
      %v5209 = vunpack.c.l.b16 %v4901
      %v5210 = vunpack.c.l.b16 %v4911
      %v5211 = vunpack.c.l.b16 %v4925
      %v5212 = vunpack.c.l.b16 %v4935
      %v5213 = vunpack.c.l.b16 %v4949
      %v5214 = vunpack.c.l.b16 %v4959
      %v5215 = vunpack.c.l.b16 %v4973
      %v5216 = vunpack.c.l.b16 %v4983
      %v5217 = vunpack.c.l.b16 %v4997
      %v5218 = vunpack.c.l.b16 %v5007
      %v5219 = vunpack.c.l.b16 %v5021
      %v5220 = vunpack.c.l.b16 %v5031
      %v5221 = vunpack.c.l.b16 %v5045
      %v5222 = vunpack.c.l.b16 %v5055
      %v5223 = vunpack.c.l.b16 %v5069
      %v5224 = vunpack.c.l.b16 %v5079
      %v5225 = vunpack.c.l.b16 %v5093
      %v5226 = vunpack.c.l.b16 %v5103
      %v5227 = vunpack.c.l.b16 %v5117
      %v5228 = vunpack.c.l.b16 %v5127
      %v5229 = vunpack.c.l.b16 %v5141
      %v5230 = vunpack.c.l.b16 %v5151
      %v5231 = vunpack.c.l.b16 %v5165
      %v5232 = vunpack.c.l.b16 %v5175
      %v5233 = vunpack.c.l.b16 %v5189
      %v5234 = vunpack.c.l.b16 %v5199
      %v5235 = vpack.c.b16 %v5204, %v5203
      %v5236 = vpack.c.b16 %v5206, %v5205
      %v5237 = vpack.c.b16 %v5208, %v5207
      %v5238 = vpack.c.b16 %v5210, %v5209
      %v5239 = vpack.c.b16 %v5212, %v5211
      %v5240 = vpack.c.b16 %v5214, %v5213
      %v5241 = vpack.c.b16 %v5216, %v5215
      %v5242 = vpack.c.b16 %v5218, %v5217
      %v5243 = vpack.c.b16 %v5220, %v5219
      %v5244 = vpack.c.b16 %v5222, %v5221
      %v5245 = vpack.c.b16 %v5224, %v5223
      %v5246 = vpack.c.b16 %v5226, %v5225
      %v5247 = vpack.c.b16 %v5228, %v5227
      %v5248 = vpack.c.b16 %v5230, %v5229
      %v5249 = vpack.c.b16 %v5232, %v5231
      %v5250 = vpack.c.b16 %v5234, %v5233
      %v5253 = vunpack.c.l.b16 %v5201
      %v5254 = vunpack.c.l.b16 %v5202
      %v5255 = vpack.c.b16 %v5254, %v5253
      %v5258 = vsel %vm1873, %v5235, 0
      %v5261 = vsel %vm1873, %v5236, 0
      %v5264 = vsel %vm1873, %v5237, 0
      %v5267 = vsel %vm1873, %v5238, 0
      %v5270 = vsel %vm1873, %v5239, 0
      %v5273 = vsel %vm1873, %v5240, 0
      %v5276 = vsel %vm1873, %v5241, 0
      %v5279 = vsel %vm1873, %v5242, 0
      %v5282 = vsel %vm1873, %v5243, 0
      %v5285 = vsel %vm1873, %v5244, 0
      %v5288 = vsel %vm1873, %v5245, 0
      %v5291 = vsel %vm1873, %v5246, 0
      %v5294 = vsel %vm1873, %v5247, 0
      %v5297 = vsel %vm1873, %v5248, 0
      %v5300 = vsel %vm1873, %v5249, 0
      %v5303 = vsel %vm1873, %v5250, 0
      %5305 = vmatprep.subr.bf16.mxu0 0
      %5306 = vmatpush1.bf16.msra.mxu0 %v5255
      %5307 = vmatprep.subr.bf16.mxu0 0
      %5308 = vmatpush1.bf16.msra.mxu0 0
      %5309 = vmatprep.subr.bf16.mxu0 0
      %5310 = vmatpush1.bf16.msra.mxu0 0
      %5311 = vmatprep.subr.bf16.mxu0 0
      %5312 = vmatpush1.bf16.msra.mxu0 0
      %5313 = vmatprep.subr.bf16.mxu0 0
      %5314 = vmatpush1.bf16.msra.mxu0 0
      %5315 = vmatprep.subr.bf16.mxu0 0
      %5316 = vmatpush1.bf16.msra.mxu0 0
      %5317 = vmatprep.subr.bf16.mxu0 0
      %5318 = vmatpush1.bf16.msra.mxu0 0
      %5319 = vmatprep.subr.bf16.mxu0 0
      %5320 = vmatpush1.bf16.msra.mxu0 0
      %5321 = vmatprep.subr.bf16.mxu0 0
      %5322 = vmatpush1.bf16.msra.mxu0 0
      %5323 = vmatprep.subr.bf16.mxu0 0
      %5324 = vmatpush1.bf16.msra.mxu0 0
      %5325 = vmatprep.subr.bf16.mxu0 0
      %5326 = vmatpush1.bf16.msra.mxu0 0
      %5327 = vmatprep.subr.bf16.mxu0 0
      %5328 = vmatpush1.bf16.msra.mxu0 0
      %5329 = vmatprep.subr.bf16.mxu0 0
      %5330 = vmatpush1.bf16.msra.mxu0 0
      %5331 = vmatprep.subr.bf16.mxu0 0
      %5332 = vmatpush1.bf16.msra.mxu0 0
      %5333 = vmatprep.subr.bf16.mxu0 0
      %5334 = vmatpush1.bf16.msra.mxu0 0
      %5335 = vmatprep.subr.bf16.mxu0 0
      %5336 = vmatpush1.bf16.msra.mxu0 0
      %5337 = vmatprep.mubr.bf16.mxu0 0
      %5338 = vmatmul.mubr.bf16.gmra.mrb[0].mxu0 %v5258
      %v5339 = vpop.f32.mrb[0].mxu0
      %v5340 = vadd.f32 0.0, %v5339
      %v5341 = vpop.f32.mrb[0].mxu0
      %v5342 = vpop.f32.mrb[0].mxu0
      %v5343 = vadd.f32 0.0, %v5342
      %v5344 = vpop.f32.mrb[0].mxu0
      %5345 = vmatprep.mubr.bf16.mxu0 0
      %5346 = vmatmul.mubr.bf16.gmra.mrb[0].mxu0 %v5261
      %v5347 = vpop.f32.mrb[0].mxu0
      %v5348 = vadd.f32 0.0, %v5347
      %v5349 = vpop.f32.mrb[0].mxu0
      %v5350 = vpop.f32.mrb[0].mxu0
      %v5351 = vadd.f32 0.0, %v5350
      %v5352 = vpop.f32.mrb[0].mxu0
      %5353 = vmatprep.mubr.bf16.mxu0 0
      %5354 = vmatmul.mubr.bf16.gmra.mrb[0].mxu0 %v5264
      %v5355 = vpop.f32.mrb[0].mxu0
      %v5356 = vadd.f32 0.0, %v5355
      %v5357 = vpop.f32.mrb[0].mxu0
      %v5358 = vpop.f32.mrb[0].mxu0
      %v5359 = vadd.f32 0.0, %v5358
      %v5360 = vpop.f32.mrb[0].mxu0
      %5361 = vmatprep.mubr.bf16.mxu0 0
      %5362 = vmatmul.mubr.bf16.gmra.mrb[0].mxu0 %v5267
      %v5363 = vpop.f32.mrb[0].mxu0
      %v5364 = vadd.f32 0.0, %v5363
      %v5365 = vpop.f32.mrb[0].mxu0
      %v5366 = vpop.f32.mrb[0].mxu0
      %v5367 = vadd.f32 0.0, %v5366
      %v5368 = vpop.f32.mrb[0].mxu0
      %5369 = vmatprep.mubr.bf16.mxu0 0
      %5370 = vmatmul.mubr.bf16.gmra.mrb[0].mxu0 %v5270
      %v5371 = vpop.f32.mrb[0].mxu0
      %v5372 = vadd.f32 0.0, %v5371
      %v5373 = vpop.f32.mrb[0].mxu0
      %v5374 = vpop.f32.mrb[0].mxu0
      %v5375 = vadd.f32 0.0, %v5374
      %v5376 = vpop.f32.mrb[0].mxu0
      %5377 = vmatprep.mubr.bf16.mxu0 0
      %5378 = vmatmul.mubr.bf16.gmra.mrb[0].mxu0 %v5273
      %v5379 = vpop.f32.mrb[0].mxu0
      %v5380 = vadd.f32 0.0, %v5379
      %v5381 = vpop.f32.mrb[0].mxu0
      %v5382 = vpop.f32.mrb[0].mxu0
      %v5383 = vadd.f32 0.0, %v5382
      %v5384 = vpop.f32.mrb[0].mxu0
      %5385 = vmatprep.mubr.bf16.mxu0 0
      %5386 = vmatmul.mubr.bf16.gmra.mrb[0].mxu0 %v5276
      %v5387 = vpop.f32.mrb[0].mxu0
      %v5388 = vadd.f32 0.0, %v5387
      %v5389 = vpop.f32.mrb[0].mxu0
      %v5390 = vpop.f32.mrb[0].mxu0
      %v5391 = vadd.f32 0.0, %v5390
      %v5392 = vpop.f32.mrb[0].mxu0
      %5393 = vmatprep.mubr.bf16.mxu0 0
      %5394 = vmatmul.mubr.bf16.gmra.mrb[0].mxu0 %v5279
      %v5395 = vpop.f32.mrb[0].mxu0
      %v5396 = vadd.f32 0.0, %v5395
      %v5397 = vpop.f32.mrb[0].mxu0
      %v5398 = vpop.f32.mrb[0].mxu0
      %v5399 = vadd.f32 0.0, %v5398
      %v5400 = vpop.f32.mrb[0].mxu0
      %5401 = vmatprep.mubr.bf16.mxu0 0
      %5402 = vmatmul.mubr.bf16.gmra.mrb[0].mxu0 %v5282
      %v5403 = vpop.f32.mrb[0].mxu0
      %v5404 = vadd.f32 0.0, %v5403
      %v5405 = vpop.f32.mrb[0].mxu0
      %v5406 = vpop.f32.mrb[0].mxu0
      %v5407 = vadd.f32 0.0, %v5406
      %v5408 = vpop.f32.mrb[0].mxu0
      %5409 = vmatprep.mubr.bf16.mxu0 0
      %5410 = vmatmul.mubr.bf16.gmra.mrb[0].mxu0 %v5285
      %v5411 = vpop.f32.mrb[0].mxu0
      %v5412 = vadd.f32 0.0, %v5411
      %v5413 = vpop.f32.mrb[0].mxu0
      %v5414 = vpop.f32.mrb[0].mxu0
      %v5415 = vadd.f32 0.0, %v5414
      %v5416 = vpop.f32.mrb[0].mxu0
      %5417 = vmatprep.mubr.bf16.mxu0 0
      %5418 = vmatmul.mubr.bf16.gmra.mrb[0].mxu0 %v5288
      %v5419 = vpop.f32.mrb[0].mxu0
      %v5420 = vadd.f32 0.0, %v5419
      %v5421 = vpop.f32.mrb[0].mxu0
      %v5422 = vpop.f32.mrb[0].mxu0
      %v5423 = vadd.f32 0.0, %v5422
      %v5424 = vpop.f32.mrb[0].mxu0
      %5425 = vmatprep.mubr.bf16.mxu0 0
      %5426 = vmatmul.mubr.bf16.gmra.mrb[0].mxu0 %v5291
      %v5427 = vpop.f32.mrb[0].mxu0
      %v5428 = vadd.f32 0.0, %v5427
      %v5429 = vpop.f32.mrb[0].mxu0
      %v5430 = vpop.f32.mrb[0].mxu0
      %v5431 = vadd.f32 0.0, %v5430
      %v5432 = vpop.f32.mrb[0].mxu0
      %5433 = vmatprep.mubr.bf16.mxu0 0
      %5434 = vmatmul.mubr.bf16.gmra.mrb[0].mxu0 %v5294
      %v5435 = vpop.f32.mrb[0].mxu0
      %v5436 = vadd.f32 0.0, %v5435
      %v5437 = vpop.f32.mrb[0].mxu0
      %v5438 = vpop.f32.mrb[0].mxu0
      %v5439 = vadd.f32 0.0, %v5438
      %v5440 = vpop.f32.mrb[0].mxu0
      %5441 = vmatprep.mubr.bf16.mxu0 0
      %5442 = vmatmul.mubr.bf16.gmra.mrb[0].mxu0 %v5297
      %v5443 = vpop.f32.mrb[0].mxu0
      %v5444 = vadd.f32 0.0, %v5443
      %v5445 = vpop.f32.mrb[0].mxu0
      %v5446 = vpop.f32.mrb[0].mxu0
      %v5447 = vadd.f32 0.0, %v5446
      %v5448 = vpop.f32.mrb[0].mxu0
      %5449 = vmatprep.mubr.bf16.mxu0 0
      %5450 = vmatmul.mubr.bf16.gmra.mrb[0].mxu0 %v5300
      %v5451 = vpop.f32.mrb[0].mxu0
      %v5452 = vadd.f32 0.0, %v5451
      %v5453 = vpop.f32.mrb[0].mxu0
      %v5454 = vpop.f32.mrb[0].mxu0
      %v5455 = vadd.f32 0.0, %v5454
      %v5456 = vpop.f32.mrb[0].mxu0
      %5457 = vmatprep.mubr.bf16.mxu0 0
      %5458 = vmatmul.mubr.bf16.gmra.mrb[0].mxu0 %v5303
      %v5459 = vpop.f32.mrb[0].mxu0
      %v5460 = vadd.f32 0.0, %v5459
      %v5461 = vpop.f32.mrb[0].mxu0
      %v5462 = vpop.f32.mrb[0].mxu0
      %v5463 = vadd.f32 0.0, %v5462
      %v5464 = vpop.f32.mrb[0].mxu0
      %5465 = vdwg.mxu0
      %v5466 = vadd.f32 %v4736, %v5340
      %v5467 = vadd.f32 %v4737, %v5343
      %v5468 = vadd.f32 %v4738, %v5348
      %v5469 = vadd.f32 %v4739, %v5351
      %v5470 = vadd.f32 %v4740, %v5356
      %v5471 = vadd.f32 %v4741, %v5359
      %v5472 = vadd.f32 %v4742, %v5364
      %v5473 = vadd.f32 %v4743, %v5367
      %v5474 = vadd.f32 %v4744, %v5372
      %v5475 = vadd.f32 %v4745, %v5375
      %v5476 = vadd.f32 %v4746, %v5380
      %v5477 = vadd.f32 %v4747, %v5383
      %v5478 = vadd.f32 %v4748, %v5388
      %v5479 = vadd.f32 %v4749, %v5391
      %v5480 = vadd.f32 %v4750, %v5396
      %v5481 = vadd.f32 %v4751, %v5399
      %v5482 = vadd.f32 %v4752, %v5404
      %v5483 = vadd.f32 %v4753, %v5407
      %v5484 = vadd.f32 %v4754, %v5412
      %v5485 = vadd.f32 %v4755, %v5415
      %v5486 = vadd.f32 %v4756, %v5420
      %v5487 = vadd.f32 %v4757, %v5423
      %v5488 = vadd.f32 %v4758, %v5428
      %v5489 = vadd.f32 %v4759, %v5431
      %v5490 = vadd.f32 %v4760, %v5436
      %v5491 = vadd.f32 %v4761, %v5439
      %v5492 = vadd.f32 %v4762, %v5444
      %v5493 = vadd.f32 %v4763, %v5447
      %v5494 = vadd.f32 %v4764, %v5452
      %v5495 = vadd.f32 %v4765, %v5455
      %v5496 = vadd.f32 %v4766, %v5460
      %v5497 = vadd.f32 %v4767, %v5463
      %v5498 = vld [vmem:[%s4405] sm:$0xe]
      %v5499 = vld [vmem:[%s4405 + $0xc] sm:$0xe]
      %v5500 = vld [vmem:[%s4405 + $0x18] sm:$0xe]
      %v5501 = vld [vmem:[%s4405 + $0x24] sm:$0xe]
      %v5502 = vld [vmem:[%s4405 + $0x30] sm:$0xe]
      %v5503 = vld [vmem:[%s4405 + $0x3c] sm:$0xe]
      %v5504 = vld [vmem:[%s4405 + $0x48] sm:$0xe]
      %v5505 = vld [vmem:[%s4405 + $0x54] sm:$0xe]
      %v5506 = vld [vmem:[%s4405 + $0x60] sm:$0xe]
      %v5507 = vld [vmem:[%s4405 + $0x6c] sm:$0xe]
      %v5508 = vld [vmem:[%s4405 + $0x78] sm:$0xe]
      %v5509 = vld [vmem:[%s4405 + $0x84] sm:$0xe]
      %v5510 = vld [vmem:[%s4405 + $0x90] sm:$0xe]
      %v5511 = vld [vmem:[%s4405 + $0x9c] sm:$0xe]
      %v5512 = vld [vmem:[%s4405 + $0xa8] sm:$0xe]
      %v5513 = vld [vmem:[%s4405 + $0xb4] sm:$0xe]
      %v5562 = vrot.slane %v5498, 5
      %v5563 = vrot.slane %v5562, 4
      %v5564 = vrot.slane %v4769, 5
      %v5565 = vsel %vm2428, %v5563, %v5564
      %v5566 = vrot.slane %v5564, 4
      %v5567 = vrot.slane %v4770, 5
      %v5568 = vsel %vm2428, %v5566, %v5567
      %v5569 = vrot.slane %v5499, 5
      %v5570 = vrot.slane %v5569, 4
      %v5571 = vrot.slane %v4772, 5
      %v5572 = vsel %vm2428, %v5570, %v5571
      %v5573 = vrot.slane %v5571, 4
      %v5574 = vrot.slane %v4773, 5
      %v5575 = vsel %vm2428, %v5573, %v5574
      %v5576 = vrot.slane %v5500, 5
      %v5577 = vrot.slane %v5576, 4
      %v5578 = vrot.slane %v4775, 5
      %v5579 = vsel %vm2428, %v5577, %v5578
      %v5580 = vrot.slane %v5578, 4
      %v5581 = vrot.slane %v4776, 5
      %v5582 = vsel %vm2428, %v5580, %v5581
      %v5583 = vrot.slane %v5501, 5
      %v5584 = vrot.slane %v5583, 4
      %v5585 = vrot.slane %v4778, 5
      %v5586 = vsel %vm2428, %v5584, %v5585
      %v5587 = vrot.slane %v5585, 4
      %v5588 = vrot.slane %v4779, 5
      %v5589 = vsel %vm2428, %v5587, %v5588
      %v5590 = vrot.slane %v5502, 5
      %v5591 = vrot.slane %v5590, 4
      %v5592 = vrot.slane %v4781, 5
      %v5593 = vsel %vm2428, %v5591, %v5592
      %v5594 = vrot.slane %v5592, 4
      %v5595 = vrot.slane %v4782, 5
      %v5596 = vsel %vm2428, %v5594, %v5595
      %v5597 = vrot.slane %v5503, 5
      %v5598 = vrot.slane %v5597, 4
      %v5599 = vrot.slane %v4784, 5
      %v5600 = vsel %vm2428, %v5598, %v5599
      %v5601 = vrot.slane %v5599, 4
      %v5602 = vrot.slane %v4785, 5
      %v5603 = vsel %vm2428, %v5601, %v5602
      %v5604 = vrot.slane %v5504, 5
      %v5605 = vrot.slane %v5604, 4
      %v5606 = vrot.slane %v4787, 5
      %v5607 = vsel %vm2428, %v5605, %v5606
      %v5608 = vrot.slane %v5606, 4
      %v5609 = vrot.slane %v4788, 5
      %v5610 = vsel %vm2428, %v5608, %v5609
      %v5611 = vrot.slane %v5505, 5
      %v5612 = vrot.slane %v5611, 4
      %v5613 = vrot.slane %v4790, 5
      %v5614 = vsel %vm2428, %v5612, %v5613
      %v5615 = vrot.slane %v5613, 4
      %v5616 = vrot.slane %v4791, 5
      %v5617 = vsel %vm2428, %v5615, %v5616
      %v5618 = vrot.slane %v5506, 5
      %v5619 = vrot.slane %v5618, 4
      %v5620 = vrot.slane %v4793, 5
      %v5621 = vsel %vm2428, %v5619, %v5620
      %v5622 = vrot.slane %v5620, 4
      %v5623 = vrot.slane %v4794, 5
      %v5624 = vsel %vm2428, %v5622, %v5623
      %v5625 = vrot.slane %v5507, 5
      %v5626 = vrot.slane %v5625, 4
      %v5627 = vrot.slane %v4796, 5
      %v5628 = vsel %vm2428, %v5626, %v5627
      %v5629 = vrot.slane %v5627, 4
      %v5630 = vrot.slane %v4797, 5
      %v5631 = vsel %vm2428, %v5629, %v5630
      %v5632 = vrot.slane %v5508, 5
      %v5633 = vrot.slane %v5632, 4
      %v5634 = vrot.slane %v4799, 5
      %v5635 = vsel %vm2428, %v5633, %v5634
      %v5636 = vrot.slane %v5634, 4
      %v5637 = vrot.slane %v4800, 5
      %v5638 = vsel %vm2428, %v5636, %v5637
      %v5639 = vrot.slane %v5509, 5
      %v5640 = vrot.slane %v5639, 4
      %v5641 = vrot.slane %v4802, 5
      %v5642 = vsel %vm2428, %v5640, %v5641
      %v5643 = vrot.slane %v5641, 4
      %v5644 = vrot.slane %v4803, 5
      %v5645 = vsel %vm2428, %v5643, %v5644
      %v5646 = vrot.slane %v5510, 5
      %v5647 = vrot.slane %v5646, 4
      %v5648 = vrot.slane %v4805, 5
      %v5649 = vsel %vm2428, %v5647, %v5648
      %v5650 = vrot.slane %v5648, 4
      %v5651 = vrot.slane %v4806, 5
      %v5652 = vsel %vm2428, %v5650, %v5651
      %v5653 = vrot.slane %v5511, 5
      %v5654 = vrot.slane %v5653, 4
      %v5655 = vrot.slane %v4808, 5
      %v5656 = vsel %vm2428, %v5654, %v5655
      %v5657 = vrot.slane %v5655, 4
      %v5658 = vrot.slane %v4809, 5
      %v5659 = vsel %vm2428, %v5657, %v5658
      %v5660 = vrot.slane %v5512, 5
      %v5661 = vrot.slane %v5660, 4
      %v5662 = vrot.slane %v4811, 5
      %v5663 = vsel %vm2428, %v5661, %v5662
      %v5664 = vrot.slane %v5662, 4
      %v5665 = vrot.slane %v4812, 5
      %v5666 = vsel %vm2428, %v5664, %v5665
      %v5667 = vrot.slane %v5513, 5
      %v5668 = vrot.slane %v5667, 4
      %v5669 = vrot.slane %v4814, 5
      %v5670 = vsel %vm2428, %v5668, %v5669
      %v5671 = vrot.slane %v5669, 4
      %v5672 = vrot.slane %v4815, 5
      %v5673 = vsel %vm2428, %v5671, %v5672
      %s5674 = scalar_lea.vmem %s5, 64
      %v5675 = vld [vmem:[%s5674] sm:$0xf]
      %v5676 = vld [vmem:[%s5674 + $0x4] sm:$0xf]
      %v5677 = vunpack.c.l.b16 %v5565
      %v5678 = vunpack.c.l.b16 %v5568
      %v5679 = vunpack.c.l.b16 %v5572
      %v5680 = vunpack.c.l.b16 %v5575
      %v5681 = vunpack.c.l.b16 %v5579
      %v5682 = vunpack.c.l.b16 %v5582
      %v5683 = vunpack.c.l.b16 %v5586
      %v5684 = vunpack.c.l.b16 %v5589
      %v5685 = vunpack.c.l.b16 %v5593
      %v5686 = vunpack.c.l.b16 %v5596
      %v5687 = vunpack.c.l.b16 %v5600
      %v5688 = vunpack.c.l.b16 %v5603
      %v5689 = vunpack.c.l.b16 %v5607
      %v5690 = vunpack.c.l.b16 %v5610
      %v5691 = vunpack.c.l.b16 %v5614
      %v5692 = vunpack.c.l.b16 %v5617
      %v5693 = vunpack.c.l.b16 %v5621
      %v5694 = vunpack.c.l.b16 %v5624
      %v5695 = vunpack.c.l.b16 %v5628
      %v5696 = vunpack.c.l.b16 %v5631
      %v5697 = vunpack.c.l.b16 %v5635
      %v5698 = vunpack.c.l.b16 %v5638
      %v5699 = vunpack.c.l.b16 %v5642
      %v5700 = vunpack.c.l.b16 %v5645
      %v5701 = vunpack.c.l.b16 %v5649
      %v5702 = vunpack.c.l.b16 %v5652
      %v5703 = vunpack.c.l.b16 %v5656
      %v5704 = vunpack.c.l.b16 %v5659
      %v5705 = vunpack.c.l.b16 %v5663
      %v5706 = vunpack.c.l.b16 %v5666
      %v5707 = vunpack.c.l.b16 %v5670
      %v5708 = vunpack.c.l.b16 %v5673
      %v5709 = vpack.c.b16 %v5678, %v5677
      %v5710 = vpack.c.b16 %v5680, %v5679
      %v5711 = vpack.c.b16 %v5682, %v5681
      %v5712 = vpack.c.b16 %v5684, %v5683
      %v5713 = vpack.c.b16 %v5686, %v5685
      %v5714 = vpack.c.b16 %v5688, %v5687
      %v5715 = vpack.c.b16 %v5690, %v5689
      %v5716 = vpack.c.b16 %v5692, %v5691
      %v5717 = vpack.c.b16 %v5694, %v5693
      %v5718 = vpack.c.b16 %v5696, %v5695
      %v5719 = vpack.c.b16 %v5698, %v5697
      %v5720 = vpack.c.b16 %v5700, %v5699
      %v5721 = vpack.c.b16 %v5702, %v5701
      %v5722 = vpack.c.b16 %v5704, %v5703
      %v5723 = vpack.c.b16 %v5706, %v5705
      %v5724 = vpack.c.b16 %v5708, %v5707
      %v5727 = vunpack.c.l.b16 %v5675
      %v5728 = vunpack.c.l.b16 %v5676
      %v5729 = vpack.c.b16 %v5728, %v5727
      %v5732 = vsel %vm1873, %v5709, 0
      %v5735 = vsel %vm1873, %v5710, 0
      %v5738 = vsel %vm1873, %v5711, 0
      %v5741 = vsel %vm1873, %v5712, 0
      %v5744 = vsel %vm1873, %v5713, 0
      %v5747 = vsel %vm1873, %v5714, 0
      %v5750 = vsel %vm1873, %v5715, 0
      %v5753 = vsel %vm1873, %v5716, 0
      %v5756 = vsel %vm1873, %v5717, 0
      %v5759 = vsel %vm1873, %v5718, 0
      %v5762 = vsel %vm1873, %v5719, 0
      %v5765 = vsel %vm1873, %v5720, 0
      %v5768 = vsel %vm1873, %v5721, 0
      %v5771 = vsel %vm1873, %v5722, 0
      %v5774 = vsel %vm1873, %v5723, 0
      %v5777 = vsel %vm1873, %v5724, 0
      %5779 = vmatprep.subr.bf16.mxu0 0
      %5780 = vmatpush1.bf16.msra.mxu0 %v5729
      %5781 = vmatprep.subr.bf16.mxu0 0
      %5782 = vmatpush1.bf16.msra.mxu0 0
      %5783 = vmatprep.subr.bf16.mxu0 0
      %5784 = vmatpush1.bf16.msra.mxu0 0
      %5785 = vmatprep.subr.bf16.mxu0 0
      %5786 = vmatpush1.bf16.msra.mxu0 0
      %5787 = vmatprep.subr.bf16.mxu0 0
      %5788 = vmatpush1.bf16.msra.mxu0 0
      %5789 = vmatprep.subr.bf16.mxu0 0
      %5790 = vmatpush1.bf16.msra.mxu0 0
      %5791 = vmatprep.subr.bf16.mxu0 0
      %5792 = vmatpush1.bf16.msra.mxu0 0
      %5793 = vmatprep.subr.bf16.mxu0 0
      %5794 = vmatpush1.bf16.msra.mxu0 0
      %5795 = vmatprep.subr.bf16.mxu0 0
      %5796 = vmatpush1.bf16.msra.mxu0 0
      %5797 = vmatprep.subr.bf16.mxu0 0
      %5798 = vmatpush1.bf16.msra.mxu0 0
      %5799 = vmatprep.subr.bf16.mxu0 0
      %5800 = vmatpush1.bf16.msra.mxu0 0
      %5801 = vmatprep.subr.bf16.mxu0 0
      %5802 = vmatpush1.bf16.msra.mxu0 0
      %5803 = vmatprep.subr.bf16.mxu0 0
      %5804 = vmatpush1.bf16.msra.mxu0 0
      %5805 = vmatprep.subr.bf16.mxu0 0
      %5806 = vmatpush1.bf16.msra.mxu0 0
      %5807 = vmatprep.subr.bf16.mxu0 0
      %5808 = vmatpush1.bf16.msra.mxu0 0
      %5809 = vmatprep.subr.bf16.mxu0 0
      %5810 = vmatpush1.bf16.msra.mxu0 0
      %5811 = vmatprep.mubr.bf16.mxu0 0
      %5812 = vmatmul.mubr.bf16.gmra.mrb[0].mxu0 %v5732
      %v5813 = vpop.f32.mrb[0].mxu0
      %v5814 = vadd.f32 0.0, %v5813
      %v5815 = vpop.f32.mrb[0].mxu0
      %v5816 = vpop.f32.mrb[0].mxu0
      %v5817 = vadd.f32 0.0, %v5816
      %v5818 = vpop.f32.mrb[0].mxu0
      %5819 = vmatprep.mubr.bf16.mxu0 0
      %5820 = vmatmul.mubr.bf16.gmra.mrb[0].mxu0 %v5735
      %v5821 = vpop.f32.mrb[0].mxu0
      %v5822 = vadd.f32 0.0, %v5821
      %v5823 = vpop.f32.mrb[0].mxu0
      %v5824 = vpop.f32.mrb[0].mxu0
      %v5825 = vadd.f32 0.0, %v5824
      %v5826 = vpop.f32.mrb[0].mxu0
      %5827 = vmatprep.mubr.bf16.mxu0 0
      %5828 = vmatmul.mubr.bf16.gmra.mrb[0].mxu0 %v5738
      %v5829 = vpop.f32.mrb[0].mxu0
      %v5830 = vadd.f32 0.0, %v5829
      %v5831 = vpop.f32.mrb[0].mxu0
      %v5832 = vpop.f32.mrb[0].mxu0
      %v5833 = vadd.f32 0.0, %v5832
      %v5834 = vpop.f32.mrb[0].mxu0
      %5835 = vmatprep.mubr.bf16.mxu0 0
      %5836 = vmatmul.mubr.bf16.gmra.mrb[0].mxu0 %v5741
      %v5837 = vpop.f32.mrb[0].mxu0
      %v5838 = vadd.f32 0.0, %v5837
      %v5839 = vpop.f32.mrb[0].mxu0
      %v5840 = vpop.f32.mrb[0].mxu0
      %v5841 = vadd.f32 0.0, %v5840
      %v5842 = vpop.f32.mrb[0].mxu0
      %5843 = vmatprep.mubr.bf16.mxu0 0
      %5844 = vmatmul.mubr.bf16.gmra.mrb[0].mxu0 %v5744
      %v5845 = vpop.f32.mrb[0].mxu0
      %v5846 = vadd.f32 0.0, %v5845
      %v5847 = vpop.f32.mrb[0].mxu0
      %v5848 = vpop.f32.mrb[0].mxu0
      %v5849 = vadd.f32 0.0, %v5848
      %v5850 = vpop.f32.mrb[0].mxu0
      %5851 = vmatprep.mubr.bf16.mxu0 0
      %5852 = vmatmul.mubr.bf16.gmra.mrb[0].mxu0 %v5747
      %v5853 = vpop.f32.mrb[0].mxu0
      %v5854 = vadd.f32 0.0, %v5853
      %v5855 = vpop.f32.mrb[0].mxu0
      %v5856 = vpop.f32.mrb[0].mxu0
      %v5857 = vadd.f32 0.0, %v5856
      %v5858 = vpop.f32.mrb[0].mxu0
      %5859 = vmatprep.mubr.bf16.mxu0 0
      %5860 = vmatmul.mubr.bf16.gmra.mrb[0].mxu0 %v5750
      %v5861 = vpop.f32.mrb[0].mxu0
      %v5862 = vadd.f32 0.0, %v5861
      %v5863 = vpop.f32.mrb[0].mxu0
      %v5864 = vpop.f32.mrb[0].mxu0
      %v5865 = vadd.f32 0.0, %v5864
      %v5866 = vpop.f32.mrb[0].mxu0
      %5867 = vmatprep.mubr.bf16.mxu0 0
      %5868 = vmatmul.mubr.bf16.gmra.mrb[0].mxu0 %v5753
      %v5869 = vpop.f32.mrb[0].mxu0
      %v5870 = vadd.f32 0.0, %v5869
      %v5871 = vpop.f32.mrb[0].mxu0
      %v5872 = vpop.f32.mrb[0].mxu0
      %v5873 = vadd.f32 0.0, %v5872
      %v5874 = vpop.f32.mrb[0].mxu0
      %5875 = vmatprep.mubr.bf16.mxu0 0
      %5876 = vmatmul.mubr.bf16.gmra.mrb[0].mxu0 %v5756
      %v5877 = vpop.f32.mrb[0].mxu0
      %v5878 = vadd.f32 0.0, %v5877
      %v5879 = vpop.f32.mrb[0].mxu0
      %v5880 = vpop.f32.mrb[0].mxu0
      %v5881 = vadd.f32 0.0, %v5880
      %v5882 = vpop.f32.mrb[0].mxu0
      %5883 = vmatprep.mubr.bf16.mxu0 0
      %5884 = vmatmul.mubr.bf16.gmra.mrb[0].mxu0 %v5759
      %v5885 = vpop.f32.mrb[0].mxu0
      %v5886 = vadd.f32 0.0, %v5885
      %v5887 = vpop.f32.mrb[0].mxu0
      %v5888 = vpop.f32.mrb[0].mxu0
      %v5889 = vadd.f32 0.0, %v5888
      %v5890 = vpop.f32.mrb[0].mxu0
      %5891 = vmatprep.mubr.bf16.mxu0 0
      %5892 = vmatmul.mubr.bf16.gmra.mrb[0].mxu0 %v5762
      %v5893 = vpop.f32.mrb[0].mxu0
      %v5894 = vadd.f32 0.0, %v5893
      %v5895 = vpop.f32.mrb[0].mxu0
      %v5896 = vpop.f32.mrb[0].mxu0
      %v5897 = vadd.f32 0.0, %v5896
      %v5898 = vpop.f32.mrb[0].mxu0
      %5899 = vmatprep.mubr.bf16.mxu0 0
      %5900 = vmatmul.mubr.bf16.gmra.mrb[0].mxu0 %v5765
      %v5901 = vpop.f32.mrb[0].mxu0
      %v5902 = vadd.f32 0.0, %v5901
      %v5903 = vpop.f32.mrb[0].mxu0
      %v5904 = vpop.f32.mrb[0].mxu0
      %v5905 = vadd.f32 0.0, %v5904
      %v5906 = vpop.f32.mrb[0].mxu0
      %5907 = vmatprep.mubr.bf16.mxu0 0
      %5908 = vmatmul.mubr.bf16.gmra.mrb[0].mxu0 %v5768
      %v5909 = vpop.f32.mrb[0].mxu0
      %v5910 = vadd.f32 0.0, %v5909
      %v5911 = vpop.f32.mrb[0].mxu0
      %v5912 = vpop.f32.mrb[0].mxu0
      %v5913 = vadd.f32 0.0, %v5912
      %v5914 = vpop.f32.mrb[0].mxu0
      %5915 = vmatprep.mubr.bf16.mxu0 0
      %5916 = vmatmul.mubr.bf16.gmra.mrb[0].mxu0 %v5771
      %v5917 = vpop.f32.mrb[0].mxu0
      %v5918 = vadd.f32 0.0, %v5917
      %v5919 = vpop.f32.mrb[0].mxu0
      %v5920 = vpop.f32.mrb[0].mxu0
      %v5921 = vadd.f32 0.0, %v5920
      %v5922 = vpop.f32.mrb[0].mxu0
      %5923 = vmatprep.mubr.bf16.mxu0 0
      %5924 = vmatmul.mubr.bf16.gmra.mrb[0].mxu0 %v5774
      %v5925 = vpop.f32.mrb[0].mxu0
      %v5926 = vadd.f32 0.0, %v5925
      %v5927 = vpop.f32.mrb[0].mxu0
      %v5928 = vpop.f32.mrb[0].mxu0
      %v5929 = vadd.f32 0.0, %v5928
      %v5930 = vpop.f32.mrb[0].mxu0
      %5931 = vmatprep.mubr.bf16.mxu0 0
      %5932 = vmatmul.mubr.bf16.gmra.mrb[0].mxu0 %v5777
      %v5933 = vpop.f32.mrb[0].mxu0
      %v5934 = vadd.f32 0.0, %v5933
      %v5935 = vpop.f32.mrb[0].mxu0
      %v5936 = vpop.f32.mrb[0].mxu0
      %v5937 = vadd.f32 0.0, %v5936
      %v5938 = vpop.f32.mrb[0].mxu0
      %5939 = vdwg.mxu0
      %v5940 = vadd.f32 %v5466, %v5814
      %v5941 = vadd.f32 %v5467, %v5817
      %v5942 = vadd.f32 %v5468, %v5822
      %v5943 = vadd.f32 %v5469, %v5825
      %v5944 = vadd.f32 %v5470, %v5830
      %v5945 = vadd.f32 %v5471, %v5833
      %v5946 = vadd.f32 %v5472, %v5838
      %v5947 = vadd.f32 %v5473, %v5841
      %v5948 = vadd.f32 %v5474, %v5846
      %v5949 = vadd.f32 %v5475, %v5849
      %v5950 = vadd.f32 %v5476, %v5854
      %v5951 = vadd.f32 %v5477, %v5857
      %v5952 = vadd.f32 %v5478, %v5862
      %v5953 = vadd.f32 %v5479, %v5865
      %v5954 = vadd.f32 %v5480, %v5870
      %v5955 = vadd.f32 %v5481, %v5873
      %v5956 = vadd.f32 %v5482, %v5878
      %v5957 = vadd.f32 %v5483, %v5881
      %v5958 = vadd.f32 %v5484, %v5886
      %v5959 = vadd.f32 %v5485, %v5889
      %v5960 = vadd.f32 %v5486, %v5894
      %v5961 = vadd.f32 %v5487, %v5897
      %v5962 = vadd.f32 %v5488, %v5902
      %v5963 = vadd.f32 %v5489, %v5905
      %v5964 = vadd.f32 %v5490, %v5910
      %v5965 = vadd.f32 %v5491, %v5913
      %v5966 = vadd.f32 %v5492, %v5918
      %v5967 = vadd.f32 %v5493, %v5921
      %v5968 = vadd.f32 %v5494, %v5926
      %v5969 = vadd.f32 %v5495, %v5929
      %v5970 = vadd.f32 %v5496, %v5934
      %v5971 = vadd.f32 %v5497, %v5937
      %v5972 = vld [vmem:[%s6] sm:$0x1]
      %v5974 = vlaneseq
      %v5975 = vshrl.u32 %v5974, 7
      %v5976 = vsub.s32 0, %v5975
      %v5977 = vrot.slane %v5972, %v5976
      %v5979 = vadd.f32 %v5940, %v5977
      %v5980 = vadd.f32 %v5941, %v5977
      %v5981 = vadd.f32 %v5942, %v5977
      %v5982 = vadd.f32 %v5943, %v5977
      %v5983 = vadd.f32 %v5944, %v5977
      %v5984 = vadd.f32 %v5945, %v5977
      %v5985 = vadd.f32 %v5946, %v5977
      %v5986 = vadd.f32 %v5947, %v5977
      %v5987 = vadd.f32 %v5948, %v5977
      %v5988 = vadd.f32 %v5949, %v5977
      %v5989 = vadd.f32 %v5950, %v5977
      %v5990 = vadd.f32 %v5951, %v5977
      %v5991 = vadd.f32 %v5952, %v5977
      %v5992 = vadd.f32 %v5953, %v5977
      %v5993 = vadd.f32 %v5954, %v5977
      %v5994 = vadd.f32 %v5955, %v5977
      %v5995 = vadd.f32 %v5956, %v5977
      %v5996 = vadd.f32 %v5957, %v5977
      %v5997 = vadd.f32 %v5958, %v5977
      %v5998 = vadd.f32 %v5959, %v5977
      %v5999 = vadd.f32 %v5960, %v5977
      %v6000 = vadd.f32 %v5961, %v5977
      %v6001 = vadd.f32 %v5962, %v5977
      %v6002 = vadd.f32 %v5963, %v5977
      %v6003 = vadd.f32 %v5964, %v5977
      %v6004 = vadd.f32 %v5965, %v5977
      %v6005 = vadd.f32 %v5966, %v5977
      %v6006 = vadd.f32 %v5967, %v5977
      %v6007 = vadd.f32 %v5968, %v5977
      %v6008 = vadd.f32 %v5969, %v5977
      %v6009 = vadd.f32 %v5970, %v5977
      %v6010 = vadd.f32 %v5971, %v5977
      %v6011 = vpack.c.bf16 %v5980, %v5979
      %v6012 = vpack.c.bf16 %v5982, %v5981
      %v6013 = vpack.c.bf16 %v5984, %v5983
      %v6014 = vpack.c.bf16 %v5986, %v5985
      %v6015 = vpack.c.bf16 %v5988, %v5987
      %v6016 = vpack.c.bf16 %v5990, %v5989
      %v6017 = vpack.c.bf16 %v5992, %v5991
      %v6018 = vpack.c.bf16 %v5994, %v5993
      %v6019 = vpack.c.bf16 %v5996, %v5995
      %v6020 = vpack.c.bf16 %v5998, %v5997
      %v6021 = vpack.c.bf16 %v6000, %v5999
      %v6022 = vpack.c.bf16 %v6002, %v6001
      %v6023 = vpack.c.bf16 %v6004, %v6003
      %v6024 = vpack.c.bf16 %v6006, %v6005
      %v6025 = vpack.c.bf16 %v6008, %v6007
      %v6026 = vpack.c.bf16 %v6010, %v6009
      %v6043 = vunpack.c.l.b16 %v6011
      %v6044 = vunpack.c.h.b16 %v6011
      %v6045 = vunpack.c.l.b16 %v6012
      %v6046 = vunpack.c.h.b16 %v6012
      %v6047 = vunpack.c.l.b16 %v6013
      %v6048 = vunpack.c.h.b16 %v6013
      %v6049 = vunpack.c.l.b16 %v6014
      %v6050 = vunpack.c.h.b16 %v6014
      %v6051 = vunpack.c.l.b16 %v6015
      %v6052 = vunpack.c.h.b16 %v6015
      %v6053 = vunpack.c.l.b16 %v6016
      %v6054 = vunpack.c.h.b16 %v6016
      %v6055 = vunpack.c.l.b16 %v6017
      %v6056 = vunpack.c.h.b16 %v6017
      %v6057 = vunpack.c.l.b16 %v6018
      %v6058 = vunpack.c.h.b16 %v6018
      %v6059 = vunpack.c.l.b16 %v6019
      %v6060 = vunpack.c.h.b16 %v6019
      %v6061 = vunpack.c.l.b16 %v6020
      %v6062 = vunpack.c.h.b16 %v6020
      %v6063 = vunpack.c.l.b16 %v6021
      %v6064 = vunpack.c.h.b16 %v6021
      %v6065 = vunpack.c.l.b16 %v6022
      %v6066 = vunpack.c.h.b16 %v6022
      %v6067 = vunpack.c.l.b16 %v6023
      %v6068 = vunpack.c.h.b16 %v6023
      %v6069 = vunpack.c.l.b16 %v6024
      %v6070 = vunpack.c.h.b16 %v6024
      %v6071 = vunpack.c.l.b16 %v6025
      %v6072 = vunpack.c.h.b16 %v6025
      %v6073 = vunpack.c.l.b16 %v6026
      %v6074 = vunpack.c.h.b16 %v6026
      %v6075 = vpack.c.b16 %v6043, %v6043
      %v6076 = vpack.c.b16 %v6044, %v6044
      %v6077 = vpack.c.b16 %v6045, %v6045
      %v6078 = vpack.c.b16 %v6046, %v6046
      %v6079 = vpack.c.b16 %v6047, %v6047
      %v6080 = vpack.c.b16 %v6048, %v6048
      %v6081 = vpack.c.b16 %v6049, %v6049
      %v6082 = vpack.c.b16 %v6050, %v6050
      %v6083 = vpack.c.b16 %v6051, %v6051
      %v6084 = vpack.c.b16 %v6052, %v6052
      %v6085 = vpack.c.b16 %v6053, %v6053
      %v6086 = vpack.c.b16 %v6054, %v6054
      %v6087 = vpack.c.b16 %v6055, %v6055
      %v6088 = vpack.c.b16 %v6056, %v6056
      %v6089 = vpack.c.b16 %v6057, %v6057
      %v6090 = vpack.c.b16 %v6058, %v6058
      %v6091 = vpack.c.b16 %v6059, %v6059
      %v6092 = vpack.c.b16 %v6060, %v6060
      %v6093 = vpack.c.b16 %v6061, %v6061
      %v6094 = vpack.c.b16 %v6062, %v6062
      %v6095 = vpack.c.b16 %v6063, %v6063
      %v6096 = vpack.c.b16 %v6064, %v6064
      %v6097 = vpack.c.b16 %v6065, %v6065
      %v6098 = vpack.c.b16 %v6066, %v6066
      %v6099 = vpack.c.b16 %v6067, %v6067
      %v6100 = vpack.c.b16 %v6068, %v6068
      %v6101 = vpack.c.b16 %v6069, %v6069
      %v6102 = vpack.c.b16 %v6070, %v6070
      %v6103 = vpack.c.b16 %v6071, %v6071
      %v6104 = vpack.c.b16 %v6072, %v6072
      %v6105 = vpack.c.b16 %v6073, %v6073
      %v6106 = vpack.c.b16 %v6074, %v6074
      %vm6139 = vcmask 27648
      %6140 = vst.msk [vmem:[%s278] sm:$0xf] %vm6139, %v6075
      %6141 = vst.msk [vmem:[%s278 + $0x4] sm:$0xf] %vm6139, %v6076
      %6142 = vst.msk [vmem:[%s278 + $0x8] sm:$0xf] %vm6139, %v6077
      %6143 = vst.msk [vmem:[%s278 + $0xc] sm:$0xf] %vm6139, %v6078
      %6144 = vst.msk [vmem:[%s278 + $0x10] sm:$0xf] %vm6139, %v6079
      %6145 = vst.msk [vmem:[%s278 + $0x14] sm:$0xf] %vm6139, %v6080
      %6146 = vst.msk [vmem:[%s278 + $0x18] sm:$0xf] %vm6139, %v6081
      %6147 = vst.msk [vmem:[%s278 + $0x1c] sm:$0xf] %vm6139, %v6082
      %6148 = vst.msk [vmem:[%s278 + $0x20] sm:$0xf] %vm6139, %v6083
      %6149 = vst.msk [vmem:[%s278 + $0x24] sm:$0xf] %vm6139, %v6084
      %6150 = vst.msk [vmem:[%s278 + $0x28] sm:$0xf] %vm6139, %v6085
      %6151 = vst.msk [vmem:[%s278 + $0x2c] sm:$0xf] %vm6139, %v6086
      %6152 = vst.msk [vmem:[%s278 + $0x30] sm:$0xf] %vm6139, %v6087
      %6153 = vst.msk [vmem:[%s278 + $0x34] sm:$0xf] %vm6139, %v6088
      %6154 = vst.msk [vmem:[%s278 + $0x38] sm:$0xf] %vm6139, %v6089
      %6155 = vst.msk [vmem:[%s278 + $0x3c] sm:$0xf] %vm6139, %v6090
      %6156 = vst.msk [vmem:[%s278 + $0x40] sm:$0xf] %vm6139, %v6091
      %6157 = vst.msk [vmem:[%s278 + $0x44] sm:$0xf] %vm6139, %v6092
      %6158 = vst.msk [vmem:[%s278 + $0x48] sm:$0xf] %vm6139, %v6093
      %6159 = vst.msk [vmem:[%s278 + $0x4c] sm:$0xf] %vm6139, %v6094
      %6160 = vst.msk [vmem:[%s278 + $0x50] sm:$0xf] %vm6139, %v6095
      %6161 = vst.msk [vmem:[%s278 + $0x54] sm:$0xf] %vm6139, %v6096
      %6162 = vst.msk [vmem:[%s278 + $0x58] sm:$0xf] %vm6139, %v6097
      %6163 = vst.msk [vmem:[%s278 + $0x5c] sm:$0xf] %vm6139, %v6098
      %6164 = vst.msk [vmem:[%s278 + $0x60] sm:$0xf] %vm6139, %v6099
      %6165 = vst.msk [vmem:[%s278 + $0x64] sm:$0xf] %vm6139, %v6100
      %6166 = vst.msk [vmem:[%s278 + $0x68] sm:$0xf] %vm6139, %v6101
      %6167 = vst.msk [vmem:[%s278 + $0x6c] sm:$0xf] %vm6139, %v6102
      %6168 = vst.msk [vmem:[%s278 + $0x70] sm:$0xf] %vm6139, %v6103
      %6169 = vst.msk [vmem:[%s278 + $0x74] sm:$0xf] %vm6139, %v6104
      %6170 = vst.msk [vmem:[%s278 + $0x78] sm:$0xf] %vm6139, %v6105
      %6171 = vst.msk [vmem:[%s278 + $0x7c] sm:$0xf] %vm6139, %v6106
      %p6172 = scmp.lt.s32.totalorder %s18, 1
      %s6173 = scalar_select %p6172, %s18, 1
      %s6174 = smul.addr %s6173, 32
      %s6175 = smul.addr %s6174, 4
      %s6176 = scalar_lea.vmem %s7, %s6175
      // Predicated region
      $region49: #{tpu_custom_call.1} parent=47 // pred_check
        %p6177 = pneg %p188
      $region50: #{tpu_custom_call.1} parent=47 // pred_check_branch
        %6179 = sbr.rel (%p6177) target = $region52
      $region51: #{tpu_custom_call.1} parent=47 // pred_region
        _
      $region52: #{tpu_custom_call.1} parent=47 // pred_fallthru
        _
    $region48: #{tpu_custom_call.1} parent=5 // pred_fallthru
      _
    %p6180 = scmp.le.s32.totalorder 2, %s13
    // Predicated region
    $region53: #{tpu_custom_call.1} parent=5 // pred_check
      %p6181 = pneg %p6180
    $region54: #{tpu_custom_call.1} parent=5 // pred_check_branch
      %6183 = sbr.rel (%p6181) target = $region56
    $region55: #{tpu_custom_call.1} parent=5 // pred_region
      %s6184 = ssub.s32 %s13, 2
      // Predicated region
      $region57: #{tpu_custom_call.1} parent=55 // pred_check
        %p6185 = pneg %p194
      $region58: #{tpu_custom_call.1} parent=55 // pred_check_branch
        %6187 = sbr.rel (%p6185) target = $region60
      $region59: #{tpu_custom_call.1} parent=55 // pred_region
        %p6188 = scmp.lt.s32.totalorder %s19, 1
        %s6189 = scalar_select %p6188, %s19, 1
        %s6190 = smul.addr %s6189, 32
        %s6191 = smul.addr %s6190, 4
        %s6192 = scalar_lea.vmem %s7, %s6191
      $region60: #{tpu_custom_call.1} parent=55 // pred_fallthru
        _
    $region56: #{tpu_custom_call.1} parent=5 // pred_fallthru
      _
  $region6: #{tpu_custom_call.1} parent=0 // loop_footer
    %s17 = sadd.s32 1, %s13
  $region7: #{tpu_custom_call.1} parent=0 // loop_footer_branch
    %12 = sbr.rel target = $region3
  $region8: #{tpu_custom_call.1} parent=0 // loop_exit
    _

</llo_original>
